<compile_context>
chip_gen: v6e
topology: v6e:2x2x1
jax: 0.10.0
libtpu: 0.0.40
codegen_flags: <defaults>
</compile_context>

<pallas_src>
import functools

import jax
import jax.numpy as jnp
import numpy as np
from jax import lax
from jax.experimental import pallas as pl
from jax.experimental.pallas import tpu as pltpu


def _round_up(x: int, m: int) -> int:
    return ((x + m - 1) // m) * m


def _mhsa_kernel(v_ref, k_ref, q_ref, wv_ref, wk_ref, wq_ref, wo_ref, bo_ref,
                 o_ref, qp_ref, kp_ref, vp_ref, *opt_scratch,
                 heads: int, head_dim: int, kv_len: int, concat_heads: bool):
    # Refs per grid step (n = batch block, q = query tile):
    #   v/k_ref : (Bt, Lk_pad, E)   activations (cast to bf16 in kernel)
    #   q_ref   : (Bt, TQ, E)
    #   wv/wk/wq_ref : (E, E) bf16  pre-transposed; wq already scaled by 1/sqrt(E)
    #   wo_ref  : (E, E) bf16       Wo.T
    #   bo_ref  : (1, E)  f32
    #   o_ref   : (Bt, TQ, E)
    #   qp/kp/vp_ref : fused-projection VMEM scratch (bf16)
    #   opt_scratch  : [(Bt*TQ, E) bf16 head-concat scratch] iff concat_heads
    Bt, TQ, E = q_ref.shape
    _, Lk, _ = k_ref.shape           # padded key length
    D = head_dim

    # K/V projections depend only on the batch block: compute them once per
    # batch block (the query-tile axis is the inner, "arbitrary" grid axis)
    # and reuse the VMEM scratch across query tiles.
    @pl.when(pl.program_id(1) == 0)
    def _():
        k2 = k_ref[...].reshape(Bt * Lk, E).astype(jnp.bfloat16)
        v2 = v_ref[...].reshape(Bt * Lk, E).astype(jnp.bfloat16)
        kp_ref[...] = jnp.dot(k2, wk_ref[...],
                              preferred_element_type=jnp.float32).astype(jnp.bfloat16)
        vp_ref[...] = jnp.dot(v2, wv_ref[...],
                              preferred_element_type=jnp.float32).astype(jnp.bfloat16)

    # Q projection (softmax scale already folded into wq in the wrapper).
    q2 = q_ref[...].reshape(Bt * TQ, E).astype(jnp.bfloat16)
    qp_ref[...] = jnp.dot(q2, wq_ref[...],
                          preferred_element_type=jnp.float32).astype(jnp.bfloat16)

    # Static mask for wrapper-side key padding (no-op when Lk == kv_len).
    if Lk > kv_len:
        kmask = lax.broadcasted_iota(jnp.int32, (1, 1, Lk), 2) < kv_len
    else:
        kmask = None

    if concat_heads:
        oc_ref = opt_scratch[0]          # (Bt*TQ, E) bf16
    else:
        acc = jnp.zeros((Bt * TQ, E), jnp.float32)

    # Static head loop with static lane slices of the fused projections.
    for h in range(heads):
        sl = slice(h * D, (h + 1) * D)
        qh = qp_ref[:, sl].reshape(Bt, TQ, D)      # bf16
        kh = kp_ref[:, sl].reshape(Bt, Lk, D)      # bf16
        vh = vp_ref[:, sl].reshape(Bt, Lk, D)      # bf16

        # (Bt, TQ, Lk) scores in f32; contraction on the last axis (no K transpose).
        energy = jnp.einsum('bqd,bkd->bqk', qh, kh,
                            preferred_element_type=jnp.float32)
        if kmask is not None:
            energy = jnp.where(kmask, energy, jnp.float32(-1e30))

        # Numerically stable softmax statistics in f32.
        m = jnp.max(energy, axis=-1, keepdims=True)
        p = jnp.exp(energy - m)
        denom = jnp.sum(p, axis=-1, keepdims=True)

        # Deferred normalization: scale the small (Bt,TQ,D) output, not the
        # (Bt,TQ,Lk) score matrix.
        oh = jnp.einsum('bqk,bkd->bqd', p.astype(jnp.bfloat16), vh,
                        preferred_element_type=jnp.float32)
        oh = oh * pl.reciprocal(denom, approx=True)
        oh2 = oh.reshape(Bt * TQ, D).astype(jnp.bfloat16)

        if concat_heads:
            # Lane-aligned store (D % 128 == 0): fold the head concat into a
            # single wide output projection after the loop.
            oc_ref[:, sl] = oh2
        else:
            acc = acc + jnp.dot(oh2, wo_ref[sl, :],
                                preferred_element_type=jnp.float32)

    if concat_heads:
        out = jnp.dot(oc_ref[...], wo_ref[...],
                      preferred_element_type=jnp.float32)
    else:
        out = acc
    out = out + bo_ref[...]                          # (1, E) broadcasts, f32
    o_ref[...] = out.reshape(Bt, TQ, E).astype(o_ref.dtype)


def multi_head_self_attention(values, keys, queries, params, *, heads: int,
                              batch_block: int | None = None,
                              query_block: int | None = None):
    """Pallas forward pass.  values/keys/queries: (N, L, E)."""
    N, Lv, E = values.shape
    Nk, Lk, Ek = keys.shape
    Nq, Lq, Eq = queries.shape
    assert E == Ek == Eq and N == Nk == Nq
    assert E % heads == 0
    assert Lv == Lk, "attention requires key_len == value_len"
    D = E // heads

    wv, wk, wq, wo, bo = params

    # Weight prep in the wrapper (one-time XLA cost):
    #   - transpose to (in, out) layout, cast to bf16 for the MXU
    #   - fold the 1/sqrt(embed_size) softmax scale into the Q projection.
    inv_scale = 1.0 / (float(E) ** 0.5)
    wv_t = wv.T.astype(jnp.bfloat16)
    wk_t = wk.T.astype(jnp.bfloat16)
    wq_t = (wq.T * inv_scale).astype(jnp.bfloat16)
    wo_t = wo.T.astype(jnp.bfloat16)
    bo2d = bo.reshape(1, E).astype(jnp.float32)

    # ---- sequence padding / query tiling (multiples of 8 -> free reshapes) --
    Lk_pad = _round_up(Lk, 8)
    if query_block is None:
        TQ = min(256, _round_up(Lq, 8))
    else:
        TQ = _round_up(query_block, 8)
    Lq_pad = _round_up(Lq, TQ)
    n_q_tiles = Lq_pad // TQ

    def pad_seq(x, Lp):
        L = x.shape[1]
        if Lp == L:
            return x
        return jnp.pad(x, ((0, 0), (0, Lp - L), (0, 0)))

    v_p = pad_seq(values, Lk_pad)
    k_p = pad_seq(keys, Lk_pad)      # padded keys are masked inside the kernel
    q_p = pad_seq(queries, Lq_pad)   # padded query rows are sliced off below

    # ---- generation-aware VMEM budget (v5e/v6e: 128 MiB, v7x: 64 MiB) ------
    try:
        vmem_cap = int(pltpu.get_tpu_info().vmem_capacity_bytes)
    except Exception:
        vmem_cap = 64 * 1024 * 1024
    vmem_limit = min(vmem_cap * 3 // 4, 100 * 1024 * 1024)

    concat_heads = (D % 128 == 0)
    in_bytes = jnp.dtype(values.dtype).itemsize
    out_bytes = jnp.dtype(queries.dtype).itemsize

    def vmem_estimate(bt):
        w = 4 * E * E * 2 + E * 4                                   # single-buffered weights
        act = 2 * in_bytes * bt * E * (2 * Lk_pad + TQ) \
            + 2 * out_bytes * bt * TQ * E                           # double-buffered blocks
        scr = 2 * bt * E * (2 * Lk_pad + TQ * (2 if concat_heads else 1))
        scores = 4 * bt * TQ * Lk_pad * 3                           # energy/exp/p transient
        return w + act + scr + scores

    # ---- batch-block selection ----------------------------------------------
    if batch_block is None:
        target_rows = 256          # MXU M target (128 already saturates v5e's 4x128 MXU)
        bt = max(1, min(N, target_rows // max(TQ, 1)))
        if n_q_tiles == 1 and N >= 2:
            bt = min(bt, N // 2)   # keep grid >= 2 so both v7x TensorCores get work
        bt = max(bt, 1)
        while N % bt != 0:
            bt -= 1
        while bt > 1 and vmem_estimate(bt) > 0.8 * vmem_limit:
            bt -= 1
            while N % bt != 0:
                bt -= 1
        batch_block = bt
    Bt = batch_block
    assert N % Bt == 0
    grid = (N // Bt, n_q_tiles)

    kernel = functools.partial(_mhsa_kernel, heads=heads, head_dim=D,
                               kv_len=Lk, concat_heads=concat_heads)

    kv_spec = pl.BlockSpec((Bt, Lk_pad, E), lambda n, q: (n, 0, 0))
    q_spec = pl.BlockSpec((Bt, TQ, E), lambda n, q: (n, q, 0))
    o_spec = pl.BlockSpec((Bt, TQ, E), lambda n, q: (n, q, 0))

    scratch = [pltpu.VMEM((Bt * TQ, E), jnp.bfloat16),       # Q projection
               pltpu.VMEM((Bt * Lk_pad, E), jnp.bfloat16),   # K projection (carried)
               pltpu.VMEM((Bt * Lk_pad, E), jnp.bfloat16)]   # V projection (carried)
    if concat_heads:
        scratch.append(pltpu.VMEM((Bt * TQ, E), jnp.bfloat16))  # head concat

    def build(single_buffer_weights):
        if single_buffer_weights:
            w_kw = dict(pipeline_mode=pl.Buffered(1))  # grid-invariant: no double buffer
        else:
            w_kw = {}
        w_spec = pl.BlockSpec((E, E), lambda n, q: (0, 0), **w_kw)
        b_spec = pl.BlockSpec((1, E), lambda n, q: (0, 0), **w_kw)
        return pl.pallas_call(
            kernel,
            out_shape=jax.ShapeDtypeStruct((N, Lq_pad, E), queries.dtype),
            grid_spec=pltpu.PrefetchScalarGridSpec(
                num_scalar_prefetch=0,
                grid=grid,
                in_specs=[kv_spec, kv_spec, q_spec,
                          w_spec, w_spec, w_spec, w_spec, b_spec],
                out_specs=o_spec,
                scratch_shapes=scratch),
            compiler_params=pltpu.CompilerParams(
                # Batch axis is parallel (megacore); query axis is arbitrary
                # because the K/V projection scratch is carried across it.
                dimension_semantics=("parallel", "arbitrary"),
                vmem_limit_bytes=vmem_limit),
        )

    # TODO(synk): optional attention mask is not implemented (mask=None path only).
    args = (v_p, k_p, q_p, wv_t, wk_t, wq_t, wo_t, bo2d)
    try:
        out = build(True)(*args)
    except Exception:
        # Fallback for Pallas versions without single-buffer pipeline_mode support.
        out = build(False)(*args)

    if Lq_pad != Lq:
        out = out[:, :Lq, :]
    return out


def _reference(values, keys, queries, params, *, heads: int):
    """Pure-JAX f32 reference matching the PyTorch module semantics."""
    wv, wk, wq, wo, bo = params
    N, Lq, E = queries.shape
    D = E // heads
    V = values @ wv.T
    K = keys @ wk.T
    Q = queries @ wq.T
    V = V.reshape(N, -1, heads, D)
    K = K.reshape(N, -1, heads, D)
    Q = Q.reshape(N, Lq, heads, D)
    energy = jnp.einsum('nqhd,nkhd->nhqk', Q, K)
    attn = jax.nn.softmax(energy / (E ** 0.5), axis=3)
    out = jnp.einsum('nhql,nlhd->nqhd', attn, V).reshape(N, Lq, E)
    return out @ wo.T + bo


if __name__ == "__main__":
    def run_case(N, Lq, Lkv, E, H, seed, rtol, atol, **kw):
        key = jax.random.PRNGKey(seed)
        ks = jax.random.split(key, 8)
        values = jax.random.normal(ks[0], (N, Lkv, E), dtype=jnp.float32)
        keys_in = jax.random.normal(ks[1], (N, Lkv, E), dtype=jnp.float32)
        queries = jax.random.normal(ks[2], (N, Lq, E), dtype=jnp.float32)
        # nn.Linear shapes: (out_features, in_features).
        wv = jax.random.normal(ks[3], (E, E), dtype=jnp.float32) * 0.1
        wk = jax.random.normal(ks[4], (E, E), dtype=jnp.float32) * 0.1
        wq = jax.random.normal(ks[5], (E, E), dtype=jnp.float32) * 0.1
        wo = jax.random.normal(ks[6], (E, E), dtype=jnp.float32) * 0.1
        bo = jax.random.normal(ks[7], (E,), dtype=jnp.float32) * 0.1
        params = (wv, wk, wq, wo, bo)

        out = multi_head_self_attention(values, keys_in, queries, params,
                                        heads=H, **kw)
        out = jax.block_until_ready(out)
        ref = _reference(values, keys_in, queries, params, heads=H)
        # bf16 MXU inputs + approximate reciprocal -> loosened tolerance vs f32 ref.
        np.testing.assert_allclose(np.asarray(out), np.asarray(ref),
                                   rtol=rtol, atol=atol)

    # Small shapes implied by the module: batch=2, seq=8, embed=32, heads=4.
    run_case(N=2, Lq=8, Lkv=8, E=32, H=4, seed=0, rtol=3e-2, atol=3e-2)
    # Exercises the lane-aligned head-concat output projection (D=128), key
    # padding + masking, query padding, and the query-tile grid axis with the
    # carried K/V projection scratch.
    run_case(N=2, Lq=10, Lkv=12, E=256, H=2, seed=1, rtol=5e-2, atol=5e-2,
             query_block=8)

    print("KERNEL_OK")
</pallas_src>

<mosaic_0001>
module attributes {stable_mosaic.version = 11 : i64} {
  func.func @_mhsa_kernel(%arg0: i32, %arg1: i32, %arg2: memref<1x8x32xf32, #tpu.memory_space<vmem>>, %arg3: memref<1x8x32xf32, #tpu.memory_space<vmem>>, %arg4: memref<1x8x32xf32, #tpu.memory_space<vmem>>, %arg5: memref<32x32xbf16, #tpu.memory_space<vmem>>, %arg6: memref<32x32xbf16, #tpu.memory_space<vmem>>, %arg7: memref<32x32xbf16, #tpu.memory_space<vmem>>, %arg8: memref<32x32xbf16, #tpu.memory_space<vmem>>, %arg9: memref<1x32xf32, #tpu.memory_space<vmem>>, %arg10: memref<1x8x32xf32, #tpu.memory_space<vmem>>, %arg11: memref<8x32xbf16, #tpu.memory_space<vmem>>, %arg12: memref<8x32xbf16, #tpu.memory_space<vmem>>, %arg13: memref<8x32xbf16, #tpu.memory_space<vmem>>) attributes {dimension_semantics = [#tpu.dimension_semantics<parallel>, #tpu.dimension_semantics<arbitrary>], iteration_bounds = array<i64: 2, 1>, scalar_prefetch = 0 : i64, scratch_operands = 3 : i64, tpu.core_type = #tpu.core_type<tc>, window_params = [{transform_indices = @transform_0, window_bounds = array<i64: 1, 8, 32>}, {transform_indices = @transform_1, window_bounds = array<i64: 1, 8, 32>}, {transform_indices = @transform_2, window_bounds = array<i64: 1, 8, 32>}, {pipeline_mode = #tpu.pipeline_mode<synchronous>, transform_indices = @transform_3, window_bounds = array<i64: 32, 32>}, {pipeline_mode = #tpu.pipeline_mode<synchronous>, transform_indices = @transform_4, window_bounds = array<i64: 32, 32>}, {pipeline_mode = #tpu.pipeline_mode<synchronous>, transform_indices = @transform_5, window_bounds = array<i64: 32, 32>}, {pipeline_mode = #tpu.pipeline_mode<synchronous>, transform_indices = @transform_6, window_bounds = array<i64: 32, 32>}, {pipeline_mode = #tpu.pipeline_mode<synchronous>, transform_indices = @transform_7, window_bounds = array<i64: 1, 32>}, {transform_indices = @transform_8, window_bounds = array<i64: 1, 8, 32>}]} {
    %c0_i32 = arith.constant 0 : i32
    %0 = arith.cmpi eq, %arg1, %c0_i32 : i32
    %1 = arith.extui %0 : i1 to i32
    %c0_i32_0 = arith.constant 0 : i32
    %2 = arith.cmpi ne, %1, %c0_i32_0 : i32
    scf.if %2 {
      %c0_62 = arith.constant 0 : index
      %c0_63 = arith.constant 0 : index
      %c0_64 = arith.constant 0 : index
      %112 = vector.load %arg3[%c0_62, %c0_63, %c0_64] : memref<1x8x32xf32, #tpu.memory_space<vmem>>, vector<1x8x32xf32>
      %113 = vector.shape_cast %112 : vector<1x8x32xf32> to vector<8x32xf32>
      %114 = arith.truncf %113 : vector<8x32xf32> to vector<8x32xbf16>
      %c0_65 = arith.constant 0 : index
      %c0_66 = arith.constant 0 : index
      %c0_67 = arith.constant 0 : index
      %115 = vector.load %arg2[%c0_65, %c0_66, %c0_67] : memref<1x8x32xf32, #tpu.memory_space<vmem>>, vector<1x8x32xf32>
      %116 = vector.shape_cast %115 : vector<1x8x32xf32> to vector<8x32xf32>
      %117 = arith.truncf %116 : vector<8x32xf32> to vector<8x32xbf16>
      %c0_68 = arith.constant 0 : index
      %c0_69 = arith.constant 0 : index
      %118 = vector.load %arg6[%c0_68, %c0_69] : memref<32x32xbf16, #tpu.memory_space<vmem>>, vector<32x32xbf16>
      %cst_70 = arith.constant dense<0.000000e+00> : vector<8x32xf32>
      %119 = tpu.matmul %114, %118, %cst_70 {dimension_numbers = #tpu.dot_dimension_numbers<[1], [0], [0], [1], [0, 0, 1, 1], [], []>} : vector<8x32xbf16>, vector<32x32xbf16>, vector<8x32xf32> -> vector<8x32xf32>
      %120 = arith.truncf %119 : vector<8x32xf32> to vector<8x32xbf16>
      %c0_71 = arith.constant 0 : index
      %c0_72 = arith.constant 0 : index
      %121 = vector.load %arg12[%c0_71, %c0_72] : memref<8x32xbf16, #tpu.memory_space<vmem>>, vector<8x32xbf16>
      tpu.vector_store %arg12[%c0_71, %c0_72], %120 {strides = array<i32>} : memref<8x32xbf16, #tpu.memory_space<vmem>>, vector<8x32xbf16>,
      %c0_73 = arith.constant 0 : index
      %c0_74 = arith.constant 0 : index
      %122 = vector.load %arg5[%c0_73, %c0_74] : memref<32x32xbf16, #tpu.memory_space<vmem>>, vector<32x32xbf16>
      %cst_75 = arith.constant dense<0.000000e+00> : vector<8x32xf32>
      %123 = tpu.matmul %117, %122, %cst_75 {dimension_numbers = #tpu.dot_dimension_numbers<[1], [0], [0], [1], [0, 0, 1, 1], [], []>} : vector<8x32xbf16>, vector<32x32xbf16>, vector<8x32xf32> -> vector<8x32xf32>
      %124 = arith.truncf %123 : vector<8x32xf32> to vector<8x32xbf16>
      %c0_76 = arith.constant 0 : index
      %c0_77 = arith.constant 0 : index
      %125 = vector.load %arg13[%c0_76, %c0_77] : memref<8x32xbf16, #tpu.memory_space<vmem>>, vector<8x32xbf16>
      tpu.vector_store %arg13[%c0_76, %c0_77], %124 {strides = array<i32>} : memref<8x32xbf16, #tpu.memory_space<vmem>>, vector<8x32xbf16>,
    } else {
    }
    %c0 = arith.constant 0 : index
    %c0_1 = arith.constant 0 : index
    %c0_2 = arith.constant 0 : index
    %3 = vector.load %arg4[%c0, %c0_1, %c0_2] : memref<1x8x32xf32, #tpu.memory_space<vmem>>, vector<1x8x32xf32>
    %4 = vector.shape_cast %3 : vector<1x8x32xf32> to vector<8x32xf32>
    %5 = arith.truncf %4 : vector<8x32xf32> to vector<8x32xbf16>
    %c0_3 = arith.constant 0 : index
    %c0_4 = arith.constant 0 : index
    %6 = vector.load %arg7[%c0_3, %c0_4] : memref<32x32xbf16, #tpu.memory_space<vmem>>, vector<32x32xbf16>
    %cst = arith.constant dense<0.000000e+00> : vector<8x32xf32>
    %7 = tpu.matmul %5, %6, %cst {dimension_numbers = #tpu.dot_dimension_numbers<[1], [0], [0], [1], [0, 0, 1, 1], [], []>} : vector<8x32xbf16>, vector<32x32xbf16>, vector<8x32xf32> -> vector<8x32xf32>
    %8 = arith.truncf %7 : vector<8x32xf32> to vector<8x32xbf16>
    %c0_5 = arith.constant 0 : index
    %c0_6 = arith.constant 0 : index
    %9 = vector.load %arg11[%c0_5, %c0_6] : memref<8x32xbf16, #tpu.memory_space<vmem>>, vector<8x32xbf16>
    tpu.vector_store %arg11[%c0_5, %c0_6], %8 {strides = array<i32>} : memref<8x32xbf16, #tpu.memory_space<vmem>>, vector<8x32xbf16>,
    %cst_7 = arith.constant 0.000000e+00 : f32
    %10 = vector.broadcast %cst_7 : f32 to vector<8x32xf32>
    %c0_8 = arith.constant 0 : index
    %c0_9 = arith.constant 0 : index
    %11 = vector.load %arg11[%c0_8, %c0_9] : memref<8x32xbf16, #tpu.memory_space<vmem>>, vector<8x8xbf16>
    %12 = vector.shape_cast %11 : vector<8x8xbf16> to vector<1x8x8xbf16>
    %c0_10 = arith.constant 0 : index
    %c0_11 = arith.constant 0 : index
    %13 = vector.load %arg12[%c0_10, %c0_11] : memref<8x32xbf16, #tpu.memory_space<vmem>>, vector<8x8xbf16>
    %14 = vector.shape_cast %13 : vector<8x8xbf16> to vector<1x8x8xbf16>
    %c0_12 = arith.constant 0 : index
    %c0_13 = arith.constant 0 : index
    %15 = vector.load %arg13[%c0_12, %c0_13] : memref<8x32xbf16, #tpu.memory_space<vmem>>, vector<8x8xbf16>
    %16 = vector.shape_cast %15 : vector<8x8xbf16> to vector<1x8x8xbf16>
    "tpu.trace_start"() <{level = 10 : i32, message = "bqd,bkd->bqk"}> : () -> ()
    %cst_14 = arith.constant dense<0.000000e+00> : vector<1x8x8xf32>
    %17 = tpu.matmul %12, %14, %cst_14 {dimension_numbers = #tpu.dot_dimension_numbers<[2], [2], [1], [1], [0, 0, 0, 1, 1, 1], [0], [0]>} : vector<1x8x8xbf16>, vector<1x8x8xbf16>, vector<1x8x8xf32> -> vector<1x8x8xf32>
    "tpu.trace_stop"() : () -> ()
    %cst_15 = arith.constant dense<0xFF800000> : vector<1x8xf32>
    %18 = vector.multi_reduction <maximumf>, %17, %cst_15 [2] : vector<1x8x8xf32> to vector<1x8xf32>
    %19 = vector.shape_cast %18 : vector<1x8xf32> to vector<1x8x1xf32>
    %20 = vector.broadcast %19 : vector<1x8x1xf32> to vector<1x8x8xf32>
    %21 = arith.subf %17, %20 : vector<1x8x8xf32>
    %22 = math.exp %21 : vector<1x8x8xf32>
    %cst_16 = arith.constant dense<0.000000e+00> : vector<1x8xf32>
    %23 = vector.multi_reduction <add>, %22, %cst_16 [2] : vector<1x8x8xf32> to vector<1x8xf32>
    %24 = vector.shape_cast %23 : vector<1x8xf32> to vector<1x8x1xf32>
    %25 = arith.truncf %22 : vector<1x8x8xf32> to vector<1x8x8xbf16>
    "tpu.trace_start"() <{level = 10 : i32, message = "bqk,bkd->bqd"}> : () -> ()
    %cst_17 = arith.constant dense<0.000000e+00> : vector<1x8x8xf32>
    %26 = tpu.matmul %25, %16, %cst_17 {dimension_numbers = #tpu.dot_dimension_numbers<[2], [1], [1], [2], [0, 0, 0, 1, 1, 2], [0], [0]>} : vector<1x8x8xbf16>, vector<1x8x8xbf16>, vector<1x8x8xf32> -> vector<1x8x8xf32>
    "tpu.trace_stop"() : () -> ()
    %27 = tpu.reciprocal %24 {approx = true} : vector<1x8x1xf32> -> vector<1x8x1xf32>
    %28 = vector.broadcast %27 : vector<1x8x1xf32> to vector<1x8x8xf32>
    %29 = arith.mulf %26, %28 : vector<1x8x8xf32>
    %30 = vector.shape_cast %29 : vector<1x8x8xf32> to vector<8x8xf32>
    %31 = arith.truncf %30 : vector<8x8xf32> to vector<8x8xbf16>
    %c0_18 = arith.constant 0 : index
    %c0_19 = arith.constant 0 : index
    %32 = vector.load %arg8[%c0_18, %c0_19] : memref<32x32xbf16, #tpu.memory_space<vmem>>, vector<8x32xbf16>
    %cst_20 = arith.constant dense<0.000000e+00> : vector<8x32xf32>
    %33 = tpu.matmul %31, %32, %cst_20 {dimension_numbers = #tpu.dot_dimension_numbers<[1], [0], [0], [1], [0, 0, 1, 1], [], []>} : vector<8x8xbf16>, vector<8x32xbf16>, vector<8x32xf32> -> vector<8x32xf32>
    %34 = arith.addf %10, %33 : vector<8x32xf32>
    %c0_21 = arith.constant 0 : index
    %c8 = arith.constant 8 : index
    %35 = vector.load %arg11[%c0_21, %c8] : memref<8x32xbf16, #tpu.memory_space<vmem>>, vector<8x8xbf16>
    %36 = vector.shape_cast %35 : vector<8x8xbf16> to vector<1x8x8xbf16>
    %c0_22 = arith.constant 0 : index
    %c8_23 = arith.constant 8 : index
    %37 = vector.load %arg12[%c0_22, %c8_23] : memref<8x32xbf16, #tpu.memory_space<vmem>>, vector<8x8xbf16>
    %38 = vector.shape_cast %37 : vector<8x8xbf16> to vector<1x8x8xbf16>
    %c0_24 = arith.constant 0 : index
    %c8_25 = arith.constant 8 : index
    %39 = vector.load %arg13[%c0_24, %c8_25] : memref<8x32xbf16, #tpu.memory_space<vmem>>, vector<8x8xbf16>
    %40 = vector.shape_cast %39 : vector<8x8xbf16> to vector<1x8x8xbf16>
    "tpu.trace_start"() <{level = 10 : i32, message = "bqd,bkd->bqk"}> : () -> ()
    %cst_26 = arith.constant dense<0.000000e+00> : vector<1x8x8xf32>
    %41 = tpu.matmul %36, %38, %cst_26 {dimension_numbers = #tpu.dot_dimension_numbers<[2], [2], [1], [1], [0, 0, 0, 1, 1, 1], [0], [0]>} : vector<1x8x8xbf16>, vector<1x8x8xbf16>, vector<1x8x8xf32> -> vector<1x8x8xf32>
    "tpu.trace_stop"() : () -> ()
    %cst_27 = arith.constant dense<0xFF800000> : vector<1x8xf32>
    %42 = vector.multi_reduction <maximumf>, %41, %cst_27 [2] : vector<1x8x8xf32> to vector<1x8xf32>
    %43 = vector.shape_cast %42 : vector<1x8xf32> to vector<1x8x1xf32>
    %44 = vector.broadcast %43 : vector<1x8x1xf32> to vector<1x8x8xf32>
    %45 = arith.subf %41, %44 : vector<1x8x8xf32>
    %46 = math.exp %45 : vector<1x8x8xf32>
    %cst_28 = arith.constant dense<0.000000e+00> : vector<1x8xf32>
    %47 = vector.multi_reduction <add>, %46, %cst_28 [2] : vector<1x8x8xf32> to vector<1x8xf32>
    %48 = vector.shape_cast %47 : vector<1x8xf32> to vector<1x8x1xf32>
    %49 = arith.truncf %46 : vector<1x8x8xf32> to vector<1x8x8xbf16>
    "tpu.trace_start"() <{level = 10 : i32, message = "bqk,bkd->bqd"}> : () -> ()
    %cst_29 = arith.constant dense<0.000000e+00> : vector<1x8x8xf32>
    %50 = tpu.matmul %49, %40, %cst_29 {dimension_numbers = #tpu.dot_dimension_numbers<[2], [1], [1], [2], [0, 0, 0, 1, 1, 2], [0], [0]>} : vector<1x8x8xbf16>, vector<1x8x8xbf16>, vector<1x8x8xf32> -> vector<1x8x8xf32>
    "tpu.trace_stop"() : () -> ()
    %51 = tpu.reciprocal %48 {approx = true} : vector<1x8x1xf32> -> vector<1x8x1xf32>
    %52 = vector.broadcast %51 : vector<1x8x1xf32> to vector<1x8x8xf32>
    %53 = arith.mulf %50, %52 : vector<1x8x8xf32>
    %54 = vector.shape_cast %53 : vector<1x8x8xf32> to vector<8x8xf32>
    %55 = arith.truncf %54 : vector<8x8xf32> to vector<8x8xbf16>
    %c8_30 = arith.constant 8 : index
    %c0_31 = arith.constant 0 : index
    %56 = vector.load %arg8[%c8_30, %c0_31] : memref<32x32xbf16, #tpu.memory_space<vmem>>, vector<8x32xbf16>
    %cst_32 = arith.constant dense<0.000000e+00> : vector<8x32xf32>
    %57 = tpu.matmul %55, %56, %cst_32 {dimension_numbers = #tpu.dot_dimension_numbers<[1], [0], [0], [1], [0, 0, 1, 1], [], []>} : vector<8x8xbf16>, vector<8x32xbf16>, vector<8x32xf32> -> vector<8x32xf32>
    %58 = arith.addf %34, %57 : vector<8x32xf32>
    %c0_33 = arith.constant 0 : index
    %c16 = arith.constant 16 : index
    %59 = vector.load %arg11[%c0_33, %c16] : memref<8x32xbf16, #tpu.memory_space<vmem>>, vector<8x8xbf16>
    %60 = vector.shape_cast %59 : vector<8x8xbf16> to vector<1x8x8xbf16>
    %c0_34 = arith.constant 0 : index
    %c16_35 = arith.constant 16 : index
    %61 = vector.load %arg12[%c0_34, %c16_35] : memref<8x32xbf16, #tpu.memory_space<vmem>>, vector<8x8xbf16>
    %62 = vector.shape_cast %61 : vector<8x8xbf16> to vector<1x8x8xbf16>
    %c0_36 = arith.constant 0 : index
    %c16_37 = arith.constant 16 : index
    %63 = vector.load %arg13[%c0_36, %c16_37] : memref<8x32xbf16, #tpu.memory_space<vmem>>, vector<8x8xbf16>
    %64 = vector.shape_cast %63 : vector<8x8xbf16> to vector<1x8x8xbf16>
    "tpu.trace_start"() <{level = 10 : i32, message = "bqd,bkd->bqk"}> : () -> ()
    %cst_38 = arith.constant dense<0.000000e+00> : vector<1x8x8xf32>
    %65 = tpu.matmul %60, %62, %cst_38 {dimension_numbers = #tpu.dot_dimension_numbers<[2], [2], [1], [1], [0, 0, 0, 1, 1, 1], [0], [0]>} : vector<1x8x8xbf16>, vector<1x8x8xbf16>, vector<1x8x8xf32> -> vector<1x8x8xf32>
    "tpu.trace_stop"() : () -> ()
    %cst_39 = arith.constant dense<0xFF800000> : vector<1x8xf32>
    %66 = vector.multi_reduction <maximumf>, %65, %cst_39 [2] : vector<1x8x8xf32> to vector<1x8xf32>
    %67 = vector.shape_cast %66 : vector<1x8xf32> to vector<1x8x1xf32>
    %68 = vector.broadcast %67 : vector<1x8x1xf32> to vector<1x8x8xf32>
    %69 = arith.subf %65, %68 : vector<1x8x8xf32>
    %70 = math.exp %69 : vector<1x8x8xf32>
    %cst_40 = arith.constant dense<0.000000e+00> : vector<1x8xf32>
    %71 = vector.multi_reduction <add>, %70, %cst_40 [2] : vector<1x8x8xf32> to vector<1x8xf32>
    %72 = vector.shape_cast %71 : vector<1x8xf32> to vector<1x8x1xf32>
    %73 = arith.truncf %70 : vector<1x8x8xf32> to vector<1x8x8xbf16>
    "tpu.trace_start"() <{level = 10 : i32, message = "bqk,bkd->bqd"}> : () -> ()
    %cst_41 = arith.constant dense<0.000000e+00> : vector<1x8x8xf32>
    %74 = tpu.matmul %73, %64, %cst_41 {dimension_numbers = #tpu.dot_dimension_numbers<[2], [1], [1], [2], [0, 0, 0, 1, 1, 2], [0], [0]>} : vector<1x8x8xbf16>, vector<1x8x8xbf16>, vector<1x8x8xf32> -> vector<1x8x8xf32>
    "tpu.trace_stop"() : () -> ()
    %75 = tpu.reciprocal %72 {approx = true} : vector<1x8x1xf32> -> vector<1x8x1xf32>
    %76 = vector.broadcast %75 : vector<1x8x1xf32> to vector<1x8x8xf32>
    %77 = arith.mulf %74, %76 : vector<1x8x8xf32>
    %78 = vector.shape_cast %77 : vector<1x8x8xf32> to vector<8x8xf32>
    %79 = arith.truncf %78 : vector<8x8xf32> to vector<8x8xbf16>
    %c16_42 = arith.constant 16 : index
    %c0_43 = arith.constant 0 : index
    %80 = vector.load %arg8[%c16_42, %c0_43] : memref<32x32xbf16, #tpu.memory_space<vmem>>, vector<8x32xbf16>
    %cst_44 = arith.constant dense<0.000000e+00> : vector<8x32xf32>
    %81 = tpu.matmul %79, %80, %cst_44 {dimension_numbers = #tpu.dot_dimension_numbers<[1], [0], [0], [1], [0, 0, 1, 1], [], []>} : vector<8x8xbf16>, vector<8x32xbf16>, vector<8x32xf32> -> vector<8x32xf32>
    %82 = arith.addf %58, %81 : vector<8x32xf32>
    %c0_45 = arith.constant 0 : index
    %c24 = arith.constant 24 : index
    %83 = vector.load %arg11[%c0_45, %c24] : memref<8x32xbf16, #tpu.memory_space<vmem>>, vector<8x8xbf16>
    %84 = vector.shape_cast %83 : vector<8x8xbf16> to vector<1x8x8xbf16>
    %c0_46 = arith.constant 0 : index
    %c24_47 = arith.constant 24 : index
    %85 = vector.load %arg12[%c0_46, %c24_47] : memref<8x32xbf16, #tpu.memory_space<vmem>>, vector<8x8xbf16>
    %86 = vector.shape_cast %85 : vector<8x8xbf16> to vector<1x8x8xbf16>
    %c0_48 = arith.constant 0 : index
    %c24_49 = arith.constant 24 : index
    %87 = vector.load %arg13[%c0_48, %c24_49] : memref<8x32xbf16, #tpu.memory_space<vmem>>, vector<8x8xbf16>
    %88 = vector.shape_cast %87 : vector<8x8xbf16> to vector<1x8x8xbf16>
    "tpu.trace_start"() <{level = 10 : i32, message = "bqd,bkd->bqk"}> : () -> ()
    %cst_50 = arith.constant dense<0.000000e+00> : vector<1x8x8xf32>
    %89 = tpu.matmul %84, %86, %cst_50 {dimension_numbers = #tpu.dot_dimension_numbers<[2], [2], [1], [1], [0, 0, 0, 1, 1, 1], [0], [0]>} : vector<1x8x8xbf16>, vector<1x8x8xbf16>, vector<1x8x8xf32> -> vector<1x8x8xf32>
    "tpu.trace_stop"() : () -> ()
    %cst_51 = arith.constant dense<0xFF800000> : vector<1x8xf32>
    %90 = vector.multi_reduction <maximumf>, %89, %cst_51 [2] : vector<1x8x8xf32> to vector<1x8xf32>
    %91 = vector.shape_cast %90 : vector<1x8xf32> to vector<1x8x1xf32>
    %92 = vector.broadcast %91 : vector<1x8x1xf32> to vector<1x8x8xf32>
    %93 = arith.subf %89, %92 : vector<1x8x8xf32>
    %94 = math.exp %93 : vector<1x8x8xf32>
    %cst_52 = arith.constant dense<0.000000e+00> : vector<1x8xf32>
    %95 = vector.multi_reduction <add>, %94, %cst_52 [2] : vector<1x8x8xf32> to vector<1x8xf32>
    %96 = vector.shape_cast %95 : vector<1x8xf32> to vector<1x8x1xf32>
    %97 = arith.truncf %94 : vector<1x8x8xf32> to vector<1x8x8xbf16>
    "tpu.trace_start"() <{level = 10 : i32, message = "bqk,bkd->bqd"}> : () -> ()
    %cst_53 = arith.constant dense<0.000000e+00> : vector<1x8x8xf32>
    %98 = tpu.matmul %97, %88, %cst_53 {dimension_numbers = #tpu.dot_dimension_numbers<[2], [1], [1], [2], [0, 0, 0, 1, 1, 2], [0], [0]>} : vector<1x8x8xbf16>, vector<1x8x8xbf16>, vector<1x8x8xf32> -> vector<1x8x8xf32>
    "tpu.trace_stop"() : () -> ()
    %99 = tpu.reciprocal %96 {approx = true} : vector<1x8x1xf32> -> vector<1x8x1xf32>
    %100 = vector.broadcast %99 : vector<1x8x1xf32> to vector<1x8x8xf32>
    %101 = arith.mulf %98, %100 : vector<1x8x8xf32>
    %102 = vector.shape_cast %101 : vector<1x8x8xf32> to vector<8x8xf32>
    %103 = arith.truncf %102 : vector<8x8xf32> to vector<8x8xbf16>
    %c24_54 = arith.constant 24 : index
    %c0_55 = arith.constant 0 : index
    %104 = vector.load %arg8[%c24_54, %c0_55] : memref<32x32xbf16, #tpu.memory_space<vmem>>, vector<8x32xbf16>
    %cst_56 = arith.constant dense<0.000000e+00> : vector<8x32xf32>
    %105 = tpu.matmul %103, %104, %cst_56 {dimension_numbers = #tpu.dot_dimension_numbers<[1], [0], [0], [1], [0, 0, 1, 1], [], []>} : vector<8x8xbf16>, vector<8x32xbf16>, vector<8x32xf32> -> vector<8x32xf32>
    %106 = arith.addf %82, %105 : vector<8x32xf32>
    %c0_57 = arith.constant 0 : index
    %c0_58 = arith.constant 0 : index
    %107 = vector.load %arg9[%c0_57, %c0_58] : memref<1x32xf32, #tpu.memory_space<vmem>>, vector<1x32xf32>
    %108 = vector.broadcast %107 : vector<1x32xf32> to vector<8x32xf32>
    %109 = arith.addf %106, %108 : vector<8x32xf32>
    %110 = vector.shape_cast %109 : vector<8x32xf32> to vector<1x8x32xf32>
    %c0_59 = arith.constant 0 : index
    %c0_60 = arith.constant 0 : index
    %c0_61 = arith.constant 0 : index
    %111 = vector.load %arg10[%c0_59, %c0_60, %c0_61] : memref<1x8x32xf32, #tpu.memory_space<vmem>>, vector<1x8x32xf32>
    tpu.vector_store %arg10[%c0_59, %c0_60, %c0_61], %110 {strides = array<i32>} : memref<1x8x32xf32, #tpu.memory_space<vmem>>, vector<1x8x32xf32>,
    return
  }
  func.func @transform_0(%arg0: i32, %arg1: i32) -> (i32, i32, i32) {
    %c0_i32 = arith.constant 0 : i32
    %c0_i32_0 = arith.constant 0 : i32
    %c0_i32_1 = arith.constant 0 : i32
    return %arg0, %c0_i32, %c0_i32_0 : i32, i32, i32
  }
  func.func @transform_1(%arg0: i32, %arg1: i32) -> (i32, i32, i32) {
    %c0_i32 = arith.constant 0 : i32
    %c0_i32_0 = arith.constant 0 : i32
    %c0_i32_1 = arith.constant 0 : i32
    return %arg0, %c0_i32, %c0_i32_0 : i32, i32, i32
  }
  func.func @transform_2(%arg0: i32, %arg1: i32) -> (i32, i32, i32) {
    %c0_i32 = arith.constant 0 : i32
    %c0_i32_0 = arith.constant 0 : i32
    return %arg0, %arg1, %c0_i32 : i32, i32, i32
  }
  func.func @transform_3(%arg0: i32, %arg1: i32) -> (i32, i32) {
    %c0_i32 = arith.constant 0 : i32
    %c0_i32_0 = arith.constant 0 : i32
    %c0_i32_1 = arith.constant 0 : i32
    return %c0_i32, %c0_i32_0 : i32, i32
  }
  func.func @transform_4(%arg0: i32, %arg1: i32) -> (i32, i32) {
    %c0_i32 = arith.constant 0 : i32
    %c0_i32_0 = arith.constant 0 : i32
    %c0_i32_1 = arith.constant 0 : i32
    return %c0_i32, %c0_i32_0 : i32, i32
  }
  func.func @transform_5(%arg0: i32, %arg1: i32) -> (i32, i32) {
    %c0_i32 = arith.constant 0 : i32
    %c0_i32_0 = arith.constant 0 : i32
    %c0_i32_1 = arith.constant 0 : i32
    return %c0_i32, %c0_i32_0 : i32, i32
  }
  func.func @transform_6(%arg0: i32, %arg1: i32) -> (i32, i32) {
    %c0_i32 = arith.constant 0 : i32
    %c0_i32_0 = arith.constant 0 : i32
    %c0_i32_1 = arith.constant 0 : i32
    return %c0_i32, %c0_i32_0 : i32, i32
  }
  func.func @transform_7(%arg0: i32, %arg1: i32) -> (i32, i32) {
    %c0_i32 = arith.constant 0 : i32
    %c0_i32_0 = arith.constant 0 : i32
    %c0_i32_1 = arith.constant 0 : i32
    return %c0_i32, %c0_i32_0 : i32, i32
  }
  func.func @transform_8(%arg0: i32, %arg1: i32) -> (i32, i32, i32) {
    %c0_i32 = arith.constant 0 : i32
    %c0_i32_0 = arith.constant 0 : i32
    return %arg0, %arg1, %c0_i32 : i32, i32, i32
  }
}

module attributes {stable_mosaic.version = 11 : i64} {
  func.func @_mhsa_kernel(%arg0: i32, %arg1: i32, %arg2: memref<1x8x32xf32, #tpu.memory_space<vmem>>, %arg3: memref<1x8x32xf32, #tpu.memory_space<vmem>>, %arg4: memref<1x8x32xf32, #tpu.memory_space<vmem>>, %arg5: memref<32x32xbf16, #tpu.memory_space<vmem>>, %arg6: memref<32x32xbf16, #tpu.memory_space<vmem>>, %arg7: memref<32x32xbf16, #tpu.memory_space<vmem>>, %arg8: memref<32x32xbf16, #tpu.memory_space<vmem>>, %arg9: memref<1x32xf32, #tpu.memory_space<vmem>>, %arg10: memref<1x8x32xf32, #tpu.memory_space<vmem>>, %arg11: memref<8x32xbf16, #tpu.memory_space<vmem>>, %arg12: memref<8x32xbf16, #tpu.memory_space<vmem>>, %arg13: memref<8x32xbf16, #tpu.memory_space<vmem>>) attributes {dimension_semantics = [#tpu.dimension_semantics<parallel>, #tpu.dimension_semantics<arbitrary>], iteration_bounds = array<i64: 2, 1>, scalar_prefetch = 0 : i64, scratch_operands = 3 : i64, tpu.core_type = #tpu.core_type<tc>, window_params = [{transform_indices = @transform_0, window_bounds = array<i64: 1, 8, 32>}, {transform_indices = @transform_1, window_bounds = array<i64: 1, 8, 32>}, {transform_indices = @transform_2, window_bounds = array<i64: 1, 8, 32>}, {pipeline_mode = #tpu.pipeline_mode<synchronous>, transform_indices = @transform_3, window_bounds = array<i64: 32, 32>}, {pipeline_mode = #tpu.pipeline_mode<synchronous>, transform_indices = @transform_4, window_bounds = array<i64: 32, 32>}, {pipeline_mode = #tpu.pipeline_mode<synchronous>, transform_indices = @transform_5, window_bounds = array<i64: 32, 32>}, {pipeline_mode = #tpu.pipeline_mode<synchronous>, transform_indices = @transform_6, window_bounds = array<i64: 32, 32>}, {pipeline_mode = #tpu.pipeline_mode<synchronous>, transform_indices = @transform_7, window_bounds = array<i64: 1, 32>}, {transform_indices = @transform_8, window_bounds = array<i64: 1, 8, 32>}]} {
    %c0_i32 = arith.constant 0 : i32
    %0 = arith.cmpi eq, %arg1, %c0_i32 : i32
    %1 = arith.extui %0 : i1 to i32
    %c0_i32_0 = arith.constant 0 : i32
    %2 = arith.cmpi ne, %1, %c0_i32_0 : i32
    scf.if %2 {
      %c0_62 = arith.constant 0 : index
      %c0_63 = arith.constant 0 : index
      %c0_64 = arith.constant 0 : index
      %112 = vector.load %arg3[%c0_62, %c0_63, %c0_64] : memref<1x8x32xf32, #tpu.memory_space<vmem>>, vector<1x8x32xf32>
      %113 = vector.shape_cast %112 : vector<1x8x32xf32> to vector<8x32xf32>
      %114 = arith.truncf %113 : vector<8x32xf32> to vector<8x32xbf16>
      %c0_65 = arith.constant 0 : index
      %c0_66 = arith.constant 0 : index
      %c0_67 = arith.constant 0 : index
      %115 = vector.load %arg2[%c0_65, %c0_66, %c0_67] : memref<1x8x32xf32, #tpu.memory_space<vmem>>, vector<1x8x32xf32>
      %116 = vector.shape_cast %115 : vector<1x8x32xf32> to vector<8x32xf32>
      %117 = arith.truncf %116 : vector<8x32xf32> to vector<8x32xbf16>
      %c0_68 = arith.constant 0 : index
      %c0_69 = arith.constant 0 : index
      %118 = vector.load %arg6[%c0_68, %c0_69] : memref<32x32xbf16, #tpu.memory_space<vmem>>, vector<32x32xbf16>
      %cst_70 = arith.constant dense<0.000000e+00> : vector<8x32xf32>
      %119 = tpu.matmul %114, %118, %cst_70 {dimension_numbers = #tpu.dot_dimension_numbers<[1], [0], [0], [1], [0, 0, 1, 1], [], []>} : vector<8x32xbf16>, vector<32x32xbf16>, vector<8x32xf32> -> vector<8x32xf32>
      %120 = arith.truncf %119 : vector<8x32xf32> to vector<8x32xbf16>
      %c0_71 = arith.constant 0 : index
      %c0_72 = arith.constant 0 : index
      %121 = vector.load %arg12[%c0_71, %c0_72] : memref<8x32xbf16, #tpu.memory_space<vmem>>, vector<8x32xbf16>
      tpu.vector_store %arg12[%c0_71, %c0_72], %120 {strides = array<i32>} : memref<8x32xbf16, #tpu.memory_space<vmem>>, vector<8x32xbf16>,
      %c0_73 = arith.constant 0 : index
      %c0_74 = arith.constant 0 : index
      %122 = vector.load %arg5[%c0_73, %c0_74] : memref<32x32xbf16, #tpu.memory_space<vmem>>, vector<32x32xbf16>
      %cst_75 = arith.constant dense<0.000000e+00> : vector<8x32xf32>
      %123 = tpu.matmul %117, %122, %cst_75 {dimension_numbers = #tpu.dot_dimension_numbers<[1], [0], [0], [1], [0, 0, 1, 1], [], []>} : vector<8x32xbf16>, vector<32x32xbf16>, vector<8x32xf32> -> vector<8x32xf32>
      %124 = arith.truncf %123 : vector<8x32xf32> to vector<8x32xbf16>
      %c0_76 = arith.constant 0 : index
      %c0_77 = arith.constant 0 : index
      %125 = vector.load %arg13[%c0_76, %c0_77] : memref<8x32xbf16, #tpu.memory_space<vmem>>, vector<8x32xbf16>
      tpu.vector_store %arg13[%c0_76, %c0_77], %124 {strides = array<i32>} : memref<8x32xbf16, #tpu.memory_space<vmem>>, vector<8x32xbf16>,
    } else {
    }
    %c0 = arith.constant 0 : index
    %c0_1 = arith.constant 0 : index
    %c0_2 = arith.constant 0 : index
    %3 = vector.load %arg4[%c0, %c0_1, %c0_2] : memref<1x8x32xf32, #tpu.memory_space<vmem>>, vector<1x8x32xf32>
    %4 = vector.shape_cast %3 : vector<1x8x32xf32> to vector<8x32xf32>
    %5 = arith.truncf %4 : vector<8x32xf32> to vector<8x32xbf16>
    %c0_3 = arith.constant 0 : index
    %c0_4 = arith.constant 0 : index
    %6 = vector.load %arg7[%c0_3, %c0_4] : memref<32x32xbf16, #tpu.memory_space<vmem>>, vector<32x32xbf16>
    %cst = arith.constant dense<0.000000e+00> : vector<8x32xf32>
    %7 = tpu.matmul %5, %6, %cst {dimension_numbers = #tpu.dot_dimension_numbers<[1], [0], [0], [1], [0, 0, 1, 1], [], []>} : vector<8x32xbf16>, vector<32x32xbf16>, vector<8x32xf32> -> vector<8x32xf32>
    %8 = arith.truncf %7 : vector<8x32xf32> to vector<8x32xbf16>
    %c0_5 = arith.constant 0 : index
    %c0_6 = arith.constant 0 : index
    %9 = vector.load %arg11[%c0_5, %c0_6] : memref<8x32xbf16, #tpu.memory_space<vmem>>, vector<8x32xbf16>
    tpu.vector_store %arg11[%c0_5, %c0_6], %8 {strides = array<i32>} : memref<8x32xbf16, #tpu.memory_space<vmem>>, vector<8x32xbf16>,
    %cst_7 = arith.constant 0.000000e+00 : f32
    %10 = vector.broadcast %cst_7 : f32 to vector<8x32xf32>
    %c0_8 = arith.constant 0 : index
    %c0_9 = arith.constant 0 : index
    %11 = vector.load %arg11[%c0_8, %c0_9] : memref<8x32xbf16, #tpu.memory_space<vmem>>, vector<8x8xbf16>
    %12 = vector.shape_cast %11 : vector<8x8xbf16> to vector<1x8x8xbf16>
    %c0_10 = arith.constant 0 : index
    %c0_11 = arith.constant 0 : index
    %13 = vector.load %arg12[%c0_10, %c0_11] : memref<8x32xbf16, #tpu.memory_space<vmem>>, vector<8x8xbf16>
    %14 = vector.shape_cast %13 : vector<8x8xbf16> to vector<1x8x8xbf16>
    %c0_12 = arith.constant 0 : index
    %c0_13 = arith.constant 0 : index
    %15 = vector.load %arg13[%c0_12, %c0_13] : memref<8x32xbf16, #tpu.memory_space<vmem>>, vector<8x8xbf16>
    %16 = vector.shape_cast %15 : vector<8x8xbf16> to vector<1x8x8xbf16>
    "tpu.trace_start"() <{level = 10 : i32, message = "bqd,bkd->bqk"}> : () -> ()
    %cst_14 = arith.constant dense<0.000000e+00> : vector<1x8x8xf32>
    %17 = tpu.matmul %12, %14, %cst_14 {dimension_numbers = #tpu.dot_dimension_numbers<[2], [2], [1], [1], [0, 0, 0, 1, 1, 1], [0], [0]>} : vector<1x8x8xbf16>, vector<1x8x8xbf16>, vector<1x8x8xf32> -> vector<1x8x8xf32>
    "tpu.trace_stop"() : () -> ()
    %cst_15 = arith.constant dense<0xFF800000> : vector<1x8xf32>
    %18 = vector.multi_reduction <maximumf>, %17, %cst_15 [2] : vector<1x8x8xf32> to vector<1x8xf32>
    %19 = vector.shape_cast %18 : vector<1x8xf32> to vector<1x8x1xf32>
    %20 = vector.broadcast %19 : vector<1x8x1xf32> to vector<1x8x8xf32>
    %21 = arith.subf %17, %20 : vector<1x8x8xf32>
    %22 = math.exp %21 : vector<1x8x8xf32>
    %cst_16 = arith.constant dense<0.000000e+00> : vector<1x8xf32>
    %23 = vector.multi_reduction <add>, %22, %cst_16 [2] : vector<1x8x8xf32> to vector<1x8xf32>
    %24 = vector.shape_cast %23 : vector<1x8xf32> to vector<1x8x1xf32>
    %25 = arith.truncf %22 : vector<1x8x8xf32> to vector<1x8x8xbf16>
    "tpu.trace_start"() <{level = 10 : i32, message = "bqk,bkd->bqd"}> : () -> ()
    %cst_17 = arith.constant dense<0.000000e+00> : vector<1x8x8xf32>
    %26 = tpu.matmul %25, %16, %cst_17 {dimension_numbers = #tpu.dot_dimension_numbers<[2], [1], [1], [2], [0, 0, 0, 1, 1, 2], [0], [0]>} : vector<1x8x8xbf16>, vector<1x8x8xbf16>, vector<1x8x8xf32> -> vector<1x8x8xf32>
    "tpu.trace_stop"() : () -> ()
    %27 = tpu.reciprocal %24 {approx = true} : vector<1x8x1xf32> -> vector<1x8x1xf32>
    %28 = vector.broadcast %27 : vector<1x8x1xf32> to vector<1x8x8xf32>
    %29 = arith.mulf %26, %28 : vector<1x8x8xf32>
    %30 = vector.shape_cast %29 : vector<1x8x8xf32> to vector<8x8xf32>
    %31 = arith.truncf %30 : vector<8x8xf32> to vector<8x8xbf16>
    %c0_18 = arith.constant 0 : index
    %c0_19 = arith.constant 0 : index
    %32 = vector.load %arg8[%c0_18, %c0_19] : memref<32x32xbf16, #tpu.memory_space<vmem>>, vector<8x32xbf16>
    %cst_20 = arith.constant dense<0.000000e+00> : vector<8x32xf32>
    %33 = tpu.matmul %31, %32, %cst_20 {dimension_numbers = #tpu.dot_dimension_numbers<[1], [0], [0], [1], [0, 0, 1, 1], [], []>} : vector<8x8xbf16>, vector<8x32xbf16>, vector<8x32xf32> -> vector<8x32xf32>
    %34 = arith.addf %10, %33 : vector<8x32xf32>
    %c0_21 = arith.constant 0 : index
    %c8 = arith.constant 8 : index
    %35 = vector.load %arg11[%c0_21, %c8] : memref<8x32xbf16, #tpu.memory_space<vmem>>, vector<8x8xbf16>
    %36 = vector.shape_cast %35 : vector<8x8xbf16> to vector<1x8x8xbf16>
    %c0_22 = arith.constant 0 : index
    %c8_23 = arith.constant 8 : index
    %37 = vector.load %arg12[%c0_22, %c8_23] : memref<8x32xbf16, #tpu.memory_space<vmem>>, vector<8x8xbf16>
    %38 = vector.shape_cast %37 : vector<8x8xbf16> to vector<1x8x8xbf16>
    %c0_24 = arith.constant 0 : index
    %c8_25 = arith.constant 8 : index
    %39 = vector.load %arg13[%c0_24, %c8_25] : memref<8x32xbf16, #tpu.memory_space<vmem>>, vector<8x8xbf16>
    %40 = vector.shape_cast %39 : vector<8x8xbf16> to vector<1x8x8xbf16>
    "tpu.trace_start"() <{level = 10 : i32, message = "bqd,bkd->bqk"}> : () -> ()
    %cst_26 = arith.constant dense<0.000000e+00> : vector<1x8x8xf32>
    %41 = tpu.matmul %36, %38, %cst_26 {dimension_numbers = #tpu.dot_dimension_numbers<[2], [2], [1], [1], [0, 0, 0, 1, 1, 1], [0], [0]>} : vector<1x8x8xbf16>, vector<1x8x8xbf16>, vector<1x8x8xf32> -> vector<1x8x8xf32>
    "tpu.trace_stop"() : () -> ()
    %cst_27 = arith.constant dense<0xFF800000> : vector<1x8xf32>
    %42 = vector.multi_reduction <maximumf>, %41, %cst_27 [2] : vector<1x8x8xf32> to vector<1x8xf32>
    %43 = vector.shape_cast %42 : vector<1x8xf32> to vector<1x8x1xf32>
    %44 = vector.broadcast %43 : vector<1x8x1xf32> to vector<1x8x8xf32>
    %45 = arith.subf %41, %44 : vector<1x8x8xf32>
    %46 = math.exp %45 : vector<1x8x8xf32>
    %cst_28 = arith.constant dense<0.000000e+00> : vector<1x8xf32>
    %47 = vector.multi_reduction <add>, %46, %cst_28 [2] : vector<1x8x8xf32> to vector<1x8xf32>
    %48 = vector.shape_cast %47 : vector<1x8xf32> to vector<1x8x1xf32>
    %49 = arith.truncf %46 : vector<1x8x8xf32> to vector<1x8x8xbf16>
    "tpu.trace_start"() <{level = 10 : i32, message = "bqk,bkd->bqd"}> : () -> ()
    %cst_29 = arith.constant dense<0.000000e+00> : vector<1x8x8xf32>
    %50 = tpu.matmul %49, %40, %cst_29 {dimension_numbers = #tpu.dot_dimension_numbers<[2], [1], [1], [2], [0, 0, 0, 1, 1, 2], [0], [0]>} : vector<1x8x8xbf16>, vector<1x8x8xbf16>, vector<1x8x8xf32> -> vector<1x8x8xf32>
    "tpu.trace_stop"() : () -> ()
    %51 = tpu.reciprocal %48 {approx = true} : vector<1x8x1xf32> -> vector<1x8x1xf32>
    %52 = vector.broadcast %51 : vector<1x8x1xf32> to vector<1x8x8xf32>
    %53 = arith.mulf %50, %52 : vector<1x8x8xf32>
    %54 = vector.shape_cast %53 : vector<1x8x8xf32> to vector<8x8xf32>
    %55 = arith.truncf %54 : vector<8x8xf32> to vector<8x8xbf16>
    %c8_30 = arith.constant 8 : index
    %c0_31 = arith.constant 0 : index
    %56 = vector.load %arg8[%c8_30, %c0_31] : memref<32x32xbf16, #tpu.memory_space<vmem>>, vector<8x32xbf16>
    %cst_32 = arith.constant dense<0.000000e+00> : vector<8x32xf32>
    %57 = tpu.matmul %55, %56, %cst_32 {dimension_numbers = #tpu.dot_dimension_numbers<[1], [0], [0], [1], [0, 0, 1, 1], [], []>} : vector<8x8xbf16>, vector<8x32xbf16>, vector<8x32xf32> -> vector<8x32xf32>
    %58 = arith.addf %34, %57 : vector<8x32xf32>
    %c0_33 = arith.constant 0 : index
    %c16 = arith.constant 16 : index
    %59 = vector.load %arg11[%c0_33, %c16] : memref<8x32xbf16, #tpu.memory_space<vmem>>, vector<8x8xbf16>
    %60 = vector.shape_cast %59 : vector<8x8xbf16> to vector<1x8x8xbf16>
    %c0_34 = arith.constant 0 : index
    %c16_35 = arith.constant 16 : index
    %61 = vector.load %arg12[%c0_34, %c16_35] : memref<8x32xbf16, #tpu.memory_space<vmem>>, vector<8x8xbf16>
    %62 = vector.shape_cast %61 : vector<8x8xbf16> to vector<1x8x8xbf16>
    %c0_36 = arith.constant 0 : index
    %c16_37 = arith.constant 16 : index
    %63 = vector.load %arg13[%c0_36, %c16_37] : memref<8x32xbf16, #tpu.memory_space<vmem>>, vector<8x8xbf16>
    %64 = vector.shape_cast %63 : vector<8x8xbf16> to vector<1x8x8xbf16>
    "tpu.trace_start"() <{level = 10 : i32, message = "bqd,bkd->bqk"}> : () -> ()
    %cst_38 = arith.constant dense<0.000000e+00> : vector<1x8x8xf32>
    %65 = tpu.matmul %60, %62, %cst_38 {dimension_numbers = #tpu.dot_dimension_numbers<[2], [2], [1], [1], [0, 0, 0, 1, 1, 1], [0], [0]>} : vector<1x8x8xbf16>, vector<1x8x8xbf16>, vector<1x8x8xf32> -> vector<1x8x8xf32>
    "tpu.trace_stop"() : () -> ()
    %cst_39 = arith.constant dense<0xFF800000> : vector<1x8xf32>
    %66 = vector.multi_reduction <maximumf>, %65, %cst_39 [2] : vector<1x8x8xf32> to vector<1x8xf32>
    %67 = vector.shape_cast %66 : vector<1x8xf32> to vector<1x8x1xf32>
    %68 = vector.broadcast %67 : vector<1x8x1xf32> to vector<1x8x8xf32>
    %69 = arith.subf %65, %68 : vector<1x8x8xf32>
    %70 = math.exp %69 : vector<1x8x8xf32>
    %cst_40 = arith.constant dense<0.000000e+00> : vector<1x8xf32>
    %71 = vector.multi_reduction <add>, %70, %cst_40 [2] : vector<1x8x8xf32> to vector<1x8xf32>
    %72 = vector.shape_cast %71 : vector<1x8xf32> to vector<1x8x1xf32>
    %73 = arith.truncf %70 : vector<1x8x8xf32> to vector<1x8x8xbf16>
    "tpu.trace_start"() <{level = 10 : i32, message = "bqk,bkd->bqd"}> : () -> ()
    %cst_41 = arith.constant dense<0.000000e+00> : vector<1x8x8xf32>
    %74 = tpu.matmul %73, %64, %cst_41 {dimension_numbers = #tpu.dot_dimension_numbers<[2], [1], [1], [2], [0, 0, 0, 1, 1, 2], [0], [0]>} : vector<1x8x8xbf16>, vector<1x8x8xbf16>, vector<1x8x8xf32> -> vector<1x8x8xf32>
    "tpu.trace_stop"() : () -> ()
    %75 = tpu.reciprocal %72 {approx = true} : vector<1x8x1xf32> -> vector<1x8x1xf32>
    %76 = vector.broadcast %75 : vector<1x8x1xf32> to vector<1x8x8xf32>
    %77 = arith.mulf %74, %76 : vector<1x8x8xf32>
    %78 = vector.shape_cast %77 : vector<1x8x8xf32> to vector<8x8xf32>
    %79 = arith.truncf %78 : vector<8x8xf32> to vector<8x8xbf16>
    %c16_42 = arith.constant 16 : index
    %c0_43 = arith.constant 0 : index
    %80 = vector.load %arg8[%c16_42, %c0_43] : memref<32x32xbf16, #tpu.memory_space<vmem>>, vector<8x32xbf16>
    %cst_44 = arith.constant dense<0.000000e+00> : vector<8x32xf32>
    %81 = tpu.matmul %79, %80, %cst_44 {dimension_numbers = #tpu.dot_dimension_numbers<[1], [0], [0], [1], [0, 0, 1, 1], [], []>} : vector<8x8xbf16>, vector<8x32xbf16>, vector<8x32xf32> -> vector<8x32xf32>
    %82 = arith.addf %58, %81 : vector<8x32xf32>
    %c0_45 = arith.constant 0 : index
    %c24 = arith.constant 24 : index
    %83 = vector.load %arg11[%c0_45, %c24] : memref<8x32xbf16, #tpu.memory_space<vmem>>, vector<8x8xbf16>
    %84 = vector.shape_cast %83 : vector<8x8xbf16> to vector<1x8x8xbf16>
    %c0_46 = arith.constant 0 : index
    %c24_47 = arith.constant 24 : index
    %85 = vector.load %arg12[%c0_46, %c24_47] : memref<8x32xbf16, #tpu.memory_space<vmem>>, vector<8x8xbf16>
    %86 = vector.shape_cast %85 : vector<8x8xbf16> to vector<1x8x8xbf16>
    %c0_48 = arith.constant 0 : index
    %c24_49 = arith.constant 24 : index
    %87 = vector.load %arg13[%c0_48, %c24_49] : memref<8x32xbf16, #tpu.memory_space<vmem>>, vector<8x8xbf16>
    %88 = vector.shape_cast %87 : vector<8x8xbf16> to vector<1x8x8xbf16>
    "tpu.trace_start"() <{level = 10 : i32, message = "bqd,bkd->bqk"}> : () -> ()
    %cst_50 = arith.constant dense<0.000000e+00> : vector<1x8x8xf32>
    %89 = tpu.matmul %84, %86, %cst_50 {dimension_numbers = #tpu.dot_dimension_numbers<[2], [2], [1], [1], [0, 0, 0, 1, 1, 1], [0], [0]>} : vector<1x8x8xbf16>, vector<1x8x8xbf16>, vector<1x8x8xf32> -> vector<1x8x8xf32>
    "tpu.trace_stop"() : () -> ()
    %cst_51 = arith.constant dense<0xFF800000> : vector<1x8xf32>
    %90 = vector.multi_reduction <maximumf>, %89, %cst_51 [2] : vector<1x8x8xf32> to vector<1x8xf32>
    %91 = vector.shape_cast %90 : vector<1x8xf32> to vector<1x8x1xf32>
    %92 = vector.broadcast %91 : vector<1x8x1xf32> to vector<1x8x8xf32>
    %93 = arith.subf %89, %92 : vector<1x8x8xf32>
    %94 = math.exp %93 : vector<1x8x8xf32>
    %cst_52 = arith.constant dense<0.000000e+00> : vector<1x8xf32>
    %95 = vector.multi_reduction <add>, %94, %cst_52 [2] : vector<1x8x8xf32> to vector<1x8xf32>
    %96 = vector.shape_cast %95 : vector<1x8xf32> to vector<1x8x1xf32>
    %97 = arith.truncf %94 : vector<1x8x8xf32> to vector<1x8x8xbf16>
    "tpu.trace_start"() <{level = 10 : i32, message = "bqk,bkd->bqd"}> : () -> ()
    %cst_53 = arith.constant dense<0.000000e+00> : vector<1x8x8xf32>
    %98 = tpu.matmul %97, %88, %cst_53 {dimension_numbers = #tpu.dot_dimension_numbers<[2], [1], [1], [2], [0, 0, 0, 1, 1, 2], [0], [0]>} : vector<1x8x8xbf16>, vector<1x8x8xbf16>, vector<1x8x8xf32> -> vector<1x8x8xf32>
    "tpu.trace_stop"() : () -> ()
    %99 = tpu.reciprocal %96 {approx = true} : vector<1x8x1xf32> -> vector<1x8x1xf32>
    %100 = vector.broadcast %99 : vector<1x8x1xf32> to vector<1x8x8xf32>
    %101 = arith.mulf %98, %100 : vector<1x8x8xf32>
    %102 = vector.shape_cast %101 : vector<1x8x8xf32> to vector<8x8xf32>
    %103 = arith.truncf %102 : vector<8x8xf32> to vector<8x8xbf16>
    %c24_54 = arith.constant 24 : index
    %c0_55 = arith.constant 0 : index
    %104 = vector.load %arg8[%c24_54, %c0_55] : memref<32x32xbf16, #tpu.memory_space<vmem>>, vector<8x32xbf16>
    %cst_56 = arith.constant dense<0.000000e+00> : vector<8x32xf32>
    %105 = tpu.matmul %103, %104, %cst_56 {dimension_numbers = #tpu.dot_dimension_numbers<[1], [0], [0], [1], [0, 0, 1, 1], [], []>} : vector<8x8xbf16>, vector<8x32xbf16>, vector<8x32xf32> -> vector<8x32xf32>
    %106 = arith.addf %82, %105 : vector<8x32xf32>
    %c0_57 = arith.constant 0 : index
    %c0_58 = arith.constant 0 : index
    %107 = vector.load %arg9[%c0_57, %c0_58] : memref<1x32xf32, #tpu.memory_space<vmem>>, vector<1x32xf32>
    %108 = vector.broadcast %107 : vector<1x32xf32> to vector<8x32xf32>
    %109 = arith.addf %106, %108 : vector<8x32xf32>
    %110 = vector.shape_cast %109 : vector<8x32xf32> to vector<1x8x32xf32>
    %c0_59 = arith.constant 0 : index
    %c0_60 = arith.constant 0 : index
    %c0_61 = arith.constant 0 : index
    %111 = vector.load %arg10[%c0_59, %c0_60, %c0_61] : memref<1x8x32xf32, #tpu.memory_space<vmem>>, vector<1x8x32xf32>
    tpu.vector_store %arg10[%c0_59, %c0_60, %c0_61], %110 {strides = array<i32>} : memref<1x8x32xf32, #tpu.memory_space<vmem>>, vector<1x8x32xf32>,
    return
  }
  func.func @transform_0(%arg0: i32, %arg1: i32) -> (i32, i32, i32) {
    %c0_i32 = arith.constant 0 : i32
    %c0_i32_0 = arith.constant 0 : i32
    %c0_i32_1 = arith.constant 0 : i32
    return %arg0, %c0_i32, %c0_i32_0 : i32, i32, i32
  }
  func.func @transform_1(%arg0: i32, %arg1: i32) -> (i32, i32, i32) {
    %c0_i32 = arith.constant 0 : i32
    %c0_i32_0 = arith.constant 0 : i32
    %c0_i32_1 = arith.constant 0 : i32
    return %arg0, %c0_i32, %c0_i32_0 : i32, i32, i32
  }
  func.func @transform_2(%arg0: i32, %arg1: i32) -> (i32, i32, i32) {
    %c0_i32 = arith.constant 0 : i32
    %c0_i32_0 = arith.constant 0 : i32
    return %arg0, %arg1, %c0_i32 : i32, i32, i32
  }
  func.func @transform_3(%arg0: i32, %arg1: i32) -> (i32, i32) {
    %c0_i32 = arith.constant 0 : i32
    %c0_i32_0 = arith.constant 0 : i32
    %c0_i32_1 = arith.constant 0 : i32
    return %c0_i32, %c0_i32_0 : i32, i32
  }
  func.func @transform_4(%arg0: i32, %arg1: i32) -> (i32, i32) {
    %c0_i32 = arith.constant 0 : i32
    %c0_i32_0 = arith.constant 0 : i32
    %c0_i32_1 = arith.constant 0 : i32
    return %c0_i32, %c0_i32_0 : i32, i32
  }
  func.func @transform_5(%arg0: i32, %arg1: i32) -> (i32, i32) {
    %c0_i32 = arith.constant 0 : i32
    %c0_i32_0 = arith.constant 0 : i32
    %c0_i32_1 = arith.constant 0 : i32
    return %c0_i32, %c0_i32_0 : i32, i32
  }
  func.func @transform_6(%arg0: i32, %arg1: i32) -> (i32, i32) {
    %c0_i32 = arith.constant 0 : i32
    %c0_i32_0 = arith.constant 0 : i32
    %c0_i32_1 = arith.constant 0 : i32
    return %c0_i32, %c0_i32_0 : i32, i32
  }
  func.func @transform_7(%arg0: i32, %arg1: i32) -> (i32, i32) {
    %c0_i32 = arith.constant 0 : i32
    %c0_i32_0 = arith.constant 0 : i32
    %c0_i32_1 = arith.constant 0 : i32
    return %c0_i32, %c0_i32_0 : i32, i32
  }
  func.func @transform_8(%arg0: i32, %arg1: i32) -> (i32, i32, i32) {
    %c0_i32 = arith.constant 0 : i32
    %c0_i32_0 = arith.constant 0 : i32
    return %arg0, %arg1, %c0_i32 : i32, i32, i32
  }
}

</mosaic_0001>

<llo_original>
// kernel: tpu_custom_call.1
$region0: #{tpu_custom_call.1}
  #allocation0 [shape = 'u32[]', space=smem, size = 0x4, offset = 0x4, fixed_abs, tag = 'smem constant byte address 0x4 - core index']
  #allocation1 [shape = 'u32[144,128]{1,0:T(1,128)}', space=vmem, size = 0x12000, scoped, tag = 'internal scratch']
  #allocation2 [shape = 'bf16[8,32]{1,0:T(8,128)(2,1)}', space=vmem, size = 0x800, scoped, tag = 'scratch operand']
  #allocation3 [shape = 'bf16[8,32]{1,0:T(8,128)(2,1)}', space=vmem, size = 0x800, scoped, tag = 'scratch operand']
  #allocation4 [shape = 'bf16[8,32]{1,0:T(8,128)(2,1)}', space=vmem, size = 0x800, scoped, tag = 'scratch operand']
  %s0 = inlined_call_operand.hbm [shape: f32[2,8,32], index: 0, kind: input, shape index: {}]
  %s1 = inlined_call_operand.hbm [shape: f32[2,8,32], index: 1, kind: input, shape index: {}]
  %s2 = inlined_call_operand.hbm [shape: f32[2,8,32], index: 2, kind: input, shape index: {}]
  %s3 = inlined_call_operand.hbm [shape: bf16[32,32], index: 3, kind: input, shape index: {}]
  %s4 = inlined_call_operand.hbm [shape: bf16[32,32], index: 4, kind: input, shape index: {}]
  %s5 = inlined_call_operand.hbm [shape: bf16[32,32], index: 5, kind: input, shape index: {}]
  %s6 = inlined_call_operand.hbm [shape: bf16[32,32], index: 6, kind: input, shape index: {}]
  %s7 = inlined_call_operand.vmem [shape: f32[1,32], index: 7, kind: input, shape index: {}]
  %s8 = inlined_call_operand.hbm [shape: f32[2,8,32], index: 8, kind: output, shape index: {}]
  %s9 = sld [smem:[#allocation0]]
  $region97: #{tpu_custom_call.1} parent=0
    _
  %s11 = ssub.s32 1, %s9
  %s12 = scalar_select 0, %s11, %s9
  $region1: #{tpu_custom_call.1} parent=0
    #allocation5 [shape = 'u8[8192]{0}', space=vmem, size = 0x2000, scoped, tag = 'input window, operand 0']
    #allocation6 [shape = 's32[2]{0}', space=sflag, size = 0x8, scoped, tag = 'scoped memory for tpu_custom_call.1']
    #allocation7 [shape = 's32[2]{0}', space=sflag, size = 0x8, scoped, tag = 'scoped memory for tpu_custom_call.1']
    #allocation8 [shape = 'u8[8192]{0}', space=vmem, size = 0x2000, scoped, tag = 'input window, operand 1']
    #allocation9 [shape = 's32[2]{0}', space=sflag, size = 0x8, scoped, tag = 'scoped memory for tpu_custom_call.1']
    #allocation10 [shape = 'u8[8192]{0}', space=vmem, size = 0x2000, scoped, tag = 'input window, operand 2']
    #allocation11 [shape = 'u8[8192]{0}', space=vmem, size = 0x2000, scoped, tag = 'input window, operand 3, single buffered']
    #allocation12 [shape = 's32[1]{0}', space=sflag, size = 0x4, scoped, tag = 'scoped memory for tpu_custom_call.1']
    #allocation13 [shape = 'u8[8192]{0}', space=vmem, size = 0x2000, scoped, tag = 'input window, operand 4, single buffered']
    #allocation14 [shape = 'u8[8192]{0}', space=vmem, size = 0x2000, scoped, tag = 'input window, operand 5, single buffered']
    #allocation15 [shape = 's32[1]{0}', space=sflag, size = 0x4, scoped, tag = 'scoped memory for tpu_custom_call.1']
    #allocation16 [shape = 'u8[8192]{0}', space=vmem, size = 0x2000, scoped, tag = 'input window, operand 6, single buffered']
    #allocation17 [shape = 'u8[8192]{0}', space=vmem, size = 0x2000, scoped, tag = 'output window, operand 0']
    %13 = vsyncpa [#allocation6], 0
    %s14 = scalar_lea.sflag [#allocation6], 1
    %15 = vsyncpa %s14, 0
    %16 = vsyncpa [#allocation9], 0
    %s17 = scalar_lea.sflag [#allocation9], 1
    %18 = vsyncpa %s17, 0
    %19 = vsyncpa [#allocation12], 0
    %20 = vsyncpa [#allocation15], 0
    %21 = vsyncpa [#allocation7], 0
    %s22 = scalar_lea.sflag [#allocation7], 1
    %23 = vsyncpa %s22, 0
    loop: start=0, step=1, limit=4
    $region2: #{tpu_custom_call.1} parent=1 // loop_pre_header
      _
    $region3: #{tpu_custom_call.1} parent=1 // loop_header
      %s25 = sphi 0, %s29
      %p26 = scmp.ge.s32.totalorder %s25, 4
      %s32 = sphi 0, %s44
      %s33 = sphi 0, %s40
      %s34 = sphi 0, %s32
      %s35 = sphi 0, %s33
      %s36 = sphi 0, %s34
      %s37 = sphi 0, %s35
      %s47 = sphi 0, %s49
      %s50 = sphi 0, %s47
      %s51 = sphi 0, %s50
      %s67 = sphi 0, %s51
      %s73 = sphi 0, %s75
      %s76 = sphi 0, %s73
      %s77 = sphi 0, %s76
      %s93 = sphi 0, %s77
      %s101 = sphi 0, %s103
      %s104 = sphi 0, %s101
      %s105 = sphi 0, %s104
      %s121 = sphi 0, %s105
      %s125 = sphi 0, %s125
      %s127 = sphi 0, %s125
      %s128 = sphi 0, %s127
      %s142 = sphi 0, %s128
      %s146 = sphi 0, %s146
      %s148 = sphi 0, %s146
      %s149 = sphi 0, %s148
      %s163 = sphi 0, %s149
      %s167 = sphi 0, %s167
      %s169 = sphi 0, %s167
      %s170 = sphi 0, %s169
      %s184 = sphi 0, %s170
      %s188 = sphi 0, %s188
      %s190 = sphi 0, %s188
      %s191 = sphi 0, %s190
      %s205 = sphi 0, %s191
      %s209 = sphi 0, %s209
      %s211 = sphi 0, %s209
      %s212 = sphi 0, %s211
      %s226 = sphi 0, %s212
      %s234 = sphi 0, %s236
      %s237 = sphi 0, %s234
      %s238 = sphi 0, %s237
      %s254 = sphi 0, %s238
    $region4: #{tpu_custom_call.1} parent=1 // loop_header_branch
      %28 = sbr.rel (%p26) target = $region8
    $region5: #{tpu_custom_call.1} parent=1 // loop_body
      %s30 = ssub.s32 %s25, 1
      %s31 = ssub.s32 %s25, 2
      %s38 = sadd.s32 1, %s33
      %p39 = scmp.ge.s32.totalorder %s38, 1
      %s40 = scalar_select %p39, 0, %s38
      %s41 = sadd.s32 1, %s32
      %s42 = scalar_select %p39, %s41, %s32
      %p43 = scmp.ge.s32.totalorder %s42, 2
      %s44 = scalar_select %p43, 0, %s42
      %s45 = ssub.s32 %s32, %s44
      %p46 = scmp.eq.s32.totalorder %s45, 0
      %s48 = sadd.s32 %s47, 1
      %s49 = scalar_select %p46, %s47, %s48
      %p52 = pneg %p46
      %p53 = scmp.eq.s32.totalorder %s25, 1
      %p54 = por %p52, %p53
      %p55 = scmp.ne.s32.totalorder %s47, %s50
      %p56 = scmp.eq.s32.totalorder %s25, 0
      %p57 = por %p55, %p56
      %p58 = scmp.ne.s32.totalorder %s47, %s50
      %p59 = scmp.eq.s32.totalorder %s30, 1
      %p60 = por %p58, %p59
      %p61 = scmp.ne.s32.totalorder %s50, %s51
      %p62 = scmp.eq.s32.totalorder %s30, 0
      %p63 = por %p61, %p62
      %p64 = scmp.ne.s32.totalorder %s50, %s51
      %p65 = scmp.eq.s32.totalorder %s31, 1
      %p66 = por %p64, %p65
      %p68 = scmp.ne.s32.totalorder %s51, %s67
      %p69 = scmp.eq.s32.totalorder %s31, 0
      %p70 = por %p68, %p69
      %s71 = ssub.s32 %s32, %s44
      %p72 = scmp.eq.s32.totalorder %s71, 0
      %s74 = sadd.s32 %s73, 1
      %s75 = scalar_select %p72, %s73, %s74
      %p78 = pneg %p72
      %p79 = scmp.eq.s32.totalorder %s25, 1
      %p80 = por %p78, %p79
      %p81 = scmp.ne.s32.totalorder %s73, %s76
      %p82 = scmp.eq.s32.totalorder %s25, 0
      %p83 = por %p81, %p82
      %p84 = scmp.ne.s32.totalorder %s73, %s76
      %p85 = scmp.eq.s32.totalorder %s30, 1
      %p86 = por %p84, %p85
      %p87 = scmp.ne.s32.totalorder %s76, %s77
      %p88 = scmp.eq.s32.totalorder %s30, 0
      %p89 = por %p87, %p88
      %p90 = scmp.ne.s32.totalorder %s76, %s77
      %p91 = scmp.eq.s32.totalorder %s31, 1
      %p92 = por %p90, %p91
      %p94 = scmp.ne.s32.totalorder %s77, %s93
      %p95 = scmp.eq.s32.totalorder %s31, 0
      %p96 = por %p94, %p95
      %s97 = ssub.s32 %s32, %s44
      %s98 = ssub.s32 %s33, %s40
      %s99 = sor.u32 %s97, %s98
      %p100 = scmp.eq.s32.totalorder %s99, 0
      %s102 = sadd.s32 %s101, 1
      %s103 = scalar_select %p100, %s101, %s102
      %p106 = pneg %p100
      %p107 = scmp.eq.s32.totalorder %s25, 1
      %p108 = por %p106, %p107
      %p109 = scmp.ne.s32.totalorder %s101, %s104
      %p110 = scmp.eq.s32.totalorder %s25, 0
      %p111 = por %p109, %p110
      %p112 = scmp.ne.s32.totalorder %s101, %s104
      %p113 = scmp.eq.s32.totalorder %s30, 1
      %p114 = por %p112, %p113
      %p115 = scmp.ne.s32.totalorder %s104, %s105
      %p116 = scmp.eq.s32.totalorder %s30, 0
      %p117 = por %p115, %p116
      %p118 = scmp.ne.s32.totalorder %s104, %s105
      %p119 = scmp.eq.s32.totalorder %s31, 1
      %p120 = por %p118, %p119
      %p122 = scmp.ne.s32.totalorder %s105, %s121
      %p123 = scmp.eq.s32.totalorder %s31, 0
      %p124 = por %p122, %p123
      %s126 = sadd.s32 %s125, 1
      %p129 = scmp.eq.s32.totalorder %s25, 1
      %p130 = scmp.ne.s32.totalorder %s125, %s127
      %p131 = scmp.eq.s32.totalorder %s25, 0
      %p132 = por %p130, %p131
      %p133 = scmp.ne.s32.totalorder %s125, %s127
      %p134 = scmp.eq.s32.totalorder %s30, 1
      %p135 = por %p133, %p134
      %p136 = scmp.ne.s32.totalorder %s127, %s128
      %p137 = scmp.eq.s32.totalorder %s30, 0
      %p138 = por %p136, %p137
      %p139 = scmp.ne.s32.totalorder %s127, %s128
      %p140 = scmp.eq.s32.totalorder %s31, 1
      %p141 = por %p139, %p140
      %p143 = scmp.ne.s32.totalorder %s128, %s142
      %p144 = scmp.eq.s32.totalorder %s31, 0
      %p145 = por %p143, %p144
      %s147 = sadd.s32 %s146, 1
      %p150 = scmp.eq.s32.totalorder %s25, 1
      %p151 = scmp.ne.s32.totalorder %s146, %s148
      %p152 = scmp.eq.s32.totalorder %s25, 0
      %p153 = por %p151, %p152
      %p154 = scmp.ne.s32.totalorder %s146, %s148
      %p155 = scmp.eq.s32.totalorder %s30, 1
      %p156 = por %p154, %p155
      %p157 = scmp.ne.s32.totalorder %s148, %s149
      %p158 = scmp.eq.s32.totalorder %s30, 0
      %p159 = por %p157, %p158
      %p160 = scmp.ne.s32.totalorder %s148, %s149
      %p161 = scmp.eq.s32.totalorder %s31, 1
      %p162 = por %p160, %p161
      %p164 = scmp.ne.s32.totalorder %s149, %s163
      %p165 = scmp.eq.s32.totalorder %s31, 0
      %p166 = por %p164, %p165
      %s168 = sadd.s32 %s167, 1
      %p171 = scmp.eq.s32.totalorder %s25, 1
      %p172 = scmp.ne.s32.totalorder %s167, %s169
      %p173 = scmp.eq.s32.totalorder %s25, 0
      %p174 = por %p172, %p173
      %p175 = scmp.ne.s32.totalorder %s167, %s169
      %p176 = scmp.eq.s32.totalorder %s30, 1
      %p177 = por %p175, %p176
      %p178 = scmp.ne.s32.totalorder %s169, %s170
      %p179 = scmp.eq.s32.totalorder %s30, 0
      %p180 = por %p178, %p179
      %p181 = scmp.ne.s32.totalorder %s169, %s170
      %p182 = scmp.eq.s32.totalorder %s31, 1
      %p183 = por %p181, %p182
      %p185 = scmp.ne.s32.totalorder %s170, %s184
      %p186 = scmp.eq.s32.totalorder %s31, 0
      %p187 = por %p185, %p186
      %s189 = sadd.s32 %s188, 1
      %p192 = scmp.eq.s32.totalorder %s25, 1
      %p193 = scmp.ne.s32.totalorder %s188, %s190
      %p194 = scmp.eq.s32.totalorder %s25, 0
      %p195 = por %p193, %p194
      %p196 = scmp.ne.s32.totalorder %s188, %s190
      %p197 = scmp.eq.s32.totalorder %s30, 1
      %p198 = por %p196, %p197
      %p199 = scmp.ne.s32.totalorder %s190, %s191
      %p200 = scmp.eq.s32.totalorder %s30, 0
      %p201 = por %p199, %p200
      %p202 = scmp.ne.s32.totalorder %s190, %s191
      %p203 = scmp.eq.s32.totalorder %s31, 1
      %p204 = por %p202, %p203
      %p206 = scmp.ne.s32.totalorder %s191, %s205
      %p207 = scmp.eq.s32.totalorder %s31, 0
      %p208 = por %p206, %p207
      %s210 = sadd.s32 %s209, 1
      %p213 = scmp.eq.s32.totalorder %s25, 1
      %p214 = scmp.ne.s32.totalorder %s209, %s211
      %p215 = scmp.eq.s32.totalorder %s25, 0
      %p216 = por %p214, %p215
      %p217 = scmp.ne.s32.totalorder %s209, %s211
      %p218 = scmp.eq.s32.totalorder %s30, 1
      %p219 = por %p217, %p218
      %p220 = scmp.ne.s32.totalorder %s211, %s212
      %p221 = scmp.eq.s32.totalorder %s30, 0
      %p222 = por %p220, %p221
      %p223 = scmp.ne.s32.totalorder %s211, %s212
      %p224 = scmp.eq.s32.totalorder %s31, 1
      %p225 = por %p223, %p224
      %p227 = scmp.ne.s32.totalorder %s212, %s226
      %p228 = scmp.eq.s32.totalorder %s31, 0
      %p229 = por %p227, %p228
      %s230 = ssub.s32 %s32, %s44
      %s231 = ssub.s32 %s33, %s40
      %s232 = sor.u32 %s230, %s231
      %p233 = scmp.eq.s32.totalorder %s232, 0
      %s235 = sadd.s32 %s234, 1
      %s236 = scalar_select %p233, %s234, %s235
      %p239 = pneg %p233
      %p240 = scmp.eq.s32.totalorder %s25, 1
      %p241 = por %p239, %p240
      %p242 = scmp.ne.s32.totalorder %s234, %s237
      %p243 = scmp.eq.s32.totalorder %s25, 0
      %p244 = por %p242, %p243
      %p245 = scmp.ne.s32.totalorder %s234, %s237
      %p246 = scmp.eq.s32.totalorder %s30, 1
      %p247 = por %p245, %p246
      %p248 = scmp.ne.s32.totalorder %s237, %s238
      %p249 = scmp.eq.s32.totalorder %s30, 0
      %p250 = por %p248, %p249
      %p251 = scmp.ne.s32.totalorder %s237, %s238
      %p252 = scmp.eq.s32.totalorder %s31, 1
      %p253 = por %p251, %p252
      %p255 = scmp.ne.s32.totalorder %s238, %s254
      %p256 = scmp.eq.s32.totalorder %s31, 0
      %p257 = por %p255, %p256
      %p258 = scmp.le.s32.totalorder 1, %s25
      %p259 = scmp.lt.s32.totalorder %s25, 3
      %p260 = pnand %p258, %p259
      %p261 = pneg %p260
      // Predicated region
      $region9: #{tpu_custom_call.1} parent=5 // pred_check
        _
      $region10: #{tpu_custom_call.1} parent=5 // pred_check_branch
        %263 = sbr.rel (%p260) target = $region12
      $region11: #{tpu_custom_call.1} parent=5 // pred_region
        %s264 = ssub.s32 %s25, 1
        // Predicated region
        $region13: #{tpu_custom_call.1} parent=11 // pred_check
          %p265 = pneg %p138
        $region14: #{tpu_custom_call.1} parent=11 // pred_check_branch
          %267 = sbr.rel (%p265) target = $region16
        $region15: #{tpu_custom_call.1} parent=11 // pred_region
          %s269 = ssub.s32 256, 256
          %270 = vsyncadd [#allocation12], %s269
          %s271 = sshll.u32 [#allocation11], 4
          %s272 = int_to_ptr.vmem [resolvable:$true] %s271
          %277 = dma.hbm_to_vmem [thread:$0]  %s3, 256, %s272, [#allocation12], 64, 64, 4
        $region16: #{tpu_custom_call.1} parent=11 // pred_fallthru
          _
        // Predicated region
        $region17: #{tpu_custom_call.1} parent=11 // pred_check
          %p278 = pneg %p159
        $region18: #{tpu_custom_call.1} parent=11 // pred_check_branch
          %280 = sbr.rel (%p278) target = $region20
        $region19: #{tpu_custom_call.1} parent=11 // pred_region
          %s282 = ssub.s32 256, 256
          %283 = vsyncadd [#allocation12], %s282
          %s284 = sshll.u32 [#allocation13], 4
          %s285 = int_to_ptr.vmem [resolvable:$true] %s284
          %290 = dma.hbm_to_vmem [thread:$0]  %s4, 256, %s285, [#allocation12], 64, 64, 4
        $region20: #{tpu_custom_call.1} parent=11 // pred_fallthru
          _
        // Predicated region
        $region21: #{tpu_custom_call.1} parent=11 // pred_check
          %p291 = pneg %p180
        $region22: #{tpu_custom_call.1} parent=11 // pred_check_branch
          %293 = sbr.rel (%p291) target = $region24
        $region23: #{tpu_custom_call.1} parent=11 // pred_region
          %s295 = ssub.s32 256, 256
          %296 = vsyncadd [#allocation15], %s295
          %s297 = sshll.u32 [#allocation14], 4
          %s298 = int_to_ptr.vmem [resolvable:$true] %s297
          %303 = dma.hbm_to_vmem [thread:$0]  %s5, 256, %s298, [#allocation15], 64, 64, 4
        $region24: #{tpu_custom_call.1} parent=11 // pred_fallthru
          _
        // Predicated region
        $region25: #{tpu_custom_call.1} parent=11 // pred_check
          %p304 = pneg %p201
        $region26: #{tpu_custom_call.1} parent=11 // pred_check_branch
          %306 = sbr.rel (%p304) target = $region28
        $region27: #{tpu_custom_call.1} parent=11 // pred_region
          %s308 = ssub.s32 256, 256
          %309 = vsyncadd [#allocation15], %s308
          %s310 = sshll.u32 [#allocation16], 4
          %s311 = int_to_ptr.vmem [resolvable:$true] %s310
          %316 = dma.hbm_to_vmem [thread:$0]  %s6, 256, %s311, [#allocation15], 64, 64, 4
        $region28: #{tpu_custom_call.1} parent=11 // pred_fallthru
          _
        // Predicated region
        $region29: #{tpu_custom_call.1} parent=11 // pred_check
          %p317 = pneg %p222
        $region30: #{tpu_custom_call.1} parent=11 // pred_check_branch
          %319 = sbr.rel (%p317) target = $region32
        $region31: #{tpu_custom_call.1} parent=11 // pred_region
          _
        $region32: #{tpu_custom_call.1} parent=11 // pred_fallthru
          _
      $region12: #{tpu_custom_call.1} parent=5 // pred_fallthru
        _
      %p320 = scmp.lt.s32.totalorder %s25, 2
      // Predicated region
      $region33: #{tpu_custom_call.1} parent=5 // pred_check
        %p321 = pneg %p320
      $region34: #{tpu_custom_call.1} parent=5 // pred_check_branch
        %323 = sbr.rel (%p321) target = $region36
      $region35: #{tpu_custom_call.1} parent=5 // pred_region
        // Predicated region
        $region37: #{tpu_custom_call.1} parent=35 // pred_check
          %p324 = pneg %p57
        $region38: #{tpu_custom_call.1} parent=35 // pred_check_branch
          %326 = sbr.rel (%p324) target = $region40
        $region39: #{tpu_custom_call.1} parent=35 // pred_region
          %s327 = sand.u32 %s47, 1
          %s328 = scalar_lea.sflag [#allocation6], %s327
          %s329 = sand.u32 %s47, 1
          %s330 = smul.addr %s329, 8
          %s331 = scalar_lea.vmem [#allocation5], %s330
          %s333 = ssub.s32 128, 128
          %334 = vsyncadd %s328, %s333
          %s335 = smul.addr %s32, 128
          %s336 = scalar_lea.hbm %s0, %s335
          %s338 = sshll.u32 %s331, 4
          %s339 = int_to_ptr.vmem [resolvable:$true] %s338
          %341 = dma.hbm_to_vmem [thread:$0]  %s336, 128, %s339, %s328
        $region40: #{tpu_custom_call.1} parent=35 // pred_fallthru
          _
        // Predicated region
        $region41: #{tpu_custom_call.1} parent=35 // pred_check
          %p342 = pneg %p83
        $region42: #{tpu_custom_call.1} parent=35 // pred_check_branch
          %344 = sbr.rel (%p342) target = $region44
        $region43: #{tpu_custom_call.1} parent=35 // pred_region
          %s345 = sand.u32 %s25, 1
          %s346 = scalar_lea.sflag [#allocation9], %s345
          %s347 = sand.u32 %s73, 1
          %s348 = smul.addr %s347, 8
          %s349 = scalar_lea.vmem [#allocation8], %s348
          %s351 = ssub.s32 128, 128
          %352 = vsyncadd %s346, %s351
          %s353 = smul.addr %s32, 128
          %s354 = scalar_lea.hbm %s1, %s353
          %s356 = sshll.u32 %s349, 4
          %s357 = int_to_ptr.vmem [resolvable:$true] %s356
          %359 = dma.hbm_to_vmem [thread:$0]  %s354, 128, %s357, %s346
        $region44: #{tpu_custom_call.1} parent=35 // pred_fallthru
          _
        // Predicated region
        $region45: #{tpu_custom_call.1} parent=35 // pred_check
          %p360 = pneg %p111
        $region46: #{tpu_custom_call.1} parent=35 // pred_check_branch
          %362 = sbr.rel (%p360) target = $region48
        $region47: #{tpu_custom_call.1} parent=35 // pred_region
          %s363 = sand.u32 %s25, 1
          %s364 = scalar_lea.sflag [#allocation9], %s363
          %s365 = sand.u32 %s101, 1
          %s366 = smul.addr %s365, 8
          %s367 = scalar_lea.vmem [#allocation10], %s366
          %s369 = ssub.s32 128, 128
          %370 = vsyncadd %s364, %s369
          %s371 = sadd.s32 %s33, %s32
          %s372 = smul.addr %s371, 128
          %s373 = scalar_lea.hbm %s2, %s372
          %s375 = sshll.u32 %s367, 4
          %s376 = int_to_ptr.vmem [resolvable:$true] %s375
          %378 = dma.hbm_to_vmem [thread:$0]  %s373, 128, %s376, %s364
        $region48: #{tpu_custom_call.1} parent=35 // pred_fallthru
          _
      $region36: #{tpu_custom_call.1} parent=5 // pred_fallthru
        _
      %p379 = scmp.le.s32.totalorder 1, %s25
      %p380 = scmp.lt.s32.totalorder %s25, 3
      %p381 = pnand %p379, %p380
      %p382 = pneg %p381
      // Predicated region
      $region49: #{tpu_custom_call.1} parent=5 // pred_check
        _
      $region50: #{tpu_custom_call.1} parent=5 // pred_check_branch
        %384 = sbr.rel (%p381) target = $region52
      $region51: #{tpu_custom_call.1} parent=5 // pred_region
        %s385 = ssub.s32 %s25, 1
        %s386 = sand.u32 %s50, 1
        %s387 = scalar_lea.sflag [#allocation6], %s386
        %s388 = sand.u32 %s50, 1
        %s389 = smul.addr %s388, 8
        %s390 = scalar_lea.vmem [#allocation5], %s389
        // Predicated region
        $region53: #{tpu_custom_call.1} parent=51 // pred_check
          %p391 = pneg %p63
        $region54: #{tpu_custom_call.1} parent=51 // pred_check_branch
          %393 = sbr.rel (%p391) target = $region56
        $region55: #{tpu_custom_call.1} parent=51 // pred_region
          %394 = dma.done %s387, 128
        $region56: #{tpu_custom_call.1} parent=51 // pred_fallthru
          _
        %s395 = sand.u32 %s30, 1
        %s396 = scalar_lea.sflag [#allocation9], %s395
        %s397 = sand.u32 %s76, 1
        %s398 = smul.addr %s397, 8
        %s399 = scalar_lea.vmem [#allocation8], %s398
        // Predicated region
        $region57: #{tpu_custom_call.1} parent=51 // pred_check
          %p400 = pneg %p89
        $region58: #{tpu_custom_call.1} parent=51 // pred_check_branch
          %402 = sbr.rel (%p400) target = $region60
        $region59: #{tpu_custom_call.1} parent=51 // pred_region
          %403 = dma.done %s396, 128
        $region60: #{tpu_custom_call.1} parent=51 // pred_fallthru
          _
        %s404 = sand.u32 %s30, 1
        %s405 = scalar_lea.sflag [#allocation9], %s404
        %s406 = sand.u32 %s104, 1
        %s407 = smul.addr %s406, 8
        %s408 = scalar_lea.vmem [#allocation10], %s407
        // Predicated region
        $region61: #{tpu_custom_call.1} parent=51 // pred_check
          %p409 = pneg %p117
        $region62: #{tpu_custom_call.1} parent=51 // pred_check_branch
          %411 = sbr.rel (%p409) target = $region64
        $region63: #{tpu_custom_call.1} parent=51 // pred_region
          %412 = dma.done %s405, 128
        $region64: #{tpu_custom_call.1} parent=51 // pred_fallthru
          _
        // Predicated region
        $region65: #{tpu_custom_call.1} parent=51 // pred_check
          %p413 = pneg %p138
        $region66: #{tpu_custom_call.1} parent=51 // pred_check_branch
          %415 = sbr.rel (%p413) target = $region68
        $region67: #{tpu_custom_call.1} parent=51 // pred_region
          %416 = dma.done [#allocation12], 256
        $region68: #{tpu_custom_call.1} parent=51 // pred_fallthru
          _
        // Predicated region
        $region69: #{tpu_custom_call.1} parent=51 // pred_check
          %p417 = pneg %p159
        $region70: #{tpu_custom_call.1} parent=51 // pred_check_branch
          %419 = sbr.rel (%p417) target = $region72
        $region71: #{tpu_custom_call.1} parent=51 // pred_region
          %420 = dma.done [#allocation12], 256
        $region72: #{tpu_custom_call.1} parent=51 // pred_fallthru
          _
        // Predicated region
        $region73: #{tpu_custom_call.1} parent=51 // pred_check
          %p421 = pneg %p180
        $region74: #{tpu_custom_call.1} parent=51 // pred_check_branch
          %423 = sbr.rel (%p421) target = $region76
        $region75: #{tpu_custom_call.1} parent=51 // pred_region
          %424 = dma.done [#allocation15], 256
        $region76: #{tpu_custom_call.1} parent=51 // pred_fallthru
          _
        // Predicated region
        $region77: #{tpu_custom_call.1} parent=51 // pred_check
          %p425 = pneg %p201
        $region78: #{tpu_custom_call.1} parent=51 // pred_check_branch
          %427 = sbr.rel (%p425) target = $region80
        $region79: #{tpu_custom_call.1} parent=51 // pred_region
          %428 = dma.done [#allocation15], 256
        $region80: #{tpu_custom_call.1} parent=51 // pred_fallthru
          _
        %s429 = sand.u32 %s50, 1
        %s430 = scalar_lea.sflag [#allocation6], %s429
        %s431 = sand.u32 %s50, 1
        %s432 = smul.addr %s431, 8
        %s433 = scalar_lea.vmem [#allocation5], %s432
        %p434 = pneg %p63
        %p435 = pneg %p60
        %s436 = sand.u32 %s30, 1
        %s437 = scalar_lea.sflag [#allocation9], %s436
        %s438 = sand.u32 %s76, 1
        %s439 = smul.addr %s438, 8
        %s440 = scalar_lea.vmem [#allocation8], %s439
        %p441 = pneg %p89
        %p442 = pneg %p86
        %s443 = sand.u32 %s30, 1
        %s444 = scalar_lea.sflag [#allocation9], %s443
        %s445 = sand.u32 %s104, 1
        %s446 = smul.addr %s445, 8
        %s447 = scalar_lea.vmem [#allocation10], %s446
        %p448 = pneg %p117
        %p449 = pneg %p114
        %p450 = pneg %p138
        %p451 = pneg %p135
        %p452 = pneg %p159
        %p453 = pneg %p156
        %p454 = pneg %p180
        %p455 = pneg %p177
        %p456 = pneg %p201
        %p457 = pneg %p198
        %p458 = pneg %p222
        %p459 = pneg %p219
        %p460 = pneg %p250
        %p461 = pneg %p247
        %s462 = sand.u32 %s237, 1
        %s463 = scalar_lea.sflag [#allocation7], %s462
        %s464 = sand.u32 %s237, 1
        %s465 = smul.addr %s464, 8
        %s466 = scalar_lea.vmem [#allocation17], %s465
        %p468 = scmp.eq.s32.totalorder %s35, 0
        // Predicated region
        $region81: #{tpu_custom_call.1} parent=51 // pred_check
          %p469 = pneg %p468
        $region82: #{tpu_custom_call.1} parent=51 // pred_check_branch
          %471 = sbr.rel (%p469) target = $region84
        $region83: #{tpu_custom_call.1} parent=51 // pred_region
          %v472 = vld [vmem:[%s399] sm:$0xff]
          %v473 = vpack.c.bf16 %v472, %v472
          %v474 = vld [vmem:[%s390] sm:$0xff]
          %v475 = vpack.c.bf16 %v474, %v474
          %v476 = vld [vmem:[#allocation13] sm:$0xf]
          %v477 = vld [vmem:[#allocation13 + $0x4] sm:$0xf]
          %v478 = vld [vmem:[#allocation13 + $0x8] sm:$0xf]
          %v479 = vld [vmem:[#allocation13 + $0xc] sm:$0xf]
          %v484 = vunpack.c.l.b16 %v476
          %v485 = vunpack.c.l.b16 %v477
          %v486 = vunpack.c.l.b16 %v478
          %v487 = vunpack.c.l.b16 %v479
          %v488 = vpack.c.b16 %v485, %v484
          %v489 = vpack.c.b16 %v487, %v486
          %vm492 = vcmask 261120
          %v494 = vsel %vm492, %v473, 0
          %496 = vmatprep.subr.bf16.mxu0 0
          %497 = vmatpush1.bf16.msra.mxu0 0
          %498 = vmatprep.subr.bf16.mxu0 0
          %499 = vmatpush1.bf16.msra.mxu0 0
          %500 = vmatprep.subr.bf16.mxu0 0
          %501 = vmatpush1.bf16.msra.mxu0 0
          %502 = vmatprep.subr.bf16.mxu0 0
          %503 = vmatpush1.bf16.msra.mxu0 0
          %504 = vmatprep.subr.bf16.mxu0 0
          %505 = vmatpush1.bf16.msra.mxu0 0
          %506 = vmatprep.subr.bf16.mxu0 0
          %507 = vmatpush1.bf16.msra.mxu0 0
          %508 = vmatprep.subr.bf16.mxu0 0
          %509 = vmatpush1.bf16.msra.mxu0 %v489
          %510 = vmatprep.subr.bf16.mxu0 0
          %511 = vmatpush1.bf16.msra.mxu0 %v488
          %512 = vmatprep.subr.bf16.mxu0 0
          %513 = vmatpush2.bf16.msra.mxu0 0
          %514 = vmatprep.subr.bf16.mxu0 0
          %515 = vmatpush2.bf16.msra.mxu0 0
          %516 = vmatprep.subr.bf16.mxu0 0
          %517 = vmatpush2.bf16.msra.mxu0 0
          %518 = vmatprep.subr.bf16.mxu0 0
          %519 = vmatpush2.bf16.msra.mxu0 0
          %520 = vmatprep.subr.bf16.mxu0 0
          %521 = vmatpush2.bf16.msra.mxu0 0
          %522 = vmatprep.subr.bf16.mxu0 0
          %523 = vmatpush2.bf16.msra.mxu0 0
          %524 = vmatprep.subr.bf16.mxu0 0
          %525 = vmatpush2.bf16.msra.mxu0 0
          %526 = vmatprep.subr.bf16.mxu0 0
          %527 = vmatpush2.bf16.msra.mxu0 0
          %528 = vmatprep.mubr.bf16.mxu0 0
          %529 = vmatmul.mubr.bf16.gmra.mxu0 %v494
          %v530 = vpop.f32.mrf.mxu0
          %v531 = vadd.f32 0.0, %v530
          %v532 = vpop.f32.mrf.mxu0
          %v533 = vpop.f32.mrf.mxu0
          %v534 = vpop.f32.mrf.mxu0
          %535 = vdwg.mxu0
          %v536 = vpack.c.bf16 %v531, %v531
          %vm537 = vcmask 257024
          %538 = vst.msk [vmem:[#allocation3] sm:$0xf] %vm537, %v536
          %v539 = vld [vmem:[#allocation11] sm:$0xf]
          %v540 = vld [vmem:[#allocation11 + $0x4] sm:$0xf]
          %v541 = vld [vmem:[#allocation11 + $0x8] sm:$0xf]
          %v542 = vld [vmem:[#allocation11 + $0xc] sm:$0xf]
          %v547 = vunpack.c.l.b16 %v539
          %v548 = vunpack.c.l.b16 %v540
          %v549 = vunpack.c.l.b16 %v541
          %v550 = vunpack.c.l.b16 %v542
          %v551 = vpack.c.b16 %v548, %v547
          %v552 = vpack.c.b16 %v550, %v549
          %v556 = vsel %vm492, %v475, 0
          %558 = vmatprep.subr.bf16.mxu0 0
          %559 = vmatpush1.bf16.msra.mxu0 0
          %560 = vmatprep.subr.bf16.mxu0 0
          %561 = vmatpush1.bf16.msra.mxu0 0
          %562 = vmatprep.subr.bf16.mxu0 0
          %563 = vmatpush1.bf16.msra.mxu0 0
          %564 = vmatprep.subr.bf16.mxu0 0
          %565 = vmatpush1.bf16.msra.mxu0 0
          %566 = vmatprep.subr.bf16.mxu0 0
          %567 = vmatpush1.bf16.msra.mxu0 0
          %568 = vmatprep.subr.bf16.mxu0 0
          %569 = vmatpush1.bf16.msra.mxu0 0
          %570 = vmatprep.subr.bf16.mxu0 0
          %571 = vmatpush1.bf16.msra.mxu0 %v552
          %572 = vmatprep.subr.bf16.mxu0 0
          %573 = vmatpush1.bf16.msra.mxu0 %v551
          %574 = vmatprep.subr.bf16.mxu0 0
          %575 = vmatpush2.bf16.msra.mxu0 0
          %576 = vmatprep.subr.bf16.mxu0 0
          %577 = vmatpush2.bf16.msra.mxu0 0
          %578 = vmatprep.subr.bf16.mxu0 0
          %579 = vmatpush2.bf16.msra.mxu0 0
          %580 = vmatprep.subr.bf16.mxu0 0
          %581 = vmatpush2.bf16.msra.mxu0 0
          %582 = vmatprep.subr.bf16.mxu0 0
          %583 = vmatpush2.bf16.msra.mxu0 0
          %584 = vmatprep.subr.bf16.mxu0 0
          %585 = vmatpush2.bf16.msra.mxu0 0
          %586 = vmatprep.subr.bf16.mxu0 0
          %587 = vmatpush2.bf16.msra.mxu0 0
          %588 = vmatprep.subr.bf16.mxu0 0
          %589 = vmatpush2.bf16.msra.mxu0 0
          %590 = vmatprep.mubr.bf16.mxu0 0
          %591 = vmatmul.mubr.bf16.gmra.mxu0 %v556
          %v592 = vpop.f32.mrf.mxu0
          %v593 = vadd.f32 0.0, %v592
          %v594 = vpop.f32.mrf.mxu0
          %v595 = vpop.f32.mrf.mxu0
          %v596 = vpop.f32.mrf.mxu0
          %597 = vdwg.mxu0
          %v598 = vpack.c.bf16 %v593, %v593
          %599 = vst.msk [vmem:[#allocation4] sm:$0xf] %vm537, %v598
        $region84: #{tpu_custom_call.1} parent=51 // pred_fallthru
          _
        %v600 = vld [vmem:[%s408] sm:$0xff]
        %v601 = vpack.c.bf16 %v600, %v600
        %v602 = vld [vmem:[#allocation14] sm:$0xf]
        %v603 = vld [vmem:[#allocation14 + $0x4] sm:$0xf]
        %v604 = vld [vmem:[#allocation14 + $0x8] sm:$0xf]
        %v605 = vld [vmem:[#allocation14 + $0xc] sm:$0xf]
        %v610 = vunpack.c.l.b16 %v602
        %v611 = vunpack.c.l.b16 %v603
        %v612 = vunpack.c.l.b16 %v604
        %v613 = vunpack.c.l.b16 %v605
        %v614 = vpack.c.b16 %v611, %v610
        %v615 = vpack.c.b16 %v613, %v612
        %vm618 = vcmask 261120
        %v620 = vsel %vm618, %v601, 0
        %622 = vmatprep.subr.bf16.mxu0 0
        %623 = vmatpush1.bf16.msra.mxu0 0
        %624 = vmatprep.subr.bf16.mxu0 0
        %625 = vmatpush1.bf16.msra.mxu0 0
        %626 = vmatprep.subr.bf16.mxu0 0
        %627 = vmatpush1.bf16.msra.mxu0 0
        %628 = vmatprep.subr.bf16.mxu0 0
        %629 = vmatpush1.bf16.msra.mxu0 0
        %630 = vmatprep.subr.bf16.mxu0 0
        %631 = vmatpush1.bf16.msra.mxu0 0
        %632 = vmatprep.subr.bf16.mxu0 0
        %633 = vmatpush1.bf16.msra.mxu0 0
        %634 = vmatprep.subr.bf16.mxu0 0
        %635 = vmatpush1.bf16.msra.mxu0 %v615
        %636 = vmatprep.subr.bf16.mxu0 0
        %637 = vmatpush1.bf16.msra.mxu0 %v614
        %638 = vmatprep.subr.bf16.mxu0 0
        %639 = vmatpush2.bf16.msra.mxu0 0
        %640 = vmatprep.subr.bf16.mxu0 0
        %641 = vmatpush2.bf16.msra.mxu0 0
        %642 = vmatprep.subr.bf16.mxu0 0
        %643 = vmatpush2.bf16.msra.mxu0 0
        %644 = vmatprep.subr.bf16.mxu0 0
        %645 = vmatpush2.bf16.msra.mxu0 0
        %646 = vmatprep.subr.bf16.mxu0 0
        %647 = vmatpush2.bf16.msra.mxu0 0
        %648 = vmatprep.subr.bf16.mxu0 0
        %649 = vmatpush2.bf16.msra.mxu0 0
        %650 = vmatprep.subr.bf16.mxu0 0
        %651 = vmatpush2.bf16.msra.mxu0 0
        %652 = vmatprep.subr.bf16.mxu0 0
        %653 = vmatpush2.bf16.msra.mxu0 0
        %654 = vmatprep.mubr.bf16.mxu0 0
        %655 = vmatmul.mubr.bf16.gmra.mxu0 %v620
        %v656 = vpop.f32.mrf.mxu0
        %v657 = vadd.f32 0.0, %v656
        %v658 = vpop.f32.mrf.mxu0
        %v659 = vpop.f32.mrf.mxu0
        %v660 = vpop.f32.mrf.mxu0
        %661 = vdwg.mxu0
        %v662 = vpack.c.bf16 %v657, %v657
        %vm663 = vcmask 257024
        %664 = vst.msk [vmem:[#allocation2] sm:$0xf] %vm663, %v662
        %v665 = vld [vmem:[#allocation2] sm:$0xf]
        %v666 = vld [vmem:[#allocation3] sm:$0xf]
        %v667 = vld [vmem:[#allocation4] sm:$0xf]
        %vm668 = vcmask 64512
        %v670 = vsel %vm668, %v665, 0
        %v673 = vsel %vm668, %v666, 0
        %675 = vmatprep.subr.bf16.mxu0 0
        %676 = vmatpush1.bf16.xpose.msra.mxu0 0
        %677 = vmatprep.subr.bf16.mxu0 0
        %678 = vmatpush1.bf16.xpose.msra.mxu0 0
        %679 = vmatprep.subr.bf16.mxu0 0
        %680 = vmatpush1.bf16.xpose.msra.mxu0 0
        %681 = vmatprep.subr.bf16.mxu0 0
        %682 = vmatpush1.bf16.xpose.msra.mxu0 0
        %683 = vmatprep.subr.bf16.mxu0 0
        %684 = vmatpush1.bf16.xpose.msra.mxu0 0
        %685 = vmatprep.subr.bf16.mxu0 0
        %686 = vmatpush1.bf16.xpose.msra.mxu0 0
        %687 = vmatprep.subr.bf16.mxu0 0
        %688 = vmatpush1.bf16.xpose.msra.mxu0 0
        %689 = vmatprep.subr.bf16.mxu0 0
        %690 = vmatpush1.bf16.xpose.msra.mxu0 %v673
        %691 = vmatprep.subr.bf16.mxu0 0
        %692 = vmatpush2.bf16.xpose.msra.mxu0 0
        %693 = vmatprep.subr.bf16.mxu0 0
        %694 = vmatpush2.bf16.xpose.msra.mxu0 0
        %695 = vmatprep.subr.bf16.mxu0 0
        %696 = vmatpush2.bf16.xpose.msra.mxu0 0
        %697 = vmatprep.subr.bf16.mxu0 0
        %698 = vmatpush2.bf16.xpose.msra.mxu0 0
        %699 = vmatprep.subr.bf16.mxu0 0
        %700 = vmatpush2.bf16.xpose.msra.mxu0 0
        %701 = vmatprep.subr.bf16.mxu0 0
        %702 = vmatpush2.bf16.xpose.msra.mxu0 0
        %703 = vmatprep.subr.bf16.mxu0 0
        %704 = vmatpush2.bf16.xpose.msra.mxu0 0
        %705 = vmatprep.subr.bf16.mxu0 0
        %706 = vmatpush2.bf16.xpose.msra.mxu0 0
        %707 = vmatprep.mubr.bf16.mxu0 0
        %708 = vmatmul.mubr.bf16.gmra.mxu0 %v670
        %v709 = vpop.f32.mrf.mxu0
        %v710 = vadd.f32 0.0, %v709
        %v711 = vpop.f32.mrf.mxu0
        %v712 = vpop.f32.mrf.mxu0
        %v713 = vpop.f32.mrf.mxu0
        %714 = vdwg.mxu0
        %v715 = vsel %vm668, %v710, -inf
        %716 = vmax.xlane.f32.xlu0 %v715
        %v717 = vpop.xlane.xlu0 %716
        %v718 = vsub.f32 %v710, %v717
        %v719 = vmul.f32 %v718, 1.442695
        %v720 = vpow.pop %v719
        %v721 = vsel %vm668, %v720, 0.0
        %722 = vadd.xlane.f32.xlu0 %v721
        %v723 = vpop.xlane.xlu0 %722
        %v724 = vpack.c.bf16 %v720, %v720
        %v726 = vsel %vm668, %v724, 0
        %vm728 = vcmask 1043456
        %v730 = vsel %vm728, %v667, 0
        %732 = vmatprep.subr.bf16.mxu0 0
        %733 = vmatpush1.bf16.msra.mxu0 0
        %734 = vmatprep.subr.bf16.mxu0 0
        %735 = vmatpush1.bf16.msra.mxu0 0
        %736 = vmatprep.subr.bf16.mxu0 0
        %737 = vmatpush1.bf16.msra.mxu0 0
        %738 = vmatprep.subr.bf16.mxu0 0
        %739 = vmatpush1.bf16.msra.mxu0 0
        %740 = vmatprep.subr.bf16.mxu0 0
        %741 = vmatpush1.bf16.msra.mxu0 0
        %742 = vmatprep.subr.bf16.mxu0 0
        %743 = vmatpush1.bf16.msra.mxu0 0
        %744 = vmatprep.subr.bf16.mxu0 0
        %745 = vmatpush1.bf16.msra.mxu0 0
        %746 = vmatprep.subr.bf16.mxu0 0
        %747 = vmatpush1.bf16.msra.mxu0 %v730
        %748 = vmatprep.subr.bf16.mxu0 0
        %749 = vmatpush2.bf16.msra.mxu0 0
        %750 = vmatprep.subr.bf16.mxu0 0
        %751 = vmatpush2.bf16.msra.mxu0 0
        %752 = vmatprep.subr.bf16.mxu0 0
        %753 = vmatpush2.bf16.msra.mxu0 0
        %754 = vmatprep.subr.bf16.mxu0 0
        %755 = vmatpush2.bf16.msra.mxu0 0
        %756 = vmatprep.subr.bf16.mxu0 0
        %757 = vmatpush2.bf16.msra.mxu0 0
        %758 = vmatprep.subr.bf16.mxu0 0
        %759 = vmatpush2.bf16.msra.mxu0 0
        %760 = vmatprep.subr.bf16.mxu0 0
        %761 = vmatpush2.bf16.msra.mxu0 0
        %762 = vmatprep.subr.bf16.mxu0 0
        %763 = vmatpush2.bf16.msra.mxu0 0
        %764 = vmatprep.mubr.bf16.mxu0 0
        %765 = vmatmul.mubr.bf16.gmra.mxu0 %v726
        %v766 = vpop.f32.mrf.mxu0
        %v767 = vadd.f32 0.0, %v766
        %v768 = vpop.f32.mrf.mxu0
        %v769 = vpop.f32.mrf.mxu0
        %v770 = vpop.f32.mrf.mxu0
        %771 = vdwg.mxu0
        %v772 = vrcp.pop %v723
        %v773 = vmul.f32 %v767, %v772
        %v774 = vpack.c.bf16 %v773, %v773
        %v775 = vld [vmem:[#allocation16] sm:$0xf]
        %v776 = vld [vmem:[#allocation2] sm:$0xf]
        %v777 = vld [vmem:[#allocation3] sm:$0xf]
        %v778 = vld [vmem:[#allocation4] sm:$0xf]
        %v780 = vunpack.c.l.b16 %v776
        %v781 = vpack.c.b16 %v780, %v780
        %782 = vrot.lane.b32.xlu0 %v781, 120
        %v783 = vpop.permute.xlu0 %782
        %v785 = vunpack.c.l.b16 %v777
        %v786 = vpack.c.b16 %v785, %v785
        %787 = vrot.lane.b32.xlu0 %v786, 120
        %v788 = vpop.permute.xlu0 %787
        %v790 = vsel %vm668, %v783, 0
        %v793 = vsel %vm668, %v788, 0
        %795 = vmatprep.subr.bf16.mxu0 0
        %796 = vmatpush1.bf16.xpose.msra.mxu0 0
        %797 = vmatprep.subr.bf16.mxu0 0
        %798 = vmatpush1.bf16.xpose.msra.mxu0 0
        %799 = vmatprep.subr.bf16.mxu0 0
        %800 = vmatpush1.bf16.xpose.msra.mxu0 0
        %801 = vmatprep.subr.bf16.mxu0 0
        %802 = vmatpush1.bf16.xpose.msra.mxu0 0
        %803 = vmatprep.subr.bf16.mxu0 0
        %804 = vmatpush1.bf16.xpose.msra.mxu0 0
        %805 = vmatprep.subr.bf16.mxu0 0
        %806 = vmatpush1.bf16.xpose.msra.mxu0 0
        %807 = vmatprep.subr.bf16.mxu0 0
        %808 = vmatpush1.bf16.xpose.msra.mxu0 0
        %809 = vmatprep.subr.bf16.mxu0 0
        %810 = vmatpush1.bf16.xpose.msra.mxu0 %v793
        %811 = vmatprep.subr.bf16.mxu0 0
        %812 = vmatpush2.bf16.xpose.msra.mxu0 0
        %813 = vmatprep.subr.bf16.mxu0 0
        %814 = vmatpush2.bf16.xpose.msra.mxu0 0
        %815 = vmatprep.subr.bf16.mxu0 0
        %816 = vmatpush2.bf16.xpose.msra.mxu0 0
        %817 = vmatprep.subr.bf16.mxu0 0
        %818 = vmatpush2.bf16.xpose.msra.mxu0 0
        %819 = vmatprep.subr.bf16.mxu0 0
        %820 = vmatpush2.bf16.xpose.msra.mxu0 0
        %821 = vmatprep.subr.bf16.mxu0 0
        %822 = vmatpush2.bf16.xpose.msra.mxu0 0
        %823 = vmatprep.subr.bf16.mxu0 0
        %824 = vmatpush2.bf16.xpose.msra.mxu0 0
        %825 = vmatprep.subr.bf16.mxu0 0
        %826 = vmatpush2.bf16.xpose.msra.mxu0 0
        %827 = vmatprep.mubr.bf16.mxu0 0
        %828 = vmatmul.mubr.bf16.gmra.mxu0 %v790
        %v829 = vpop.f32.mrf.mxu0
        %v830 = vadd.f32 0.0, %v829
        %v831 = vpop.f32.mrf.mxu0
        %v832 = vpop.f32.mrf.mxu0
        %v833 = vpop.f32.mrf.mxu0
        %834 = vdwg.mxu0
        %v835 = vsel %vm668, %v830, -inf
        %836 = vmax.xlane.f32.xlu0 %v835
        %v837 = vpop.xlane.xlu0 %836
        %v838 = vsub.f32 %v830, %v837
        %v839 = vmul.f32 %v838, 1.442695
        %v840 = vpow.pop %v839
        %v841 = vsel %vm668, %v840, 0.0
        %842 = vadd.xlane.f32.xlu0 %v841
        %v843 = vpop.xlane.xlu0 %842
        %v844 = vpack.c.bf16 %v840, %v840
        %v846 = vunpack.c.l.b16 %v778
        %v847 = vpack.c.b16 %v846, %v846
        %848 = vrot.lane.b32.xlu0 %v847, 120
        %v849 = vpop.permute.xlu0 %848
        %v851 = vsel %vm668, %v844, 0
        %v854 = vsel %vm728, %v849, 0
        %856 = vmatprep.subr.bf16.mxu0 0
        %857 = vmatpush1.bf16.msra.mxu0 0
        %858 = vmatprep.subr.bf16.mxu0 0
        %859 = vmatpush1.bf16.msra.mxu0 0
        %860 = vmatprep.subr.bf16.mxu0 0
        %861 = vmatpush1.bf16.msra.mxu0 0
        %862 = vmatprep.subr.bf16.mxu0 0
        %863 = vmatpush1.bf16.msra.mxu0 0
        %864 = vmatprep.subr.bf16.mxu0 0
        %865 = vmatpush1.bf16.msra.mxu0 0
        %866 = vmatprep.subr.bf16.mxu0 0
        %867 = vmatpush1.bf16.msra.mxu0 0
        %868 = vmatprep.subr.bf16.mxu0 0
        %869 = vmatpush1.bf16.msra.mxu0 0
        %870 = vmatprep.subr.bf16.mxu0 0
        %871 = vmatpush1.bf16.msra.mxu0 %v854
        %872 = vmatprep.subr.bf16.mxu0 0
        %873 = vmatpush2.bf16.msra.mxu0 0
        %874 = vmatprep.subr.bf16.mxu0 0
        %875 = vmatpush2.bf16.msra.mxu0 0
        %876 = vmatprep.subr.bf16.mxu0 0
        %877 = vmatpush2.bf16.msra.mxu0 0
        %878 = vmatprep.subr.bf16.mxu0 0
        %879 = vmatpush2.bf16.msra.mxu0 0
        %880 = vmatprep.subr.bf16.mxu0 0
        %881 = vmatpush2.bf16.msra.mxu0 0
        %882 = vmatprep.subr.bf16.mxu0 0
        %883 = vmatpush2.bf16.msra.mxu0 0
        %884 = vmatprep.subr.bf16.mxu0 0
        %885 = vmatpush2.bf16.msra.mxu0 0
        %886 = vmatprep.subr.bf16.mxu0 0
        %887 = vmatpush2.bf16.msra.mxu0 0
        %888 = vmatprep.mubr.bf16.mxu0 0
        %889 = vmatmul.mubr.bf16.gmra.mxu0 %v851
        %v890 = vpop.f32.mrf.mxu0
        %v891 = vadd.f32 0.0, %v890
        %v892 = vpop.f32.mrf.mxu0
        %v893 = vpop.f32.mrf.mxu0
        %v894 = vpop.f32.mrf.mxu0
        %895 = vdwg.mxu0
        %v896 = vrcp.pop %v843
        %v897 = vmul.f32 %v891, %v896
        %v898 = vpack.c.bf16 %v897, %v897
        %v899 = vld [vmem:[#allocation16 + $0x4] sm:$0xf]
        %v901 = vsel %vm668, %v898, 0
        %v904 = vsel %vm728, %v899, 0
        %906 = vmatprep.subr.bf16.mxu0 0
        %907 = vmatpush1.bf16.msra.mxu0 0
        %908 = vmatprep.subr.bf16.mxu0 0
        %909 = vmatpush1.bf16.msra.mxu0 0
        %910 = vmatprep.subr.bf16.mxu0 0
        %911 = vmatpush1.bf16.msra.mxu0 0
        %912 = vmatprep.subr.bf16.mxu0 0
        %913 = vmatpush1.bf16.msra.mxu0 0
        %914 = vmatprep.subr.bf16.mxu0 0
        %915 = vmatpush1.bf16.msra.mxu0 0
        %916 = vmatprep.subr.bf16.mxu0 0
        %917 = vmatpush1.bf16.msra.mxu0 0
        %918 = vmatprep.subr.bf16.mxu0 0
        %919 = vmatpush1.bf16.msra.mxu0 0
        %920 = vmatprep.subr.bf16.mxu0 0
        %921 = vmatpush1.bf16.msra.mxu0 %v904
        %922 = vmatprep.subr.bf16.mxu0 0
        %923 = vmatpush2.bf16.msra.mxu0 0
        %924 = vmatprep.subr.bf16.mxu0 0
        %925 = vmatpush2.bf16.msra.mxu0 0
        %926 = vmatprep.subr.bf16.mxu0 0
        %927 = vmatpush2.bf16.msra.mxu0 0
        %928 = vmatprep.subr.bf16.mxu0 0
        %929 = vmatpush2.bf16.msra.mxu0 0
        %930 = vmatprep.subr.bf16.mxu0 0
        %931 = vmatpush2.bf16.msra.mxu0 0
        %932 = vmatprep.subr.bf16.mxu0 0
        %933 = vmatpush2.bf16.msra.mxu0 0
        %934 = vmatprep.subr.bf16.mxu0 0
        %935 = vmatpush2.bf16.msra.mxu0 0
        %936 = vmatprep.subr.bf16.mxu0 0
        %937 = vmatpush2.bf16.msra.mxu0 0
        %938 = vmatprep.mubr.bf16.mxu0 0
        %939 = vmatmul.mubr.bf16.gmra.mxu0 %v901
        %v940 = vpop.f32.mrf.mxu0
        %v941 = vadd.f32 0.0, %v940
        %v942 = vpop.f32.mrf.mxu0
        %v943 = vpop.f32.mrf.mxu0
        %v944 = vpop.f32.mrf.mxu0
        %945 = vdwg.mxu0
        %v947 = vsel %vm668, %v774, 0
        %v950 = vsel %vm728, %v775, 0
        %952 = vmatprep.subr.bf16.mxu0 0
        %953 = vmatpush1.bf16.msra.mxu0 0
        %954 = vmatprep.subr.bf16.mxu0 0
        %955 = vmatpush1.bf16.msra.mxu0 0
        %956 = vmatprep.subr.bf16.mxu0 0
        %957 = vmatpush1.bf16.msra.mxu0 0
        %958 = vmatprep.subr.bf16.mxu0 0
        %959 = vmatpush1.bf16.msra.mxu0 0
        %960 = vmatprep.subr.bf16.mxu0 0
        %961 = vmatpush1.bf16.msra.mxu0 0
        %962 = vmatprep.subr.bf16.mxu0 0
        %963 = vmatpush1.bf16.msra.mxu0 0
        %964 = vmatprep.subr.bf16.mxu0 0
        %965 = vmatpush1.bf16.msra.mxu0 0
        %966 = vmatprep.subr.bf16.mxu0 0
        %967 = vmatpush1.bf16.msra.mxu0 %v950
        %968 = vmatprep.subr.bf16.mxu0 0
        %969 = vmatpush2.bf16.msra.mxu0 0
        %970 = vmatprep.subr.bf16.mxu0 0
        %971 = vmatpush2.bf16.msra.mxu0 0
        %972 = vmatprep.subr.bf16.mxu0 0
        %973 = vmatpush2.bf16.msra.mxu0 0
        %974 = vmatprep.subr.bf16.mxu0 0
        %975 = vmatpush2.bf16.msra.mxu0 0
        %976 = vmatprep.subr.bf16.mxu0 0
        %977 = vmatpush2.bf16.msra.mxu0 0
        %978 = vmatprep.subr.bf16.mxu0 0
        %979 = vmatpush2.bf16.msra.mxu0 0
        %980 = vmatprep.subr.bf16.mxu0 0
        %981 = vmatpush2.bf16.msra.mxu0 0
        %982 = vmatprep.subr.bf16.mxu0 0
        %983 = vmatpush2.bf16.msra.mxu0 0
        %984 = vmatprep.mubr.bf16.mxu0 0
        %985 = vmatmul.mubr.bf16.gmra.mxu0 %v947
        %v986 = vpop.f32.mrf.mxu0
        %v987 = vadd.f32 %v941, %v986
        %v988 = vpop.f32.mrf.mxu0
        %v989 = vpop.f32.mrf.mxu0
        %v990 = vpop.f32.mrf.mxu0
        %991 = vdwg.mxu0
        %v992 = vld [vmem:[#allocation2] sm:$0xf]
        %v993 = vld [vmem:[#allocation3] sm:$0xf]
        %v994 = vld [vmem:[#allocation4] sm:$0xf]
        %v996 = vunpack.c.l.b16 %v992
        %v997 = vpack.c.b16 %v996, %v996
        %998 = vrot.lane.b32.xlu0 %v997, 112
        %v999 = vpop.permute.xlu0 %998
        %v1001 = vunpack.c.l.b16 %v993
        %v1002 = vpack.c.b16 %v1001, %v1001
        %1003 = vrot.lane.b32.xlu0 %v1002, 112
        %v1004 = vpop.permute.xlu0 %1003
        %v1006 = vsel %vm668, %v999, 0
        %v1009 = vsel %vm668, %v1004, 0
        %1011 = vmatprep.subr.bf16.mxu0 0
        %1012 = vmatpush1.bf16.xpose.msra.mxu0 0
        %1013 = vmatprep.subr.bf16.mxu0 0
        %1014 = vmatpush1.bf16.xpose.msra.mxu0 0
        %1015 = vmatprep.subr.bf16.mxu0 0
        %1016 = vmatpush1.bf16.xpose.msra.mxu0 0
        %1017 = vmatprep.subr.bf16.mxu0 0
        %1018 = vmatpush1.bf16.xpose.msra.mxu0 0
        %1019 = vmatprep.subr.bf16.mxu0 0
        %1020 = vmatpush1.bf16.xpose.msra.mxu0 0
        %1021 = vmatprep.subr.bf16.mxu0 0
        %1022 = vmatpush1.bf16.xpose.msra.mxu0 0
        %1023 = vmatprep.subr.bf16.mxu0 0
        %1024 = vmatpush1.bf16.xpose.msra.mxu0 0
        %1025 = vmatprep.subr.bf16.mxu0 0
        %1026 = vmatpush1.bf16.xpose.msra.mxu0 %v1009
        %1027 = vmatprep.subr.bf16.mxu0 0
        %1028 = vmatpush2.bf16.xpose.msra.mxu0 0
        %1029 = vmatprep.subr.bf16.mxu0 0
        %1030 = vmatpush2.bf16.xpose.msra.mxu0 0
        %1031 = vmatprep.subr.bf16.mxu0 0
        %1032 = vmatpush2.bf16.xpose.msra.mxu0 0
        %1033 = vmatprep.subr.bf16.mxu0 0
        %1034 = vmatpush2.bf16.xpose.msra.mxu0 0
        %1035 = vmatprep.subr.bf16.mxu0 0
        %1036 = vmatpush2.bf16.xpose.msra.mxu0 0
        %1037 = vmatprep.subr.bf16.mxu0 0
        %1038 = vmatpush2.bf16.xpose.msra.mxu0 0
        %1039 = vmatprep.subr.bf16.mxu0 0
        %1040 = vmatpush2.bf16.xpose.msra.mxu0 0
        %1041 = vmatprep.subr.bf16.mxu0 0
        %1042 = vmatpush2.bf16.xpose.msra.mxu0 0
        %1043 = vmatprep.mubr.bf16.mxu0 0
        %1044 = vmatmul.mubr.bf16.gmra.mxu0 %v1006
        %v1045 = vpop.f32.mrf.mxu0
        %v1046 = vadd.f32 0.0, %v1045
        %v1047 = vpop.f32.mrf.mxu0
        %v1048 = vpop.f32.mrf.mxu0
        %v1049 = vpop.f32.mrf.mxu0
        %1050 = vdwg.mxu0
        %v1051 = vsel %vm668, %v1046, -inf
        %1052 = vmax.xlane.f32.xlu0 %v1051
        %v1053 = vpop.xlane.xlu0 %1052
        %v1054 = vsub.f32 %v1046, %v1053
        %v1055 = vmul.f32 %v1054, 1.442695
        %v1056 = vpow.pop %v1055
        %v1057 = vsel %vm668, %v1056, 0.0
        %1058 = vadd.xlane.f32.xlu0 %v1057
        %v1059 = vpop.xlane.xlu0 %1058
        %v1060 = vpack.c.bf16 %v1056, %v1056
        %v1062 = vunpack.c.l.b16 %v994
        %v1063 = vpack.c.b16 %v1062, %v1062
        %1064 = vrot.lane.b32.xlu0 %v1063, 112
        %v1065 = vpop.permute.xlu0 %1064
        %v1067 = vsel %vm668, %v1060, 0
        %v1070 = vsel %vm728, %v1065, 0
        %1072 = vmatprep.subr.bf16.mxu0 0
        %1073 = vmatpush1.bf16.msra.mxu0 0
        %1074 = vmatprep.subr.bf16.mxu0 0
        %1075 = vmatpush1.bf16.msra.mxu0 0
        %1076 = vmatprep.subr.bf16.mxu0 0
        %1077 = vmatpush1.bf16.msra.mxu0 0
        %1078 = vmatprep.subr.bf16.mxu0 0
        %1079 = vmatpush1.bf16.msra.mxu0 0
        %1080 = vmatprep.subr.bf16.mxu0 0
        %1081 = vmatpush1.bf16.msra.mxu0 0
        %1082 = vmatprep.subr.bf16.mxu0 0
        %1083 = vmatpush1.bf16.msra.mxu0 0
        %1084 = vmatprep.subr.bf16.mxu0 0
        %1085 = vmatpush1.bf16.msra.mxu0 0
        %1086 = vmatprep.subr.bf16.mxu0 0
        %1087 = vmatpush1.bf16.msra.mxu0 %v1070
        %1088 = vmatprep.subr.bf16.mxu0 0
        %1089 = vmatpush2.bf16.msra.mxu0 0
        %1090 = vmatprep.subr.bf16.mxu0 0
        %1091 = vmatpush2.bf16.msra.mxu0 0
        %1092 = vmatprep.subr.bf16.mxu0 0
        %1093 = vmatpush2.bf16.msra.mxu0 0
        %1094 = vmatprep.subr.bf16.mxu0 0
        %1095 = vmatpush2.bf16.msra.mxu0 0
        %1096 = vmatprep.subr.bf16.mxu0 0
        %1097 = vmatpush2.bf16.msra.mxu0 0
        %1098 = vmatprep.subr.bf16.mxu0 0
        %1099 = vmatpush2.bf16.msra.mxu0 0
        %1100 = vmatprep.subr.bf16.mxu0 0
        %1101 = vmatpush2.bf16.msra.mxu0 0
        %1102 = vmatprep.subr.bf16.mxu0 0
        %1103 = vmatpush2.bf16.msra.mxu0 0
        %1104 = vmatprep.mubr.bf16.mxu0 0
        %1105 = vmatmul.mubr.bf16.gmra.mxu0 %v1067
        %v1106 = vpop.f32.mrf.mxu0
        %v1107 = vadd.f32 0.0, %v1106
        %v1108 = vpop.f32.mrf.mxu0
        %v1109 = vpop.f32.mrf.mxu0
        %v1110 = vpop.f32.mrf.mxu0
        %1111 = vdwg.mxu0
        %v1112 = vrcp.pop %v1059
        %v1113 = vmul.f32 %v1107, %v1112
        %v1114 = vpack.c.bf16 %v1113, %v1113
        %v1115 = vld [vmem:[#allocation16 + $0x8] sm:$0xf]
        %v1117 = vsel %vm668, %v1114, 0
        %v1120 = vsel %vm728, %v1115, 0
        %1122 = vmatprep.subr.bf16.mxu0 0
        %1123 = vmatpush1.bf16.msra.mxu0 0
        %1124 = vmatprep.subr.bf16.mxu0 0
        %1125 = vmatpush1.bf16.msra.mxu0 0
        %1126 = vmatprep.subr.bf16.mxu0 0
        %1127 = vmatpush1.bf16.msra.mxu0 0
        %1128 = vmatprep.subr.bf16.mxu0 0
        %1129 = vmatpush1.bf16.msra.mxu0 0
        %1130 = vmatprep.subr.bf16.mxu0 0
        %1131 = vmatpush1.bf16.msra.mxu0 0
        %1132 = vmatprep.subr.bf16.mxu0 0
        %1133 = vmatpush1.bf16.msra.mxu0 0
        %1134 = vmatprep.subr.bf16.mxu0 0
        %1135 = vmatpush1.bf16.msra.mxu0 0
        %1136 = vmatprep.subr.bf16.mxu0 0
        %1137 = vmatpush1.bf16.msra.mxu0 %v1120
        %1138 = vmatprep.subr.bf16.mxu0 0
        %1139 = vmatpush2.bf16.msra.mxu0 0
        %1140 = vmatprep.subr.bf16.mxu0 0
        %1141 = vmatpush2.bf16.msra.mxu0 0
        %1142 = vmatprep.subr.bf16.mxu0 0
        %1143 = vmatpush2.bf16.msra.mxu0 0
        %1144 = vmatprep.subr.bf16.mxu0 0
        %1145 = vmatpush2.bf16.msra.mxu0 0
        %1146 = vmatprep.subr.bf16.mxu0 0
        %1147 = vmatpush2.bf16.msra.mxu0 0
        %1148 = vmatprep.subr.bf16.mxu0 0
        %1149 = vmatpush2.bf16.msra.mxu0 0
        %1150 = vmatprep.subr.bf16.mxu0 0
        %1151 = vmatpush2.bf16.msra.mxu0 0
        %1152 = vmatprep.subr.bf16.mxu0 0
        %1153 = vmatpush2.bf16.msra.mxu0 0
        %1154 = vmatprep.mubr.bf16.mxu0 0
        %1155 = vmatmul.mubr.bf16.gmra.mxu0 %v1117
        %v1156 = vpop.f32.mrf.mxu0
        %v1157 = vadd.f32 0.0, %v1156
        %v1158 = vpop.f32.mrf.mxu0
        %v1159 = vpop.f32.mrf.mxu0
        %v1160 = vpop.f32.mrf.mxu0
        %1161 = vdwg.mxu0
        %v1162 = vadd.f32 %v987, %v1157
        %v1163 = vld [vmem:[#allocation2] sm:$0xf]
        %v1164 = vld [vmem:[#allocation3] sm:$0xf]
        %v1165 = vld [vmem:[#allocation4] sm:$0xf]
        %v1167 = vunpack.c.l.b16 %v1163
        %v1168 = vpack.c.b16 %v1167, %v1167
        %1169 = vrot.lane.b32.xlu0 %v1168, 104
        %v1170 = vpop.permute.xlu0 %1169
        %v1172 = vunpack.c.l.b16 %v1164
        %v1173 = vpack.c.b16 %v1172, %v1172
        %1174 = vrot.lane.b32.xlu0 %v1173, 104
        %v1175 = vpop.permute.xlu0 %1174
        %v1177 = vsel %vm668, %v1170, 0
        %v1180 = vsel %vm668, %v1175, 0
        %1182 = vmatprep.subr.bf16.mxu0 0
        %1183 = vmatpush1.bf16.xpose.msra.mxu0 0
        %1184 = vmatprep.subr.bf16.mxu0 0
        %1185 = vmatpush1.bf16.xpose.msra.mxu0 0
        %1186 = vmatprep.subr.bf16.mxu0 0
        %1187 = vmatpush1.bf16.xpose.msra.mxu0 0
        %1188 = vmatprep.subr.bf16.mxu0 0
        %1189 = vmatpush1.bf16.xpose.msra.mxu0 0
        %1190 = vmatprep.subr.bf16.mxu0 0
        %1191 = vmatpush1.bf16.xpose.msra.mxu0 0
        %1192 = vmatprep.subr.bf16.mxu0 0
        %1193 = vmatpush1.bf16.xpose.msra.mxu0 0
        %1194 = vmatprep.subr.bf16.mxu0 0
        %1195 = vmatpush1.bf16.xpose.msra.mxu0 0
        %1196 = vmatprep.subr.bf16.mxu0 0
        %1197 = vmatpush1.bf16.xpose.msra.mxu0 %v1180
        %1198 = vmatprep.subr.bf16.mxu0 0
        %1199 = vmatpush2.bf16.xpose.msra.mxu0 0
        %1200 = vmatprep.subr.bf16.mxu0 0
        %1201 = vmatpush2.bf16.xpose.msra.mxu0 0
        %1202 = vmatprep.subr.bf16.mxu0 0
        %1203 = vmatpush2.bf16.xpose.msra.mxu0 0
        %1204 = vmatprep.subr.bf16.mxu0 0
        %1205 = vmatpush2.bf16.xpose.msra.mxu0 0
        %1206 = vmatprep.subr.bf16.mxu0 0
        %1207 = vmatpush2.bf16.xpose.msra.mxu0 0
        %1208 = vmatprep.subr.bf16.mxu0 0
        %1209 = vmatpush2.bf16.xpose.msra.mxu0 0
        %1210 = vmatprep.subr.bf16.mxu0 0
        %1211 = vmatpush2.bf16.xpose.msra.mxu0 0
        %1212 = vmatprep.subr.bf16.mxu0 0
        %1213 = vmatpush2.bf16.xpose.msra.mxu0 0
        %1214 = vmatprep.mubr.bf16.mxu0 0
        %1215 = vmatmul.mubr.bf16.gmra.mxu0 %v1177
        %v1216 = vpop.f32.mrf.mxu0
        %v1217 = vadd.f32 0.0, %v1216
        %v1218 = vpop.f32.mrf.mxu0
        %v1219 = vpop.f32.mrf.mxu0
        %v1220 = vpop.f32.mrf.mxu0
        %1221 = vdwg.mxu0
        %v1222 = vsel %vm668, %v1217, -inf
        %1223 = vmax.xlane.f32.xlu0 %v1222
        %v1224 = vpop.xlane.xlu0 %1223
        %v1225 = vsub.f32 %v1217, %v1224
        %v1226 = vmul.f32 %v1225, 1.442695
        %v1227 = vpow.pop %v1226
        %v1228 = vsel %vm668, %v1227, 0.0
        %1229 = vadd.xlane.f32.xlu0 %v1228
        %v1230 = vpop.xlane.xlu0 %1229
        %v1231 = vpack.c.bf16 %v1227, %v1227
        %v1233 = vunpack.c.l.b16 %v1165
        %v1234 = vpack.c.b16 %v1233, %v1233
        %1235 = vrot.lane.b32.xlu0 %v1234, 104
        %v1236 = vpop.permute.xlu0 %1235
        %v1238 = vsel %vm668, %v1231, 0
        %v1241 = vsel %vm728, %v1236, 0
        %1243 = vmatprep.subr.bf16.mxu0 0
        %1244 = vmatpush1.bf16.msra.mxu0 0
        %1245 = vmatprep.subr.bf16.mxu0 0
        %1246 = vmatpush1.bf16.msra.mxu0 0
        %1247 = vmatprep.subr.bf16.mxu0 0
        %1248 = vmatpush1.bf16.msra.mxu0 0
        %1249 = vmatprep.subr.bf16.mxu0 0
        %1250 = vmatpush1.bf16.msra.mxu0 0
        %1251 = vmatprep.subr.bf16.mxu0 0
        %1252 = vmatpush1.bf16.msra.mxu0 0
        %1253 = vmatprep.subr.bf16.mxu0 0
        %1254 = vmatpush1.bf16.msra.mxu0 0
        %1255 = vmatprep.subr.bf16.mxu0 0
        %1256 = vmatpush1.bf16.msra.mxu0 0
        %1257 = vmatprep.subr.bf16.mxu0 0
        %1258 = vmatpush1.bf16.msra.mxu0 %v1241
        %1259 = vmatprep.subr.bf16.mxu0 0
        %1260 = vmatpush2.bf16.msra.mxu0 0
        %1261 = vmatprep.subr.bf16.mxu0 0
        %1262 = vmatpush2.bf16.msra.mxu0 0
        %1263 = vmatprep.subr.bf16.mxu0 0
        %1264 = vmatpush2.bf16.msra.mxu0 0
        %1265 = vmatprep.subr.bf16.mxu0 0
        %1266 = vmatpush2.bf16.msra.mxu0 0
        %1267 = vmatprep.subr.bf16.mxu0 0
        %1268 = vmatpush2.bf16.msra.mxu0 0
        %1269 = vmatprep.subr.bf16.mxu0 0
        %1270 = vmatpush2.bf16.msra.mxu0 0
        %1271 = vmatprep.subr.bf16.mxu0 0
        %1272 = vmatpush2.bf16.msra.mxu0 0
        %1273 = vmatprep.subr.bf16.mxu0 0
        %1274 = vmatpush2.bf16.msra.mxu0 0
        %1275 = vmatprep.mubr.bf16.mxu0 0
        %1276 = vmatmul.mubr.bf16.gmra.mxu0 %v1238
        %v1277 = vpop.f32.mrf.mxu0
        %v1278 = vadd.f32 0.0, %v1277
        %v1279 = vpop.f32.mrf.mxu0
        %v1280 = vpop.f32.mrf.mxu0
        %v1281 = vpop.f32.mrf.mxu0
        %1282 = vdwg.mxu0
        %v1283 = vrcp.pop %v1230
        %v1284 = vmul.f32 %v1278, %v1283
        %v1285 = vpack.c.bf16 %v1284, %v1284
        %v1286 = vld [vmem:[#allocation16 + $0xc] sm:$0xf]
        %v1288 = vsel %vm668, %v1285, 0
        %v1291 = vsel %vm728, %v1286, 0
        %1293 = vmatprep.subr.bf16.mxu0 0
        %1294 = vmatpush1.bf16.msra.mxu0 0
        %1295 = vmatprep.subr.bf16.mxu0 0
        %1296 = vmatpush1.bf16.msra.mxu0 0
        %1297 = vmatprep.subr.bf16.mxu0 0
        %1298 = vmatpush1.bf16.msra.mxu0 0
        %1299 = vmatprep.subr.bf16.mxu0 0
        %1300 = vmatpush1.bf16.msra.mxu0 0
        %1301 = vmatprep.subr.bf16.mxu0 0
        %1302 = vmatpush1.bf16.msra.mxu0 0
        %1303 = vmatprep.subr.bf16.mxu0 0
        %1304 = vmatpush1.bf16.msra.mxu0 0
        %1305 = vmatprep.subr.bf16.mxu0 0
        %1306 = vmatpush1.bf16.msra.mxu0 0
        %1307 = vmatprep.subr.bf16.mxu0 0
        %1308 = vmatpush1.bf16.msra.mxu0 %v1291
        %1309 = vmatprep.subr.bf16.mxu0 0
        %1310 = vmatpush2.bf16.msra.mxu0 0
        %1311 = vmatprep.subr.bf16.mxu0 0
        %1312 = vmatpush2.bf16.msra.mxu0 0
        %1313 = vmatprep.subr.bf16.mxu0 0
        %1314 = vmatpush2.bf16.msra.mxu0 0
        %1315 = vmatprep.subr.bf16.mxu0 0
        %1316 = vmatpush2.bf16.msra.mxu0 0
        %1317 = vmatprep.subr.bf16.mxu0 0
        %1318 = vmatpush2.bf16.msra.mxu0 0
        %1319 = vmatprep.subr.bf16.mxu0 0
        %1320 = vmatpush2.bf16.msra.mxu0 0
        %1321 = vmatprep.subr.bf16.mxu0 0
        %1322 = vmatpush2.bf16.msra.mxu0 0
        %1323 = vmatprep.subr.bf16.mxu0 0
        %1324 = vmatpush2.bf16.msra.mxu0 0
        %1325 = vmatprep.mubr.bf16.mxu0 0
        %1326 = vmatmul.mubr.bf16.gmra.mxu0 %v1288
        %v1327 = vpop.f32.mrf.mxu0
        %v1328 = vadd.f32 0.0, %v1327
        %v1329 = vpop.f32.mrf.mxu0
        %v1330 = vpop.f32.mrf.mxu0
        %v1331 = vpop.f32.mrf.mxu0
        %1332 = vdwg.mxu0
        %v1333 = vadd.f32 %v1162, %v1328
        %v1334 = vld [vmem:[%s7] sm:$0x1]
        %v1336 = vlaneseq
        %v1337 = vshrl.u32 %v1336, 7
        %v1338 = vsub.s32 0, %v1337
        %v1339 = vrot.slane %v1334, %v1338
        %v1341 = vadd.f32 %v1333, %v1339
        %1342 = vst.msk [vmem:[%s466] sm:$0xff] %vm618, %v1341
        %s1343 = sand.u32 %s237, 1
        %s1344 = scalar_lea.sflag [#allocation7], %s1343
        %s1345 = sand.u32 %s237, 1
        %s1346 = smul.addr %s1345, 8
        %s1347 = scalar_lea.vmem [#allocation17], %s1346
        // Predicated region
        $region85: #{tpu_custom_call.1} parent=51 // pred_check
          %p1348 = pneg %p247
        $region86: #{tpu_custom_call.1} parent=51 // pred_check_branch
          %1350 = sbr.rel (%p1348) target = $region88
        $region87: #{tpu_custom_call.1} parent=51 // pred_region
          %s1352 = ssub.s32 128, 128
          %1353 = vsyncadd %s1344, %s1352
          %s1354 = sadd.s32 %s35, %s34
          %s1355 = smul.addr %s1354, 128
          %s1356 = scalar_lea.hbm %s8, %s1355
          %s1358 = sshll.u32 %s1347, 4
          %s1359 = int_to_ptr.vmem [resolvable:$true] %s1358
          %1361 = dma.vmem_to_hbm [thread:$0]  %s1359, 128, %s1356, %s1344
        $region88: #{tpu_custom_call.1} parent=51 // pred_fallthru
          _
      $region52: #{tpu_custom_call.1} parent=5 // pred_fallthru
        _
      %p1362 = scmp.le.s32.totalorder 2, %s25
      // Predicated region
      $region89: #{tpu_custom_call.1} parent=5 // pred_check
        %p1363 = pneg %p1362
      $region90: #{tpu_custom_call.1} parent=5 // pred_check_branch
        %1365 = sbr.rel (%p1363) target = $region92
      $region91: #{tpu_custom_call.1} parent=5 // pred_region
        %s1366 = ssub.s32 %s25, 2
        // Predicated region
        $region93: #{tpu_custom_call.1} parent=91 // pred_check
          %p1367 = pneg %p253
        $region94: #{tpu_custom_call.1} parent=91 // pred_check_branch
          %1369 = sbr.rel (%p1367) target = $region96
        $region95: #{tpu_custom_call.1} parent=91 // pred_region
          %s1370 = sand.u32 %s238, 1
          %s1371 = scalar_lea.sflag [#allocation7], %s1370
          %s1372 = sand.u32 %s238, 1
          %s1373 = smul.addr %s1372, 8
          %s1374 = scalar_lea.vmem [#allocation17], %s1373
          %1375 = dma.done %s1371, 128
        $region96: #{tpu_custom_call.1} parent=91 // pred_fallthru
          _
      $region92: #{tpu_custom_call.1} parent=5 // pred_fallthru
        _
    $region6: #{tpu_custom_call.1} parent=1 // loop_footer
      %s29 = sadd.s32 1, %s25
    $region7: #{tpu_custom_call.1} parent=1 // loop_footer_branch
      %24 = sbr.rel target = $region3
    $region8: #{tpu_custom_call.1} parent=1 // loop_exit
      _
    %1376 = vsyncpa [#allocation6], 1
    %s1377 = scalar_lea.sflag [#allocation6], 1
    %1378 = vsyncpa %s1377, 1
    %1379 = vsyncpa [#allocation9], 1
    %s1380 = scalar_lea.sflag [#allocation9], 1
    %1381 = vsyncpa %s1380, 1
    %1382 = vsyncpa [#allocation12], 1
    %1383 = vsyncpa [#allocation15], 1
    %1384 = vsyncpa [#allocation7], 1
    %s1385 = scalar_lea.sflag [#allocation7], 1
    %1386 = vsyncpa %s1385, 1

// kernel: tpu_custom_call.1
$region0: #{tpu_custom_call.1}
  #allocation0 [shape = 'u32[]', space=smem, size = 0x4, offset = 0x4, fixed_abs, tag = 'smem constant byte address 0x4 - core index']
  #allocation1 [shape = 'u32[144,128]{1,0:T(1,128)}', space=vmem, size = 0x12000, scoped, tag = 'internal scratch']
  #allocation2 [shape = 'bf16[8,32]{1,0:T(8,128)(2,1)}', space=vmem, size = 0x800, scoped, tag = 'scratch operand']
  #allocation3 [shape = 'bf16[8,32]{1,0:T(8,128)(2,1)}', space=vmem, size = 0x800, scoped, tag = 'scratch operand']
  #allocation4 [shape = 'bf16[8,32]{1,0:T(8,128)(2,1)}', space=vmem, size = 0x800, scoped, tag = 'scratch operand']
  %s0 = inlined_call_operand.hbm [shape: f32[2,8,32], index: 0, kind: input, shape index: {}]
  %s1 = inlined_call_operand.hbm [shape: f32[2,8,32], index: 1, kind: input, shape index: {}]
  %s2 = inlined_call_operand.hbm [shape: f32[2,8,32], index: 2, kind: input, shape index: {}]
  %s3 = inlined_call_operand.hbm [shape: bf16[32,32], index: 3, kind: input, shape index: {}]
  %s4 = inlined_call_operand.hbm [shape: bf16[32,32], index: 4, kind: input, shape index: {}]
  %s5 = inlined_call_operand.hbm [shape: bf16[32,32], index: 5, kind: input, shape index: {}]
  %s6 = inlined_call_operand.hbm [shape: bf16[32,32], index: 6, kind: input, shape index: {}]
  %s7 = inlined_call_operand.vmem [shape: f32[1,32], index: 7, kind: input, shape index: {}]
  %s8 = inlined_call_operand.hbm [shape: f32[2,8,32], index: 8, kind: output, shape index: {}]
  %s9 = sld [smem:[#allocation0]]
  $region97: #{tpu_custom_call.1} parent=0
    _
  %s11 = ssub.s32 1, %s9
  %s12 = scalar_select 0, %s11, %s9
  $region1: #{tpu_custom_call.1} parent=0
    #allocation5 [shape = 'u8[8192]{0}', space=vmem, size = 0x2000, scoped, tag = 'input window, operand 0']
    #allocation6 [shape = 's32[2]{0}', space=sflag, size = 0x8, scoped, tag = 'scoped memory for tpu_custom_call.1']
    #allocation7 [shape = 's32[2]{0}', space=sflag, size = 0x8, scoped, tag = 'scoped memory for tpu_custom_call.1']
    #allocation8 [shape = 'u8[8192]{0}', space=vmem, size = 0x2000, scoped, tag = 'input window, operand 1']
    #allocation9 [shape = 's32[2]{0}', space=sflag, size = 0x8, scoped, tag = 'scoped memory for tpu_custom_call.1']
    #allocation10 [shape = 'u8[8192]{0}', space=vmem, size = 0x2000, scoped, tag = 'input window, operand 2']
    #allocation11 [shape = 'u8[8192]{0}', space=vmem, size = 0x2000, scoped, tag = 'input window, operand 3, single buffered']
    #allocation12 [shape = 's32[1]{0}', space=sflag, size = 0x4, scoped, tag = 'scoped memory for tpu_custom_call.1']
    #allocation13 [shape = 'u8[8192]{0}', space=vmem, size = 0x2000, scoped, tag = 'input window, operand 4, single buffered']
    #allocation14 [shape = 'u8[8192]{0}', space=vmem, size = 0x2000, scoped, tag = 'input window, operand 5, single buffered']
    #allocation15 [shape = 's32[1]{0}', space=sflag, size = 0x4, scoped, tag = 'scoped memory for tpu_custom_call.1']
    #allocation16 [shape = 'u8[8192]{0}', space=vmem, size = 0x2000, scoped, tag = 'input window, operand 6, single buffered']
    #allocation17 [shape = 'u8[8192]{0}', space=vmem, size = 0x2000, scoped, tag = 'output window, operand 0']
    %13 = vsyncpa [#allocation6], 0
    %s14 = scalar_lea.sflag [#allocation6], 1
    %15 = vsyncpa %s14, 0
    %16 = vsyncpa [#allocation9], 0
    %s17 = scalar_lea.sflag [#allocation9], 1
    %18 = vsyncpa %s17, 0
    %19 = vsyncpa [#allocation12], 0
    %20 = vsyncpa [#allocation15], 0
    %21 = vsyncpa [#allocation7], 0
    %s22 = scalar_lea.sflag [#allocation7], 1
    %23 = vsyncpa %s22, 0
    loop: start=0, step=1, limit=4
    $region2: #{tpu_custom_call.1} parent=1 // loop_pre_header
      _
    $region3: #{tpu_custom_call.1} parent=1 // loop_header
      %s25 = sphi 0, %s29
      %p26 = scmp.ge.s32.totalorder %s25, 4
      %s32 = sphi 0, %s44
      %s33 = sphi 0, %s40
      %s34 = sphi 0, %s32
      %s35 = sphi 0, %s33
      %s36 = sphi 0, %s34
      %s37 = sphi 0, %s35
      %s47 = sphi 0, %s49
      %s50 = sphi 0, %s47
      %s51 = sphi 0, %s50
      %s67 = sphi 0, %s51
      %s73 = sphi 0, %s75
      %s76 = sphi 0, %s73
      %s77 = sphi 0, %s76
      %s93 = sphi 0, %s77
      %s101 = sphi 0, %s103
      %s104 = sphi 0, %s101
      %s105 = sphi 0, %s104
      %s121 = sphi 0, %s105
      %s125 = sphi 0, %s125
      %s127 = sphi 0, %s125
      %s128 = sphi 0, %s127
      %s142 = sphi 0, %s128
      %s146 = sphi 0, %s146
      %s148 = sphi 0, %s146
      %s149 = sphi 0, %s148
      %s163 = sphi 0, %s149
      %s167 = sphi 0, %s167
      %s169 = sphi 0, %s167
      %s170 = sphi 0, %s169
      %s184 = sphi 0, %s170
      %s188 = sphi 0, %s188
      %s190 = sphi 0, %s188
      %s191 = sphi 0, %s190
      %s205 = sphi 0, %s191
      %s209 = sphi 0, %s209
      %s211 = sphi 0, %s209
      %s212 = sphi 0, %s211
      %s226 = sphi 0, %s212
      %s234 = sphi 0, %s236
      %s237 = sphi 0, %s234
      %s238 = sphi 0, %s237
      %s254 = sphi 0, %s238
    $region4: #{tpu_custom_call.1} parent=1 // loop_header_branch
      %28 = sbr.rel (%p26) target = $region8
    $region5: #{tpu_custom_call.1} parent=1 // loop_body
      %s30 = ssub.s32 %s25, 1
      %s31 = ssub.s32 %s25, 2
      %s38 = sadd.s32 1, %s33
      %p39 = scmp.ge.s32.totalorder %s38, 1
      %s40 = scalar_select %p39, 0, %s38
      %s41 = sadd.s32 1, %s32
      %s42 = scalar_select %p39, %s41, %s32
      %p43 = scmp.ge.s32.totalorder %s42, 2
      %s44 = scalar_select %p43, 0, %s42
      %s45 = ssub.s32 %s32, %s44
      %p46 = scmp.eq.s32.totalorder %s45, 0
      %s48 = sadd.s32 %s47, 1
      %s49 = scalar_select %p46, %s47, %s48
      %p52 = pneg %p46
      %p53 = scmp.eq.s32.totalorder %s25, 1
      %p54 = por %p52, %p53
      %p55 = scmp.ne.s32.totalorder %s47, %s50
      %p56 = scmp.eq.s32.totalorder %s25, 0
      %p57 = por %p55, %p56
      %p58 = scmp.ne.s32.totalorder %s47, %s50
      %p59 = scmp.eq.s32.totalorder %s30, 1
      %p60 = por %p58, %p59
      %p61 = scmp.ne.s32.totalorder %s50, %s51
      %p62 = scmp.eq.s32.totalorder %s30, 0
      %p63 = por %p61, %p62
      %p64 = scmp.ne.s32.totalorder %s50, %s51
      %p65 = scmp.eq.s32.totalorder %s31, 1
      %p66 = por %p64, %p65
      %p68 = scmp.ne.s32.totalorder %s51, %s67
      %p69 = scmp.eq.s32.totalorder %s31, 0
      %p70 = por %p68, %p69
      %s71 = ssub.s32 %s32, %s44
      %p72 = scmp.eq.s32.totalorder %s71, 0
      %s74 = sadd.s32 %s73, 1
      %s75 = scalar_select %p72, %s73, %s74
      %p78 = pneg %p72
      %p79 = scmp.eq.s32.totalorder %s25, 1
      %p80 = por %p78, %p79
      %p81 = scmp.ne.s32.totalorder %s73, %s76
      %p82 = scmp.eq.s32.totalorder %s25, 0
      %p83 = por %p81, %p82
      %p84 = scmp.ne.s32.totalorder %s73, %s76
      %p85 = scmp.eq.s32.totalorder %s30, 1
      %p86 = por %p84, %p85
      %p87 = scmp.ne.s32.totalorder %s76, %s77
      %p88 = scmp.eq.s32.totalorder %s30, 0
      %p89 = por %p87, %p88
      %p90 = scmp.ne.s32.totalorder %s76, %s77
      %p91 = scmp.eq.s32.totalorder %s31, 1
      %p92 = por %p90, %p91
      %p94 = scmp.ne.s32.totalorder %s77, %s93
      %p95 = scmp.eq.s32.totalorder %s31, 0
      %p96 = por %p94, %p95
      %s97 = ssub.s32 %s32, %s44
      %s98 = ssub.s32 %s33, %s40
      %s99 = sor.u32 %s97, %s98
      %p100 = scmp.eq.s32.totalorder %s99, 0
      %s102 = sadd.s32 %s101, 1
      %s103 = scalar_select %p100, %s101, %s102
      %p106 = pneg %p100
      %p107 = scmp.eq.s32.totalorder %s25, 1
      %p108 = por %p106, %p107
      %p109 = scmp.ne.s32.totalorder %s101, %s104
      %p110 = scmp.eq.s32.totalorder %s25, 0
      %p111 = por %p109, %p110
      %p112 = scmp.ne.s32.totalorder %s101, %s104
      %p113 = scmp.eq.s32.totalorder %s30, 1
      %p114 = por %p112, %p113
      %p115 = scmp.ne.s32.totalorder %s104, %s105
      %p116 = scmp.eq.s32.totalorder %s30, 0
      %p117 = por %p115, %p116
      %p118 = scmp.ne.s32.totalorder %s104, %s105
      %p119 = scmp.eq.s32.totalorder %s31, 1
      %p120 = por %p118, %p119
      %p122 = scmp.ne.s32.totalorder %s105, %s121
      %p123 = scmp.eq.s32.totalorder %s31, 0
      %p124 = por %p122, %p123
      %s126 = sadd.s32 %s125, 1
      %p129 = scmp.eq.s32.totalorder %s25, 1
      %p130 = scmp.ne.s32.totalorder %s125, %s127
      %p131 = scmp.eq.s32.totalorder %s25, 0
      %p132 = por %p130, %p131
      %p133 = scmp.ne.s32.totalorder %s125, %s127
      %p134 = scmp.eq.s32.totalorder %s30, 1
      %p135 = por %p133, %p134
      %p136 = scmp.ne.s32.totalorder %s127, %s128
      %p137 = scmp.eq.s32.totalorder %s30, 0
      %p138 = por %p136, %p137
      %p139 = scmp.ne.s32.totalorder %s127, %s128
      %p140 = scmp.eq.s32.totalorder %s31, 1
      %p141 = por %p139, %p140
      %p143 = scmp.ne.s32.totalorder %s128, %s142
      %p144 = scmp.eq.s32.totalorder %s31, 0
      %p145 = por %p143, %p144
      %s147 = sadd.s32 %s146, 1
      %p150 = scmp.eq.s32.totalorder %s25, 1
      %p151 = scmp.ne.s32.totalorder %s146, %s148
      %p152 = scmp.eq.s32.totalorder %s25, 0
      %p153 = por %p151, %p152
      %p154 = scmp.ne.s32.totalorder %s146, %s148
      %p155 = scmp.eq.s32.totalorder %s30, 1
      %p156 = por %p154, %p155
      %p157 = scmp.ne.s32.totalorder %s148, %s149
      %p158 = scmp.eq.s32.totalorder %s30, 0
      %p159 = por %p157, %p158
      %p160 = scmp.ne.s32.totalorder %s148, %s149
      %p161 = scmp.eq.s32.totalorder %s31, 1
      %p162 = por %p160, %p161
      %p164 = scmp.ne.s32.totalorder %s149, %s163
      %p165 = scmp.eq.s32.totalorder %s31, 0
      %p166 = por %p164, %p165
      %s168 = sadd.s32 %s167, 1
      %p171 = scmp.eq.s32.totalorder %s25, 1
      %p172 = scmp.ne.s32.totalorder %s167, %s169
      %p173 = scmp.eq.s32.totalorder %s25, 0
      %p174 = por %p172, %p173
      %p175 = scmp.ne.s32.totalorder %s167, %s169
      %p176 = scmp.eq.s32.totalorder %s30, 1
      %p177 = por %p175, %p176
      %p178 = scmp.ne.s32.totalorder %s169, %s170
      %p179 = scmp.eq.s32.totalorder %s30, 0
      %p180 = por %p178, %p179
      %p181 = scmp.ne.s32.totalorder %s169, %s170
      %p182 = scmp.eq.s32.totalorder %s31, 1
      %p183 = por %p181, %p182
      %p185 = scmp.ne.s32.totalorder %s170, %s184
      %p186 = scmp.eq.s32.totalorder %s31, 0
      %p187 = por %p185, %p186
      %s189 = sadd.s32 %s188, 1
      %p192 = scmp.eq.s32.totalorder %s25, 1
      %p193 = scmp.ne.s32.totalorder %s188, %s190
      %p194 = scmp.eq.s32.totalorder %s25, 0
      %p195 = por %p193, %p194
      %p196 = scmp.ne.s32.totalorder %s188, %s190
      %p197 = scmp.eq.s32.totalorder %s30, 1
      %p198 = por %p196, %p197
      %p199 = scmp.ne.s32.totalorder %s190, %s191
      %p200 = scmp.eq.s32.totalorder %s30, 0
      %p201 = por %p199, %p200
      %p202 = scmp.ne.s32.totalorder %s190, %s191
      %p203 = scmp.eq.s32.totalorder %s31, 1
      %p204 = por %p202, %p203
      %p206 = scmp.ne.s32.totalorder %s191, %s205
      %p207 = scmp.eq.s32.totalorder %s31, 0
      %p208 = por %p206, %p207
      %s210 = sadd.s32 %s209, 1
      %p213 = scmp.eq.s32.totalorder %s25, 1
      %p214 = scmp.ne.s32.totalorder %s209, %s211
      %p215 = scmp.eq.s32.totalorder %s25, 0
      %p216 = por %p214, %p215
      %p217 = scmp.ne.s32.totalorder %s209, %s211
      %p218 = scmp.eq.s32.totalorder %s30, 1
      %p219 = por %p217, %p218
      %p220 = scmp.ne.s32.totalorder %s211, %s212
      %p221 = scmp.eq.s32.totalorder %s30, 0
      %p222 = por %p220, %p221
      %p223 = scmp.ne.s32.totalorder %s211, %s212
      %p224 = scmp.eq.s32.totalorder %s31, 1
      %p225 = por %p223, %p224
      %p227 = scmp.ne.s32.totalorder %s212, %s226
      %p228 = scmp.eq.s32.totalorder %s31, 0
      %p229 = por %p227, %p228
      %s230 = ssub.s32 %s32, %s44
      %s231 = ssub.s32 %s33, %s40
      %s232 = sor.u32 %s230, %s231
      %p233 = scmp.eq.s32.totalorder %s232, 0
      %s235 = sadd.s32 %s234, 1
      %s236 = scalar_select %p233, %s234, %s235
      %p239 = pneg %p233
      %p240 = scmp.eq.s32.totalorder %s25, 1
      %p241 = por %p239, %p240
      %p242 = scmp.ne.s32.totalorder %s234, %s237
      %p243 = scmp.eq.s32.totalorder %s25, 0
      %p244 = por %p242, %p243
      %p245 = scmp.ne.s32.totalorder %s234, %s237
      %p246 = scmp.eq.s32.totalorder %s30, 1
      %p247 = por %p245, %p246
      %p248 = scmp.ne.s32.totalorder %s237, %s238
      %p249 = scmp.eq.s32.totalorder %s30, 0
      %p250 = por %p248, %p249
      %p251 = scmp.ne.s32.totalorder %s237, %s238
      %p252 = scmp.eq.s32.totalorder %s31, 1
      %p253 = por %p251, %p252
      %p255 = scmp.ne.s32.totalorder %s238, %s254
      %p256 = scmp.eq.s32.totalorder %s31, 0
      %p257 = por %p255, %p256
      %p258 = scmp.le.s32.totalorder 1, %s25
      %p259 = scmp.lt.s32.totalorder %s25, 3
      %p260 = pnand %p258, %p259
      %p261 = pneg %p260
      // Predicated region
      $region9: #{tpu_custom_call.1} parent=5 // pred_check
        _
      $region10: #{tpu_custom_call.1} parent=5 // pred_check_branch
        %263 = sbr.rel (%p260) target = $region12
      $region11: #{tpu_custom_call.1} parent=5 // pred_region
        %s264 = ssub.s32 %s25, 1
        // Predicated region
        $region13: #{tpu_custom_call.1} parent=11 // pred_check
          %p265 = pneg %p138
        $region14: #{tpu_custom_call.1} parent=11 // pred_check_branch
          %267 = sbr.rel (%p265) target = $region16
        $region15: #{tpu_custom_call.1} parent=11 // pred_region
          %s269 = ssub.s32 256, 256
          %270 = vsyncadd [#allocation12], %s269
          %s271 = sshll.u32 [#allocation11], 4
          %s272 = int_to_ptr.vmem [resolvable:$true] %s271
          %277 = dma.hbm_to_vmem [thread:$0]  %s3, 256, %s272, [#allocation12], 64, 64, 4
        $region16: #{tpu_custom_call.1} parent=11 // pred_fallthru
          _
        // Predicated region
        $region17: #{tpu_custom_call.1} parent=11 // pred_check
          %p278 = pneg %p159
        $region18: #{tpu_custom_call.1} parent=11 // pred_check_branch
          %280 = sbr.rel (%p278) target = $region20
        $region19: #{tpu_custom_call.1} parent=11 // pred_region
          %s282 = ssub.s32 256, 256
          %283 = vsyncadd [#allocation12], %s282
          %s284 = sshll.u32 [#allocation13], 4
          %s285 = int_to_ptr.vmem [resolvable:$true] %s284
          %290 = dma.hbm_to_vmem [thread:$0]  %s4, 256, %s285, [#allocation12], 64, 64, 4
        $region20: #{tpu_custom_call.1} parent=11 // pred_fallthru
          _
        // Predicated region
        $region21: #{tpu_custom_call.1} parent=11 // pred_check
          %p291 = pneg %p180
        $region22: #{tpu_custom_call.1} parent=11 // pred_check_branch
          %293 = sbr.rel (%p291) target = $region24
        $region23: #{tpu_custom_call.1} parent=11 // pred_region
          %s295 = ssub.s32 256, 256
          %296 = vsyncadd [#allocation15], %s295
          %s297 = sshll.u32 [#allocation14], 4
          %s298 = int_to_ptr.vmem [resolvable:$true] %s297
          %303 = dma.hbm_to_vmem [thread:$0]  %s5, 256, %s298, [#allocation15], 64, 64, 4
        $region24: #{tpu_custom_call.1} parent=11 // pred_fallthru
          _
        // Predicated region
        $region25: #{tpu_custom_call.1} parent=11 // pred_check
          %p304 = pneg %p201
        $region26: #{tpu_custom_call.1} parent=11 // pred_check_branch
          %306 = sbr.rel (%p304) target = $region28
        $region27: #{tpu_custom_call.1} parent=11 // pred_region
          %s308 = ssub.s32 256, 256
          %309 = vsyncadd [#allocation15], %s308
          %s310 = sshll.u32 [#allocation16], 4
          %s311 = int_to_ptr.vmem [resolvable:$true] %s310
          %316 = dma.hbm_to_vmem [thread:$0]  %s6, 256, %s311, [#allocation15], 64, 64, 4
        $region28: #{tpu_custom_call.1} parent=11 // pred_fallthru
          _
        // Predicated region
        $region29: #{tpu_custom_call.1} parent=11 // pred_check
          %p317 = pneg %p222
        $region30: #{tpu_custom_call.1} parent=11 // pred_check_branch
          %319 = sbr.rel (%p317) target = $region32
        $region31: #{tpu_custom_call.1} parent=11 // pred_region
          _
        $region32: #{tpu_custom_call.1} parent=11 // pred_fallthru
          _
      $region12: #{tpu_custom_call.1} parent=5 // pred_fallthru
        _
      %p320 = scmp.lt.s32.totalorder %s25, 2
      // Predicated region
      $region33: #{tpu_custom_call.1} parent=5 // pred_check
        %p321 = pneg %p320
      $region34: #{tpu_custom_call.1} parent=5 // pred_check_branch
        %323 = sbr.rel (%p321) target = $region36
      $region35: #{tpu_custom_call.1} parent=5 // pred_region
        // Predicated region
        $region37: #{tpu_custom_call.1} parent=35 // pred_check
          %p324 = pneg %p57
        $region38: #{tpu_custom_call.1} parent=35 // pred_check_branch
          %326 = sbr.rel (%p324) target = $region40
        $region39: #{tpu_custom_call.1} parent=35 // pred_region
          %s327 = sand.u32 %s47, 1
          %s328 = scalar_lea.sflag [#allocation6], %s327
          %s329 = sand.u32 %s47, 1
          %s330 = smul.addr %s329, 8
          %s331 = scalar_lea.vmem [#allocation5], %s330
          %s333 = ssub.s32 128, 128
          %334 = vsyncadd %s328, %s333
          %s335 = smul.addr %s32, 128
          %s336 = scalar_lea.hbm %s0, %s335
          %s338 = sshll.u32 %s331, 4
          %s339 = int_to_ptr.vmem [resolvable:$true] %s338
          %341 = dma.hbm_to_vmem [thread:$0]  %s336, 128, %s339, %s328
        $region40: #{tpu_custom_call.1} parent=35 // pred_fallthru
          _
        // Predicated region
        $region41: #{tpu_custom_call.1} parent=35 // pred_check
          %p342 = pneg %p83
        $region42: #{tpu_custom_call.1} parent=35 // pred_check_branch
          %344 = sbr.rel (%p342) target = $region44
        $region43: #{tpu_custom_call.1} parent=35 // pred_region
          %s345 = sand.u32 %s25, 1
          %s346 = scalar_lea.sflag [#allocation9], %s345
          %s347 = sand.u32 %s73, 1
          %s348 = smul.addr %s347, 8
          %s349 = scalar_lea.vmem [#allocation8], %s348
          %s351 = ssub.s32 128, 128
          %352 = vsyncadd %s346, %s351
          %s353 = smul.addr %s32, 128
          %s354 = scalar_lea.hbm %s1, %s353
          %s356 = sshll.u32 %s349, 4
          %s357 = int_to_ptr.vmem [resolvable:$true] %s356
          %359 = dma.hbm_to_vmem [thread:$0]  %s354, 128, %s357, %s346
        $region44: #{tpu_custom_call.1} parent=35 // pred_fallthru
          _
        // Predicated region
        $region45: #{tpu_custom_call.1} parent=35 // pred_check
          %p360 = pneg %p111
        $region46: #{tpu_custom_call.1} parent=35 // pred_check_branch
          %362 = sbr.rel (%p360) target = $region48
        $region47: #{tpu_custom_call.1} parent=35 // pred_region
          %s363 = sand.u32 %s25, 1
          %s364 = scalar_lea.sflag [#allocation9], %s363
          %s365 = sand.u32 %s101, 1
          %s366 = smul.addr %s365, 8
          %s367 = scalar_lea.vmem [#allocation10], %s366
          %s369 = ssub.s32 128, 128
          %370 = vsyncadd %s364, %s369
          %s371 = sadd.s32 %s33, %s32
          %s372 = smul.addr %s371, 128
          %s373 = scalar_lea.hbm %s2, %s372
          %s375 = sshll.u32 %s367, 4
          %s376 = int_to_ptr.vmem [resolvable:$true] %s375
          %378 = dma.hbm_to_vmem [thread:$0]  %s373, 128, %s376, %s364
        $region48: #{tpu_custom_call.1} parent=35 // pred_fallthru
          _
      $region36: #{tpu_custom_call.1} parent=5 // pred_fallthru
        _
      %p379 = scmp.le.s32.totalorder 1, %s25
      %p380 = scmp.lt.s32.totalorder %s25, 3
      %p381 = pnand %p379, %p380
      %p382 = pneg %p381
      // Predicated region
      $region49: #{tpu_custom_call.1} parent=5 // pred_check
        _
      $region50: #{tpu_custom_call.1} parent=5 // pred_check_branch
        %384 = sbr.rel (%p381) target = $region52
      $region51: #{tpu_custom_call.1} parent=5 // pred_region
        %s385 = ssub.s32 %s25, 1
        %s386 = sand.u32 %s50, 1
        %s387 = scalar_lea.sflag [#allocation6], %s386
        %s388 = sand.u32 %s50, 1
        %s389 = smul.addr %s388, 8
        %s390 = scalar_lea.vmem [#allocation5], %s389
        // Predicated region
        $region53: #{tpu_custom_call.1} parent=51 // pred_check
          %p391 = pneg %p63
        $region54: #{tpu_custom_call.1} parent=51 // pred_check_branch
          %393 = sbr.rel (%p391) target = $region56
        $region55: #{tpu_custom_call.1} parent=51 // pred_region
          %394 = dma.done %s387, 128
        $region56: #{tpu_custom_call.1} parent=51 // pred_fallthru
          _
        %s395 = sand.u32 %s30, 1
        %s396 = scalar_lea.sflag [#allocation9], %s395
        %s397 = sand.u32 %s76, 1
        %s398 = smul.addr %s397, 8
        %s399 = scalar_lea.vmem [#allocation8], %s398
        // Predicated region
        $region57: #{tpu_custom_call.1} parent=51 // pred_check
          %p400 = pneg %p89
        $region58: #{tpu_custom_call.1} parent=51 // pred_check_branch
          %402 = sbr.rel (%p400) target = $region60
        $region59: #{tpu_custom_call.1} parent=51 // pred_region
          %403 = dma.done %s396, 128
        $region60: #{tpu_custom_call.1} parent=51 // pred_fallthru
          _
        %s404 = sand.u32 %s30, 1
        %s405 = scalar_lea.sflag [#allocation9], %s404
        %s406 = sand.u32 %s104, 1
        %s407 = smul.addr %s406, 8
        %s408 = scalar_lea.vmem [#allocation10], %s407
        // Predicated region
        $region61: #{tpu_custom_call.1} parent=51 // pred_check
          %p409 = pneg %p117
        $region62: #{tpu_custom_call.1} parent=51 // pred_check_branch
          %411 = sbr.rel (%p409) target = $region64
        $region63: #{tpu_custom_call.1} parent=51 // pred_region
          %412 = dma.done %s405, 128
        $region64: #{tpu_custom_call.1} parent=51 // pred_fallthru
          _
        // Predicated region
        $region65: #{tpu_custom_call.1} parent=51 // pred_check
          %p413 = pneg %p138
        $region66: #{tpu_custom_call.1} parent=51 // pred_check_branch
          %415 = sbr.rel (%p413) target = $region68
        $region67: #{tpu_custom_call.1} parent=51 // pred_region
          %416 = dma.done [#allocation12], 256
        $region68: #{tpu_custom_call.1} parent=51 // pred_fallthru
          _
        // Predicated region
        $region69: #{tpu_custom_call.1} parent=51 // pred_check
          %p417 = pneg %p159
        $region70: #{tpu_custom_call.1} parent=51 // pred_check_branch
          %419 = sbr.rel (%p417) target = $region72
        $region71: #{tpu_custom_call.1} parent=51 // pred_region
          %420 = dma.done [#allocation12], 256
        $region72: #{tpu_custom_call.1} parent=51 // pred_fallthru
          _
        // Predicated region
        $region73: #{tpu_custom_call.1} parent=51 // pred_check
          %p421 = pneg %p180
        $region74: #{tpu_custom_call.1} parent=51 // pred_check_branch
          %423 = sbr.rel (%p421) target = $region76
        $region75: #{tpu_custom_call.1} parent=51 // pred_region
          %424 = dma.done [#allocation15], 256
        $region76: #{tpu_custom_call.1} parent=51 // pred_fallthru
          _
        // Predicated region
        $region77: #{tpu_custom_call.1} parent=51 // pred_check
          %p425 = pneg %p201
        $region78: #{tpu_custom_call.1} parent=51 // pred_check_branch
          %427 = sbr.rel (%p425) target = $region80
        $region79: #{tpu_custom_call.1} parent=51 // pred_region
          %428 = dma.done [#allocation15], 256
        $region80: #{tpu_custom_call.1} parent=51 // pred_fallthru
          _
        %s429 = sand.u32 %s50, 1
        %s430 = scalar_lea.sflag [#allocation6], %s429
        %s431 = sand.u32 %s50, 1
        %s432 = smul.addr %s431, 8
        %s433 = scalar_lea.vmem [#allocation5], %s432
        %p434 = pneg %p63
        %p435 = pneg %p60
        %s436 = sand.u32 %s30, 1
        %s437 = scalar_lea.sflag [#allocation9], %s436
        %s438 = sand.u32 %s76, 1
        %s439 = smul.addr %s438, 8
        %s440 = scalar_lea.vmem [#allocation8], %s439
        %p441 = pneg %p89
        %p442 = pneg %p86
        %s443 = sand.u32 %s30, 1
        %s444 = scalar_lea.sflag [#allocation9], %s443
        %s445 = sand.u32 %s104, 1
        %s446 = smul.addr %s445, 8
        %s447 = scalar_lea.vmem [#allocation10], %s446
        %p448 = pneg %p117
        %p449 = pneg %p114
        %p450 = pneg %p138
        %p451 = pneg %p135
        %p452 = pneg %p159
        %p453 = pneg %p156
        %p454 = pneg %p180
        %p455 = pneg %p177
        %p456 = pneg %p201
        %p457 = pneg %p198
        %p458 = pneg %p222
        %p459 = pneg %p219
        %p460 = pneg %p250
        %p461 = pneg %p247
        %s462 = sand.u32 %s237, 1
        %s463 = scalar_lea.sflag [#allocation7], %s462
        %s464 = sand.u32 %s237, 1
        %s465 = smul.addr %s464, 8
        %s466 = scalar_lea.vmem [#allocation17], %s465
        %p468 = scmp.eq.s32.totalorder %s35, 0
        // Predicated region
        $region81: #{tpu_custom_call.1} parent=51 // pred_check
          %p469 = pneg %p468
        $region82: #{tpu_custom_call.1} parent=51 // pred_check_branch
          %471 = sbr.rel (%p469) target = $region84
        $region83: #{tpu_custom_call.1} parent=51 // pred_region
          %v472 = vld [vmem:[%s399] sm:$0xff]
          %v473 = vpack.c.bf16 %v472, %v472
          %v474 = vld [vmem:[%s390] sm:$0xff]
          %v475 = vpack.c.bf16 %v474, %v474
          %v476 = vld [vmem:[#allocation13] sm:$0xf]
          %v477 = vld [vmem:[#allocation13 + $0x4] sm:$0xf]
          %v478 = vld [vmem:[#allocation13 + $0x8] sm:$0xf]
          %v479 = vld [vmem:[#allocation13 + $0xc] sm:$0xf]
          %v484 = vunpack.c.l.b16 %v476
          %v485 = vunpack.c.l.b16 %v477
          %v486 = vunpack.c.l.b16 %v478
          %v487 = vunpack.c.l.b16 %v479
          %v488 = vpack.c.b16 %v485, %v484
          %v489 = vpack.c.b16 %v487, %v486
          %vm492 = vcmask 261120
          %v494 = vsel %vm492, %v473, 0
          %496 = vmatprep.subr.bf16.mxu0 0
          %497 = vmatpush1.bf16.msra.mxu0 0
          %498 = vmatprep.subr.bf16.mxu0 0
          %499 = vmatpush1.bf16.msra.mxu0 0
          %500 = vmatprep.subr.bf16.mxu0 0
          %501 = vmatpush1.bf16.msra.mxu0 0
          %502 = vmatprep.subr.bf16.mxu0 0
          %503 = vmatpush1.bf16.msra.mxu0 0
          %504 = vmatprep.subr.bf16.mxu0 0
          %505 = vmatpush1.bf16.msra.mxu0 0
          %506 = vmatprep.subr.bf16.mxu0 0
          %507 = vmatpush1.bf16.msra.mxu0 0
          %508 = vmatprep.subr.bf16.mxu0 0
          %509 = vmatpush1.bf16.msra.mxu0 %v489
          %510 = vmatprep.subr.bf16.mxu0 0
          %511 = vmatpush1.bf16.msra.mxu0 %v488
          %512 = vmatprep.subr.bf16.mxu0 0
          %513 = vmatpush2.bf16.msra.mxu0 0
          %514 = vmatprep.subr.bf16.mxu0 0
          %515 = vmatpush2.bf16.msra.mxu0 0
          %516 = vmatprep.subr.bf16.mxu0 0
          %517 = vmatpush2.bf16.msra.mxu0 0
          %518 = vmatprep.subr.bf16.mxu0 0
          %519 = vmatpush2.bf16.msra.mxu0 0
          %520 = vmatprep.subr.bf16.mxu0 0
          %521 = vmatpush2.bf16.msra.mxu0 0
          %522 = vmatprep.subr.bf16.mxu0 0
          %523 = vmatpush2.bf16.msra.mxu0 0
          %524 = vmatprep.subr.bf16.mxu0 0
          %525 = vmatpush2.bf16.msra.mxu0 0
          %526 = vmatprep.subr.bf16.mxu0 0
          %527 = vmatpush2.bf16.msra.mxu0 0
          %528 = vmatprep.mubr.bf16.mxu0 0
          %529 = vmatmul.mubr.bf16.gmra.mxu0 %v494
          %v530 = vpop.f32.mrf.mxu0
          %v531 = vadd.f32 0.0, %v530
          %v532 = vpop.f32.mrf.mxu0
          %v533 = vpop.f32.mrf.mxu0
          %v534 = vpop.f32.mrf.mxu0
          %535 = vdwg.mxu0
          %v536 = vpack.c.bf16 %v531, %v531
          %vm537 = vcmask 257024
          %538 = vst.msk [vmem:[#allocation3] sm:$0xf] %vm537, %v536
          %v539 = vld [vmem:[#allocation11] sm:$0xf]
          %v540 = vld [vmem:[#allocation11 + $0x4] sm:$0xf]
          %v541 = vld [vmem:[#allocation11 + $0x8] sm:$0xf]
          %v542 = vld [vmem:[#allocation11 + $0xc] sm:$0xf]
          %v547 = vunpack.c.l.b16 %v539
          %v548 = vunpack.c.l.b16 %v540
          %v549 = vunpack.c.l.b16 %v541
          %v550 = vunpack.c.l.b16 %v542
          %v551 = vpack.c.b16 %v548, %v547
          %v552 = vpack.c.b16 %v550, %v549
          %v556 = vsel %vm492, %v475, 0
          %558 = vmatprep.subr.bf16.mxu0 0
          %559 = vmatpush1.bf16.msra.mxu0 0
          %560 = vmatprep.subr.bf16.mxu0 0
          %561 = vmatpush1.bf16.msra.mxu0 0
          %562 = vmatprep.subr.bf16.mxu0 0
          %563 = vmatpush1.bf16.msra.mxu0 0
          %564 = vmatprep.subr.bf16.mxu0 0
          %565 = vmatpush1.bf16.msra.mxu0 0
          %566 = vmatprep.subr.bf16.mxu0 0
          %567 = vmatpush1.bf16.msra.mxu0 0
          %568 = vmatprep.subr.bf16.mxu0 0
          %569 = vmatpush1.bf16.msra.mxu0 0
          %570 = vmatprep.subr.bf16.mxu0 0
          %571 = vmatpush1.bf16.msra.mxu0 %v552
          %572 = vmatprep.subr.bf16.mxu0 0
          %573 = vmatpush1.bf16.msra.mxu0 %v551
          %574 = vmatprep.subr.bf16.mxu0 0
          %575 = vmatpush2.bf16.msra.mxu0 0
          %576 = vmatprep.subr.bf16.mxu0 0
          %577 = vmatpush2.bf16.msra.mxu0 0
          %578 = vmatprep.subr.bf16.mxu0 0
          %579 = vmatpush2.bf16.msra.mxu0 0
          %580 = vmatprep.subr.bf16.mxu0 0
          %581 = vmatpush2.bf16.msra.mxu0 0
          %582 = vmatprep.subr.bf16.mxu0 0
          %583 = vmatpush2.bf16.msra.mxu0 0
          %584 = vmatprep.subr.bf16.mxu0 0
          %585 = vmatpush2.bf16.msra.mxu0 0
          %586 = vmatprep.subr.bf16.mxu0 0
          %587 = vmatpush2.bf16.msra.mxu0 0
          %588 = vmatprep.subr.bf16.mxu0 0
          %589 = vmatpush2.bf16.msra.mxu0 0
          %590 = vmatprep.mubr.bf16.mxu0 0
          %591 = vmatmul.mubr.bf16.gmra.mxu0 %v556
          %v592 = vpop.f32.mrf.mxu0
          %v593 = vadd.f32 0.0, %v592
          %v594 = vpop.f32.mrf.mxu0
          %v595 = vpop.f32.mrf.mxu0
          %v596 = vpop.f32.mrf.mxu0
          %597 = vdwg.mxu0
          %v598 = vpack.c.bf16 %v593, %v593
          %599 = vst.msk [vmem:[#allocation4] sm:$0xf] %vm537, %v598
        $region84: #{tpu_custom_call.1} parent=51 // pred_fallthru
          _
        %v600 = vld [vmem:[%s408] sm:$0xff]
        %v601 = vpack.c.bf16 %v600, %v600
        %v602 = vld [vmem:[#allocation14] sm:$0xf]
        %v603 = vld [vmem:[#allocation14 + $0x4] sm:$0xf]
        %v604 = vld [vmem:[#allocation14 + $0x8] sm:$0xf]
        %v605 = vld [vmem:[#allocation14 + $0xc] sm:$0xf]
        %v610 = vunpack.c.l.b16 %v602
        %v611 = vunpack.c.l.b16 %v603
        %v612 = vunpack.c.l.b16 %v604
        %v613 = vunpack.c.l.b16 %v605
        %v614 = vpack.c.b16 %v611, %v610
        %v615 = vpack.c.b16 %v613, %v612
        %vm618 = vcmask 261120
        %v620 = vsel %vm618, %v601, 0
        %622 = vmatprep.subr.bf16.mxu0 0
        %623 = vmatpush1.bf16.msra.mxu0 0
        %624 = vmatprep.subr.bf16.mxu0 0
        %625 = vmatpush1.bf16.msra.mxu0 0
        %626 = vmatprep.subr.bf16.mxu0 0
        %627 = vmatpush1.bf16.msra.mxu0 0
        %628 = vmatprep.subr.bf16.mxu0 0
        %629 = vmatpush1.bf16.msra.mxu0 0
        %630 = vmatprep.subr.bf16.mxu0 0
        %631 = vmatpush1.bf16.msra.mxu0 0
        %632 = vmatprep.subr.bf16.mxu0 0
        %633 = vmatpush1.bf16.msra.mxu0 0
        %634 = vmatprep.subr.bf16.mxu0 0
        %635 = vmatpush1.bf16.msra.mxu0 %v615
        %636 = vmatprep.subr.bf16.mxu0 0
        %637 = vmatpush1.bf16.msra.mxu0 %v614
        %638 = vmatprep.subr.bf16.mxu0 0
        %639 = vmatpush2.bf16.msra.mxu0 0
        %640 = vmatprep.subr.bf16.mxu0 0
        %641 = vmatpush2.bf16.msra.mxu0 0
        %642 = vmatprep.subr.bf16.mxu0 0
        %643 = vmatpush2.bf16.msra.mxu0 0
        %644 = vmatprep.subr.bf16.mxu0 0
        %645 = vmatpush2.bf16.msra.mxu0 0
        %646 = vmatprep.subr.bf16.mxu0 0
        %647 = vmatpush2.bf16.msra.mxu0 0
        %648 = vmatprep.subr.bf16.mxu0 0
        %649 = vmatpush2.bf16.msra.mxu0 0
        %650 = vmatprep.subr.bf16.mxu0 0
        %651 = vmatpush2.bf16.msra.mxu0 0
        %652 = vmatprep.subr.bf16.mxu0 0
        %653 = vmatpush2.bf16.msra.mxu0 0
        %654 = vmatprep.mubr.bf16.mxu0 0
        %655 = vmatmul.mubr.bf16.gmra.mxu0 %v620
        %v656 = vpop.f32.mrf.mxu0
        %v657 = vadd.f32 0.0, %v656
        %v658 = vpop.f32.mrf.mxu0
        %v659 = vpop.f32.mrf.mxu0
        %v660 = vpop.f32.mrf.mxu0
        %661 = vdwg.mxu0
        %v662 = vpack.c.bf16 %v657, %v657
        %vm663 = vcmask 257024
        %664 = vst.msk [vmem:[#allocation2] sm:$0xf] %vm663, %v662
        %v665 = vld [vmem:[#allocation2] sm:$0xf]
        %v666 = vld [vmem:[#allocation3] sm:$0xf]
        %v667 = vld [vmem:[#allocation4] sm:$0xf]
        %vm668 = vcmask 64512
        %v670 = vsel %vm668, %v665, 0
        %v673 = vsel %vm668, %v666, 0
        %675 = vmatprep.subr.bf16.mxu0 0
        %676 = vmatpush1.bf16.xpose.msra.mxu0 0
        %677 = vmatprep.subr.bf16.mxu0 0
        %678 = vmatpush1.bf16.xpose.msra.mxu0 0
        %679 = vmatprep.subr.bf16.mxu0 0
        %680 = vmatpush1.bf16.xpose.msra.mxu0 0
        %681 = vmatprep.subr.bf16.mxu0 0
        %682 = vmatpush1.bf16.xpose.msra.mxu0 0
        %683 = vmatprep.subr.bf16.mxu0 0
        %684 = vmatpush1.bf16.xpose.msra.mxu0 0
        %685 = vmatprep.subr.bf16.mxu0 0
        %686 = vmatpush1.bf16.xpose.msra.mxu0 0
        %687 = vmatprep.subr.bf16.mxu0 0
        %688 = vmatpush1.bf16.xpose.msra.mxu0 0
        %689 = vmatprep.subr.bf16.mxu0 0
        %690 = vmatpush1.bf16.xpose.msra.mxu0 %v673
        %691 = vmatprep.subr.bf16.mxu0 0
        %692 = vmatpush2.bf16.xpose.msra.mxu0 0
        %693 = vmatprep.subr.bf16.mxu0 0
        %694 = vmatpush2.bf16.xpose.msra.mxu0 0
        %695 = vmatprep.subr.bf16.mxu0 0
        %696 = vmatpush2.bf16.xpose.msra.mxu0 0
        %697 = vmatprep.subr.bf16.mxu0 0
        %698 = vmatpush2.bf16.xpose.msra.mxu0 0
        %699 = vmatprep.subr.bf16.mxu0 0
        %700 = vmatpush2.bf16.xpose.msra.mxu0 0
        %701 = vmatprep.subr.bf16.mxu0 0
        %702 = vmatpush2.bf16.xpose.msra.mxu0 0
        %703 = vmatprep.subr.bf16.mxu0 0
        %704 = vmatpush2.bf16.xpose.msra.mxu0 0
        %705 = vmatprep.subr.bf16.mxu0 0
        %706 = vmatpush2.bf16.xpose.msra.mxu0 0
        %707 = vmatprep.mubr.bf16.mxu0 0
        %708 = vmatmul.mubr.bf16.gmra.mxu0 %v670
        %v709 = vpop.f32.mrf.mxu0
        %v710 = vadd.f32 0.0, %v709
        %v711 = vpop.f32.mrf.mxu0
        %v712 = vpop.f32.mrf.mxu0
        %v713 = vpop.f32.mrf.mxu0
        %714 = vdwg.mxu0
        %v715 = vsel %vm668, %v710, -inf
        %716 = vmax.xlane.f32.xlu0 %v715
        %v717 = vpop.xlane.xlu0 %716
        %v718 = vsub.f32 %v710, %v717
        %v719 = vmul.f32 %v718, 1.442695
        %v720 = vpow.pop %v719
        %v721 = vsel %vm668, %v720, 0.0
        %722 = vadd.xlane.f32.xlu0 %v721
        %v723 = vpop.xlane.xlu0 %722
        %v724 = vpack.c.bf16 %v720, %v720
        %v726 = vsel %vm668, %v724, 0
        %vm728 = vcmask 1043456
        %v730 = vsel %vm728, %v667, 0
        %732 = vmatprep.subr.bf16.mxu0 0
        %733 = vmatpush1.bf16.msra.mxu0 0
        %734 = vmatprep.subr.bf16.mxu0 0
        %735 = vmatpush1.bf16.msra.mxu0 0
        %736 = vmatprep.subr.bf16.mxu0 0
        %737 = vmatpush1.bf16.msra.mxu0 0
        %738 = vmatprep.subr.bf16.mxu0 0
        %739 = vmatpush1.bf16.msra.mxu0 0
        %740 = vmatprep.subr.bf16.mxu0 0
        %741 = vmatpush1.bf16.msra.mxu0 0
        %742 = vmatprep.subr.bf16.mxu0 0
        %743 = vmatpush1.bf16.msra.mxu0 0
        %744 = vmatprep.subr.bf16.mxu0 0
        %745 = vmatpush1.bf16.msra.mxu0 0
        %746 = vmatprep.subr.bf16.mxu0 0
        %747 = vmatpush1.bf16.msra.mxu0 %v730
        %748 = vmatprep.subr.bf16.mxu0 0
        %749 = vmatpush2.bf16.msra.mxu0 0
        %750 = vmatprep.subr.bf16.mxu0 0
        %751 = vmatpush2.bf16.msra.mxu0 0
        %752 = vmatprep.subr.bf16.mxu0 0
        %753 = vmatpush2.bf16.msra.mxu0 0
        %754 = vmatprep.subr.bf16.mxu0 0
        %755 = vmatpush2.bf16.msra.mxu0 0
        %756 = vmatprep.subr.bf16.mxu0 0
        %757 = vmatpush2.bf16.msra.mxu0 0
        %758 = vmatprep.subr.bf16.mxu0 0
        %759 = vmatpush2.bf16.msra.mxu0 0
        %760 = vmatprep.subr.bf16.mxu0 0
        %761 = vmatpush2.bf16.msra.mxu0 0
        %762 = vmatprep.subr.bf16.mxu0 0
        %763 = vmatpush2.bf16.msra.mxu0 0
        %764 = vmatprep.mubr.bf16.mxu0 0
        %765 = vmatmul.mubr.bf16.gmra.mxu0 %v726
        %v766 = vpop.f32.mrf.mxu0
        %v767 = vadd.f32 0.0, %v766
        %v768 = vpop.f32.mrf.mxu0
        %v769 = vpop.f32.mrf.mxu0
        %v770 = vpop.f32.mrf.mxu0
        %771 = vdwg.mxu0
        %v772 = vrcp.pop %v723
        %v773 = vmul.f32 %v767, %v772
        %v774 = vpack.c.bf16 %v773, %v773
        %v775 = vld [vmem:[#allocation16] sm:$0xf]
        %v776 = vld [vmem:[#allocation2] sm:$0xf]
        %v777 = vld [vmem:[#allocation3] sm:$0xf]
        %v778 = vld [vmem:[#allocation4] sm:$0xf]
        %v780 = vunpack.c.l.b16 %v776
        %v781 = vpack.c.b16 %v780, %v780
        %782 = vrot.lane.b32.xlu0 %v781, 120
        %v783 = vpop.permute.xlu0 %782
        %v785 = vunpack.c.l.b16 %v777
        %v786 = vpack.c.b16 %v785, %v785
        %787 = vrot.lane.b32.xlu0 %v786, 120
        %v788 = vpop.permute.xlu0 %787
        %v790 = vsel %vm668, %v783, 0
        %v793 = vsel %vm668, %v788, 0
        %795 = vmatprep.subr.bf16.mxu0 0
        %796 = vmatpush1.bf16.xpose.msra.mxu0 0
        %797 = vmatprep.subr.bf16.mxu0 0
        %798 = vmatpush1.bf16.xpose.msra.mxu0 0
        %799 = vmatprep.subr.bf16.mxu0 0
        %800 = vmatpush1.bf16.xpose.msra.mxu0 0
        %801 = vmatprep.subr.bf16.mxu0 0
        %802 = vmatpush1.bf16.xpose.msra.mxu0 0
        %803 = vmatprep.subr.bf16.mxu0 0
        %804 = vmatpush1.bf16.xpose.msra.mxu0 0
        %805 = vmatprep.subr.bf16.mxu0 0
        %806 = vmatpush1.bf16.xpose.msra.mxu0 0
        %807 = vmatprep.subr.bf16.mxu0 0
        %808 = vmatpush1.bf16.xpose.msra.mxu0 0
        %809 = vmatprep.subr.bf16.mxu0 0
        %810 = vmatpush1.bf16.xpose.msra.mxu0 %v793
        %811 = vmatprep.subr.bf16.mxu0 0
        %812 = vmatpush2.bf16.xpose.msra.mxu0 0
        %813 = vmatprep.subr.bf16.mxu0 0
        %814 = vmatpush2.bf16.xpose.msra.mxu0 0
        %815 = vmatprep.subr.bf16.mxu0 0
        %816 = vmatpush2.bf16.xpose.msra.mxu0 0
        %817 = vmatprep.subr.bf16.mxu0 0
        %818 = vmatpush2.bf16.xpose.msra.mxu0 0
        %819 = vmatprep.subr.bf16.mxu0 0
        %820 = vmatpush2.bf16.xpose.msra.mxu0 0
        %821 = vmatprep.subr.bf16.mxu0 0
        %822 = vmatpush2.bf16.xpose.msra.mxu0 0
        %823 = vmatprep.subr.bf16.mxu0 0
        %824 = vmatpush2.bf16.xpose.msra.mxu0 0
        %825 = vmatprep.subr.bf16.mxu0 0
        %826 = vmatpush2.bf16.xpose.msra.mxu0 0
        %827 = vmatprep.mubr.bf16.mxu0 0
        %828 = vmatmul.mubr.bf16.gmra.mxu0 %v790
        %v829 = vpop.f32.mrf.mxu0
        %v830 = vadd.f32 0.0, %v829
        %v831 = vpop.f32.mrf.mxu0
        %v832 = vpop.f32.mrf.mxu0
        %v833 = vpop.f32.mrf.mxu0
        %834 = vdwg.mxu0
        %v835 = vsel %vm668, %v830, -inf
        %836 = vmax.xlane.f32.xlu0 %v835
        %v837 = vpop.xlane.xlu0 %836
        %v838 = vsub.f32 %v830, %v837
        %v839 = vmul.f32 %v838, 1.442695
        %v840 = vpow.pop %v839
        %v841 = vsel %vm668, %v840, 0.0
        %842 = vadd.xlane.f32.xlu0 %v841
        %v843 = vpop.xlane.xlu0 %842
        %v844 = vpack.c.bf16 %v840, %v840
        %v846 = vunpack.c.l.b16 %v778
        %v847 = vpack.c.b16 %v846, %v846
        %848 = vrot.lane.b32.xlu0 %v847, 120
        %v849 = vpop.permute.xlu0 %848
        %v851 = vsel %vm668, %v844, 0
        %v854 = vsel %vm728, %v849, 0
        %856 = vmatprep.subr.bf16.mxu0 0
        %857 = vmatpush1.bf16.msra.mxu0 0
        %858 = vmatprep.subr.bf16.mxu0 0
        %859 = vmatpush1.bf16.msra.mxu0 0
        %860 = vmatprep.subr.bf16.mxu0 0
        %861 = vmatpush1.bf16.msra.mxu0 0
        %862 = vmatprep.subr.bf16.mxu0 0
        %863 = vmatpush1.bf16.msra.mxu0 0
        %864 = vmatprep.subr.bf16.mxu0 0
        %865 = vmatpush1.bf16.msra.mxu0 0
        %866 = vmatprep.subr.bf16.mxu0 0
        %867 = vmatpush1.bf16.msra.mxu0 0
        %868 = vmatprep.subr.bf16.mxu0 0
        %869 = vmatpush1.bf16.msra.mxu0 0
        %870 = vmatprep.subr.bf16.mxu0 0
        %871 = vmatpush1.bf16.msra.mxu0 %v854
        %872 = vmatprep.subr.bf16.mxu0 0
        %873 = vmatpush2.bf16.msra.mxu0 0
        %874 = vmatprep.subr.bf16.mxu0 0
        %875 = vmatpush2.bf16.msra.mxu0 0
        %876 = vmatprep.subr.bf16.mxu0 0
        %877 = vmatpush2.bf16.msra.mxu0 0
        %878 = vmatprep.subr.bf16.mxu0 0
        %879 = vmatpush2.bf16.msra.mxu0 0
        %880 = vmatprep.subr.bf16.mxu0 0
        %881 = vmatpush2.bf16.msra.mxu0 0
        %882 = vmatprep.subr.bf16.mxu0 0
        %883 = vmatpush2.bf16.msra.mxu0 0
        %884 = vmatprep.subr.bf16.mxu0 0
        %885 = vmatpush2.bf16.msra.mxu0 0
        %886 = vmatprep.subr.bf16.mxu0 0
        %887 = vmatpush2.bf16.msra.mxu0 0
        %888 = vmatprep.mubr.bf16.mxu0 0
        %889 = vmatmul.mubr.bf16.gmra.mxu0 %v851
        %v890 = vpop.f32.mrf.mxu0
        %v891 = vadd.f32 0.0, %v890
        %v892 = vpop.f32.mrf.mxu0
        %v893 = vpop.f32.mrf.mxu0
        %v894 = vpop.f32.mrf.mxu0
        %895 = vdwg.mxu0
        %v896 = vrcp.pop %v843
        %v897 = vmul.f32 %v891, %v896
        %v898 = vpack.c.bf16 %v897, %v897
        %v899 = vld [vmem:[#allocation16 + $0x4] sm:$0xf]
        %v901 = vsel %vm668, %v898, 0
        %v904 = vsel %vm728, %v899, 0
        %906 = vmatprep.subr.bf16.mxu0 0
        %907 = vmatpush1.bf16.msra.mxu0 0
        %908 = vmatprep.subr.bf16.mxu0 0
        %909 = vmatpush1.bf16.msra.mxu0 0
        %910 = vmatprep.subr.bf16.mxu0 0
        %911 = vmatpush1.bf16.msra.mxu0 0
        %912 = vmatprep.subr.bf16.mxu0 0
        %913 = vmatpush1.bf16.msra.mxu0 0
        %914 = vmatprep.subr.bf16.mxu0 0
        %915 = vmatpush1.bf16.msra.mxu0 0
        %916 = vmatprep.subr.bf16.mxu0 0
        %917 = vmatpush1.bf16.msra.mxu0 0
        %918 = vmatprep.subr.bf16.mxu0 0
        %919 = vmatpush1.bf16.msra.mxu0 0
        %920 = vmatprep.subr.bf16.mxu0 0
        %921 = vmatpush1.bf16.msra.mxu0 %v904
        %922 = vmatprep.subr.bf16.mxu0 0
        %923 = vmatpush2.bf16.msra.mxu0 0
        %924 = vmatprep.subr.bf16.mxu0 0
        %925 = vmatpush2.bf16.msra.mxu0 0
        %926 = vmatprep.subr.bf16.mxu0 0
        %927 = vmatpush2.bf16.msra.mxu0 0
        %928 = vmatprep.subr.bf16.mxu0 0
        %929 = vmatpush2.bf16.msra.mxu0 0
        %930 = vmatprep.subr.bf16.mxu0 0
        %931 = vmatpush2.bf16.msra.mxu0 0
        %932 = vmatprep.subr.bf16.mxu0 0
        %933 = vmatpush2.bf16.msra.mxu0 0
        %934 = vmatprep.subr.bf16.mxu0 0
        %935 = vmatpush2.bf16.msra.mxu0 0
        %936 = vmatprep.subr.bf16.mxu0 0
        %937 = vmatpush2.bf16.msra.mxu0 0
        %938 = vmatprep.mubr.bf16.mxu0 0
        %939 = vmatmul.mubr.bf16.gmra.mxu0 %v901
        %v940 = vpop.f32.mrf.mxu0
        %v941 = vadd.f32 0.0, %v940
        %v942 = vpop.f32.mrf.mxu0
        %v943 = vpop.f32.mrf.mxu0
        %v944 = vpop.f32.mrf.mxu0
        %945 = vdwg.mxu0
        %v947 = vsel %vm668, %v774, 0
        %v950 = vsel %vm728, %v775, 0
        %952 = vmatprep.subr.bf16.mxu0 0
        %953 = vmatpush1.bf16.msra.mxu0 0
        %954 = vmatprep.subr.bf16.mxu0 0
        %955 = vmatpush1.bf16.msra.mxu0 0
        %956 = vmatprep.subr.bf16.mxu0 0
        %957 = vmatpush1.bf16.msra.mxu0 0
        %958 = vmatprep.subr.bf16.mxu0 0
        %959 = vmatpush1.bf16.msra.mxu0 0
        %960 = vmatprep.subr.bf16.mxu0 0
        %961 = vmatpush1.bf16.msra.mxu0 0
        %962 = vmatprep.subr.bf16.mxu0 0
        %963 = vmatpush1.bf16.msra.mxu0 0
        %964 = vmatprep.subr.bf16.mxu0 0
        %965 = vmatpush1.bf16.msra.mxu0 0
        %966 = vmatprep.subr.bf16.mxu0 0
        %967 = vmatpush1.bf16.msra.mxu0 %v950
        %968 = vmatprep.subr.bf16.mxu0 0
        %969 = vmatpush2.bf16.msra.mxu0 0
        %970 = vmatprep.subr.bf16.mxu0 0
        %971 = vmatpush2.bf16.msra.mxu0 0
        %972 = vmatprep.subr.bf16.mxu0 0
        %973 = vmatpush2.bf16.msra.mxu0 0
        %974 = vmatprep.subr.bf16.mxu0 0
        %975 = vmatpush2.bf16.msra.mxu0 0
        %976 = vmatprep.subr.bf16.mxu0 0
        %977 = vmatpush2.bf16.msra.mxu0 0
        %978 = vmatprep.subr.bf16.mxu0 0
        %979 = vmatpush2.bf16.msra.mxu0 0
        %980 = vmatprep.subr.bf16.mxu0 0
        %981 = vmatpush2.bf16.msra.mxu0 0
        %982 = vmatprep.subr.bf16.mxu0 0
        %983 = vmatpush2.bf16.msra.mxu0 0
        %984 = vmatprep.mubr.bf16.mxu0 0
        %985 = vmatmul.mubr.bf16.gmra.mxu0 %v947
        %v986 = vpop.f32.mrf.mxu0
        %v987 = vadd.f32 %v941, %v986
        %v988 = vpop.f32.mrf.mxu0
        %v989 = vpop.f32.mrf.mxu0
        %v990 = vpop.f32.mrf.mxu0
        %991 = vdwg.mxu0
        %v992 = vld [vmem:[#allocation2] sm:$0xf]
        %v993 = vld [vmem:[#allocation3] sm:$0xf]
        %v994 = vld [vmem:[#allocation4] sm:$0xf]
        %v996 = vunpack.c.l.b16 %v992
        %v997 = vpack.c.b16 %v996, %v996
        %998 = vrot.lane.b32.xlu0 %v997, 112
        %v999 = vpop.permute.xlu0 %998
        %v1001 = vunpack.c.l.b16 %v993
        %v1002 = vpack.c.b16 %v1001, %v1001
        %1003 = vrot.lane.b32.xlu0 %v1002, 112
        %v1004 = vpop.permute.xlu0 %1003
        %v1006 = vsel %vm668, %v999, 0
        %v1009 = vsel %vm668, %v1004, 0
        %1011 = vmatprep.subr.bf16.mxu0 0
        %1012 = vmatpush1.bf16.xpose.msra.mxu0 0
        %1013 = vmatprep.subr.bf16.mxu0 0
        %1014 = vmatpush1.bf16.xpose.msra.mxu0 0
        %1015 = vmatprep.subr.bf16.mxu0 0
        %1016 = vmatpush1.bf16.xpose.msra.mxu0 0
        %1017 = vmatprep.subr.bf16.mxu0 0
        %1018 = vmatpush1.bf16.xpose.msra.mxu0 0
        %1019 = vmatprep.subr.bf16.mxu0 0
        %1020 = vmatpush1.bf16.xpose.msra.mxu0 0
        %1021 = vmatprep.subr.bf16.mxu0 0
        %1022 = vmatpush1.bf16.xpose.msra.mxu0 0
        %1023 = vmatprep.subr.bf16.mxu0 0
        %1024 = vmatpush1.bf16.xpose.msra.mxu0 0
        %1025 = vmatprep.subr.bf16.mxu0 0
        %1026 = vmatpush1.bf16.xpose.msra.mxu0 %v1009
        %1027 = vmatprep.subr.bf16.mxu0 0
        %1028 = vmatpush2.bf16.xpose.msra.mxu0 0
        %1029 = vmatprep.subr.bf16.mxu0 0
        %1030 = vmatpush2.bf16.xpose.msra.mxu0 0
        %1031 = vmatprep.subr.bf16.mxu0 0
        %1032 = vmatpush2.bf16.xpose.msra.mxu0 0
        %1033 = vmatprep.subr.bf16.mxu0 0
        %1034 = vmatpush2.bf16.xpose.msra.mxu0 0
        %1035 = vmatprep.subr.bf16.mxu0 0
        %1036 = vmatpush2.bf16.xpose.msra.mxu0 0
        %1037 = vmatprep.subr.bf16.mxu0 0
        %1038 = vmatpush2.bf16.xpose.msra.mxu0 0
        %1039 = vmatprep.subr.bf16.mxu0 0
        %1040 = vmatpush2.bf16.xpose.msra.mxu0 0
        %1041 = vmatprep.subr.bf16.mxu0 0
        %1042 = vmatpush2.bf16.xpose.msra.mxu0 0
        %1043 = vmatprep.mubr.bf16.mxu0 0
        %1044 = vmatmul.mubr.bf16.gmra.mxu0 %v1006
        %v1045 = vpop.f32.mrf.mxu0
        %v1046 = vadd.f32 0.0, %v1045
        %v1047 = vpop.f32.mrf.mxu0
        %v1048 = vpop.f32.mrf.mxu0
        %v1049 = vpop.f32.mrf.mxu0
        %1050 = vdwg.mxu0
        %v1051 = vsel %vm668, %v1046, -inf
        %1052 = vmax.xlane.f32.xlu0 %v1051
        %v1053 = vpop.xlane.xlu0 %1052
        %v1054 = vsub.f32 %v1046, %v1053
        %v1055 = vmul.f32 %v1054, 1.442695
        %v1056 = vpow.pop %v1055
        %v1057 = vsel %vm668, %v1056, 0.0
        %1058 = vadd.xlane.f32.xlu0 %v1057
        %v1059 = vpop.xlane.xlu0 %1058
        %v1060 = vpack.c.bf16 %v1056, %v1056
        %v1062 = vunpack.c.l.b16 %v994
        %v1063 = vpack.c.b16 %v1062, %v1062
        %1064 = vrot.lane.b32.xlu0 %v1063, 112
        %v1065 = vpop.permute.xlu0 %1064
        %v1067 = vsel %vm668, %v1060, 0
        %v1070 = vsel %vm728, %v1065, 0
        %1072 = vmatprep.subr.bf16.mxu0 0
        %1073 = vmatpush1.bf16.msra.mxu0 0
        %1074 = vmatprep.subr.bf16.mxu0 0
        %1075 = vmatpush1.bf16.msra.mxu0 0
        %1076 = vmatprep.subr.bf16.mxu0 0
        %1077 = vmatpush1.bf16.msra.mxu0 0
        %1078 = vmatprep.subr.bf16.mxu0 0
        %1079 = vmatpush1.bf16.msra.mxu0 0
        %1080 = vmatprep.subr.bf16.mxu0 0
        %1081 = vmatpush1.bf16.msra.mxu0 0
        %1082 = vmatprep.subr.bf16.mxu0 0
        %1083 = vmatpush1.bf16.msra.mxu0 0
        %1084 = vmatprep.subr.bf16.mxu0 0
        %1085 = vmatpush1.bf16.msra.mxu0 0
        %1086 = vmatprep.subr.bf16.mxu0 0
        %1087 = vmatpush1.bf16.msra.mxu0 %v1070
        %1088 = vmatprep.subr.bf16.mxu0 0
        %1089 = vmatpush2.bf16.msra.mxu0 0
        %1090 = vmatprep.subr.bf16.mxu0 0
        %1091 = vmatpush2.bf16.msra.mxu0 0
        %1092 = vmatprep.subr.bf16.mxu0 0
        %1093 = vmatpush2.bf16.msra.mxu0 0
        %1094 = vmatprep.subr.bf16.mxu0 0
        %1095 = vmatpush2.bf16.msra.mxu0 0
        %1096 = vmatprep.subr.bf16.mxu0 0
        %1097 = vmatpush2.bf16.msra.mxu0 0
        %1098 = vmatprep.subr.bf16.mxu0 0
        %1099 = vmatpush2.bf16.msra.mxu0 0
        %1100 = vmatprep.subr.bf16.mxu0 0
        %1101 = vmatpush2.bf16.msra.mxu0 0
        %1102 = vmatprep.subr.bf16.mxu0 0
        %1103 = vmatpush2.bf16.msra.mxu0 0
        %1104 = vmatprep.mubr.bf16.mxu0 0
        %1105 = vmatmul.mubr.bf16.gmra.mxu0 %v1067
        %v1106 = vpop.f32.mrf.mxu0
        %v1107 = vadd.f32 0.0, %v1106
        %v1108 = vpop.f32.mrf.mxu0
        %v1109 = vpop.f32.mrf.mxu0
        %v1110 = vpop.f32.mrf.mxu0
        %1111 = vdwg.mxu0
        %v1112 = vrcp.pop %v1059
        %v1113 = vmul.f32 %v1107, %v1112
        %v1114 = vpack.c.bf16 %v1113, %v1113
        %v1115 = vld [vmem:[#allocation16 + $0x8] sm:$0xf]
        %v1117 = vsel %vm668, %v1114, 0
        %v1120 = vsel %vm728, %v1115, 0
        %1122 = vmatprep.subr.bf16.mxu0 0
        %1123 = vmatpush1.bf16.msra.mxu0 0
        %1124 = vmatprep.subr.bf16.mxu0 0
        %1125 = vmatpush1.bf16.msra.mxu0 0
        %1126 = vmatprep.subr.bf16.mxu0 0
        %1127 = vmatpush1.bf16.msra.mxu0 0
        %1128 = vmatprep.subr.bf16.mxu0 0
        %1129 = vmatpush1.bf16.msra.mxu0 0
        %1130 = vmatprep.subr.bf16.mxu0 0
        %1131 = vmatpush1.bf16.msra.mxu0 0
        %1132 = vmatprep.subr.bf16.mxu0 0
        %1133 = vmatpush1.bf16.msra.mxu0 0
        %1134 = vmatprep.subr.bf16.mxu0 0
        %1135 = vmatpush1.bf16.msra.mxu0 0
        %1136 = vmatprep.subr.bf16.mxu0 0
        %1137 = vmatpush1.bf16.msra.mxu0 %v1120
        %1138 = vmatprep.subr.bf16.mxu0 0
        %1139 = vmatpush2.bf16.msra.mxu0 0
        %1140 = vmatprep.subr.bf16.mxu0 0
        %1141 = vmatpush2.bf16.msra.mxu0 0
        %1142 = vmatprep.subr.bf16.mxu0 0
        %1143 = vmatpush2.bf16.msra.mxu0 0
        %1144 = vmatprep.subr.bf16.mxu0 0
        %1145 = vmatpush2.bf16.msra.mxu0 0
        %1146 = vmatprep.subr.bf16.mxu0 0
        %1147 = vmatpush2.bf16.msra.mxu0 0
        %1148 = vmatprep.subr.bf16.mxu0 0
        %1149 = vmatpush2.bf16.msra.mxu0 0
        %1150 = vmatprep.subr.bf16.mxu0 0
        %1151 = vmatpush2.bf16.msra.mxu0 0
        %1152 = vmatprep.subr.bf16.mxu0 0
        %1153 = vmatpush2.bf16.msra.mxu0 0
        %1154 = vmatprep.mubr.bf16.mxu0 0
        %1155 = vmatmul.mubr.bf16.gmra.mxu0 %v1117
        %v1156 = vpop.f32.mrf.mxu0
        %v1157 = vadd.f32 0.0, %v1156
        %v1158 = vpop.f32.mrf.mxu0
        %v1159 = vpop.f32.mrf.mxu0
        %v1160 = vpop.f32.mrf.mxu0
        %1161 = vdwg.mxu0
        %v1162 = vadd.f32 %v987, %v1157
        %v1163 = vld [vmem:[#allocation2] sm:$0xf]
        %v1164 = vld [vmem:[#allocation3] sm:$0xf]
        %v1165 = vld [vmem:[#allocation4] sm:$0xf]
        %v1167 = vunpack.c.l.b16 %v1163
        %v1168 = vpack.c.b16 %v1167, %v1167
        %1169 = vrot.lane.b32.xlu0 %v1168, 104
        %v1170 = vpop.permute.xlu0 %1169
        %v1172 = vunpack.c.l.b16 %v1164
        %v1173 = vpack.c.b16 %v1172, %v1172
        %1174 = vrot.lane.b32.xlu0 %v1173, 104
        %v1175 = vpop.permute.xlu0 %1174
        %v1177 = vsel %vm668, %v1170, 0
        %v1180 = vsel %vm668, %v1175, 0
        %1182 = vmatprep.subr.bf16.mxu0 0
        %1183 = vmatpush1.bf16.xpose.msra.mxu0 0
        %1184 = vmatprep.subr.bf16.mxu0 0
        %1185 = vmatpush1.bf16.xpose.msra.mxu0 0
        %1186 = vmatprep.subr.bf16.mxu0 0
        %1187 = vmatpush1.bf16.xpose.msra.mxu0 0
        %1188 = vmatprep.subr.bf16.mxu0 0
        %1189 = vmatpush1.bf16.xpose.msra.mxu0 0
        %1190 = vmatprep.subr.bf16.mxu0 0
        %1191 = vmatpush1.bf16.xpose.msra.mxu0 0
        %1192 = vmatprep.subr.bf16.mxu0 0
        %1193 = vmatpush1.bf16.xpose.msra.mxu0 0
        %1194 = vmatprep.subr.bf16.mxu0 0
        %1195 = vmatpush1.bf16.xpose.msra.mxu0 0
        %1196 = vmatprep.subr.bf16.mxu0 0
        %1197 = vmatpush1.bf16.xpose.msra.mxu0 %v1180
        %1198 = vmatprep.subr.bf16.mxu0 0
        %1199 = vmatpush2.bf16.xpose.msra.mxu0 0
        %1200 = vmatprep.subr.bf16.mxu0 0
        %1201 = vmatpush2.bf16.xpose.msra.mxu0 0
        %1202 = vmatprep.subr.bf16.mxu0 0
        %1203 = vmatpush2.bf16.xpose.msra.mxu0 0
        %1204 = vmatprep.subr.bf16.mxu0 0
        %1205 = vmatpush2.bf16.xpose.msra.mxu0 0
        %1206 = vmatprep.subr.bf16.mxu0 0
        %1207 = vmatpush2.bf16.xpose.msra.mxu0 0
        %1208 = vmatprep.subr.bf16.mxu0 0
        %1209 = vmatpush2.bf16.xpose.msra.mxu0 0
        %1210 = vmatprep.subr.bf16.mxu0 0
        %1211 = vmatpush2.bf16.xpose.msra.mxu0 0
        %1212 = vmatprep.subr.bf16.mxu0 0
        %1213 = vmatpush2.bf16.xpose.msra.mxu0 0
        %1214 = vmatprep.mubr.bf16.mxu0 0
        %1215 = vmatmul.mubr.bf16.gmra.mxu0 %v1177
        %v1216 = vpop.f32.mrf.mxu0
        %v1217 = vadd.f32 0.0, %v1216
        %v1218 = vpop.f32.mrf.mxu0
        %v1219 = vpop.f32.mrf.mxu0
        %v1220 = vpop.f32.mrf.mxu0
        %1221 = vdwg.mxu0
        %v1222 = vsel %vm668, %v1217, -inf
        %1223 = vmax.xlane.f32.xlu0 %v1222
        %v1224 = vpop.xlane.xlu0 %1223
        %v1225 = vsub.f32 %v1217, %v1224
        %v1226 = vmul.f32 %v1225, 1.442695
        %v1227 = vpow.pop %v1226
        %v1228 = vsel %vm668, %v1227, 0.0
        %1229 = vadd.xlane.f32.xlu0 %v1228
        %v1230 = vpop.xlane.xlu0 %1229
        %v1231 = vpack.c.bf16 %v1227, %v1227
        %v1233 = vunpack.c.l.b16 %v1165
        %v1234 = vpack.c.b16 %v1233, %v1233
        %1235 = vrot.lane.b32.xlu0 %v1234, 104
        %v1236 = vpop.permute.xlu0 %1235
        %v1238 = vsel %vm668, %v1231, 0
        %v1241 = vsel %vm728, %v1236, 0
        %1243 = vmatprep.subr.bf16.mxu0 0
        %1244 = vmatpush1.bf16.msra.mxu0 0
        %1245 = vmatprep.subr.bf16.mxu0 0
        %1246 = vmatpush1.bf16.msra.mxu0 0
        %1247 = vmatprep.subr.bf16.mxu0 0
        %1248 = vmatpush1.bf16.msra.mxu0 0
        %1249 = vmatprep.subr.bf16.mxu0 0
        %1250 = vmatpush1.bf16.msra.mxu0 0
        %1251 = vmatprep.subr.bf16.mxu0 0
        %1252 = vmatpush1.bf16.msra.mxu0 0
        %1253 = vmatprep.subr.bf16.mxu0 0
        %1254 = vmatpush1.bf16.msra.mxu0 0
        %1255 = vmatprep.subr.bf16.mxu0 0
        %1256 = vmatpush1.bf16.msra.mxu0 0
        %1257 = vmatprep.subr.bf16.mxu0 0
        %1258 = vmatpush1.bf16.msra.mxu0 %v1241
        %1259 = vmatprep.subr.bf16.mxu0 0
        %1260 = vmatpush2.bf16.msra.mxu0 0
        %1261 = vmatprep.subr.bf16.mxu0 0
        %1262 = vmatpush2.bf16.msra.mxu0 0
        %1263 = vmatprep.subr.bf16.mxu0 0
        %1264 = vmatpush2.bf16.msra.mxu0 0
        %1265 = vmatprep.subr.bf16.mxu0 0
        %1266 = vmatpush2.bf16.msra.mxu0 0
        %1267 = vmatprep.subr.bf16.mxu0 0
        %1268 = vmatpush2.bf16.msra.mxu0 0
        %1269 = vmatprep.subr.bf16.mxu0 0
        %1270 = vmatpush2.bf16.msra.mxu0 0
        %1271 = vmatprep.subr.bf16.mxu0 0
        %1272 = vmatpush2.bf16.msra.mxu0 0
        %1273 = vmatprep.subr.bf16.mxu0 0
        %1274 = vmatpush2.bf16.msra.mxu0 0
        %1275 = vmatprep.mubr.bf16.mxu0 0
        %1276 = vmatmul.mubr.bf16.gmra.mxu0 %v1238
        %v1277 = vpop.f32.mrf.mxu0
        %v1278 = vadd.f32 0.0, %v1277
        %v1279 = vpop.f32.mrf.mxu0
        %v1280 = vpop.f32.mrf.mxu0
        %v1281 = vpop.f32.mrf.mxu0
        %1282 = vdwg.mxu0
        %v1283 = vrcp.pop %v1230
        %v1284 = vmul.f32 %v1278, %v1283
        %v1285 = vpack.c.bf16 %v1284, %v1284
        %v1286 = vld [vmem:[#allocation16 + $0xc] sm:$0xf]
        %v1288 = vsel %vm668, %v1285, 0
        %v1291 = vsel %vm728, %v1286, 0
        %1293 = vmatprep.subr.bf16.mxu0 0
        %1294 = vmatpush1.bf16.msra.mxu0 0
        %1295 = vmatprep.subr.bf16.mxu0 0
        %1296 = vmatpush1.bf16.msra.mxu0 0
        %1297 = vmatprep.subr.bf16.mxu0 0
        %1298 = vmatpush1.bf16.msra.mxu0 0
        %1299 = vmatprep.subr.bf16.mxu0 0
        %1300 = vmatpush1.bf16.msra.mxu0 0
        %1301 = vmatprep.subr.bf16.mxu0 0
        %1302 = vmatpush1.bf16.msra.mxu0 0
        %1303 = vmatprep.subr.bf16.mxu0 0
        %1304 = vmatpush1.bf16.msra.mxu0 0
        %1305 = vmatprep.subr.bf16.mxu0 0
        %1306 = vmatpush1.bf16.msra.mxu0 0
        %1307 = vmatprep.subr.bf16.mxu0 0
        %1308 = vmatpush1.bf16.msra.mxu0 %v1291
        %1309 = vmatprep.subr.bf16.mxu0 0
        %1310 = vmatpush2.bf16.msra.mxu0 0
        %1311 = vmatprep.subr.bf16.mxu0 0
        %1312 = vmatpush2.bf16.msra.mxu0 0
        %1313 = vmatprep.subr.bf16.mxu0 0
        %1314 = vmatpush2.bf16.msra.mxu0 0
        %1315 = vmatprep.subr.bf16.mxu0 0
        %1316 = vmatpush2.bf16.msra.mxu0 0
        %1317 = vmatprep.subr.bf16.mxu0 0
        %1318 = vmatpush2.bf16.msra.mxu0 0
        %1319 = vmatprep.subr.bf16.mxu0 0
        %1320 = vmatpush2.bf16.msra.mxu0 0
        %1321 = vmatprep.subr.bf16.mxu0 0
        %1322 = vmatpush2.bf16.msra.mxu0 0
        %1323 = vmatprep.subr.bf16.mxu0 0
        %1324 = vmatpush2.bf16.msra.mxu0 0
        %1325 = vmatprep.mubr.bf16.mxu0 0
        %1326 = vmatmul.mubr.bf16.gmra.mxu0 %v1288
        %v1327 = vpop.f32.mrf.mxu0
        %v1328 = vadd.f32 0.0, %v1327
        %v1329 = vpop.f32.mrf.mxu0
        %v1330 = vpop.f32.mrf.mxu0
        %v1331 = vpop.f32.mrf.mxu0
        %1332 = vdwg.mxu0
        %v1333 = vadd.f32 %v1162, %v1328
        %v1334 = vld [vmem:[%s7] sm:$0x1]
        %v1336 = vlaneseq
        %v1337 = vshrl.u32 %v1336, 7
        %v1338 = vsub.s32 0, %v1337
        %v1339 = vrot.slane %v1334, %v1338
        %v1341 = vadd.f32 %v1333, %v1339
        %1342 = vst.msk [vmem:[%s466] sm:$0xff] %vm618, %v1341
        %s1343 = sand.u32 %s237, 1
        %s1344 = scalar_lea.sflag [#allocation7], %s1343
        %s1345 = sand.u32 %s237, 1
        %s1346 = smul.addr %s1345, 8
        %s1347 = scalar_lea.vmem [#allocation17], %s1346
        // Predicated region
        $region85: #{tpu_custom_call.1} parent=51 // pred_check
          %p1348 = pneg %p247
        $region86: #{tpu_custom_call.1} parent=51 // pred_check_branch
          %1350 = sbr.rel (%p1348) target = $region88
        $region87: #{tpu_custom_call.1} parent=51 // pred_region
          %s1352 = ssub.s32 128, 128
          %1353 = vsyncadd %s1344, %s1352
          %s1354 = sadd.s32 %s35, %s34
          %s1355 = smul.addr %s1354, 128
          %s1356 = scalar_lea.hbm %s8, %s1355
          %s1358 = sshll.u32 %s1347, 4
          %s1359 = int_to_ptr.vmem [resolvable:$true] %s1358
          %1361 = dma.vmem_to_hbm [thread:$0]  %s1359, 128, %s1356, %s1344
        $region88: #{tpu_custom_call.1} parent=51 // pred_fallthru
          _
      $region52: #{tpu_custom_call.1} parent=5 // pred_fallthru
        _
      %p1362 = scmp.le.s32.totalorder 2, %s25
      // Predicated region
      $region89: #{tpu_custom_call.1} parent=5 // pred_check
        %p1363 = pneg %p1362
      $region90: #{tpu_custom_call.1} parent=5 // pred_check_branch
        %1365 = sbr.rel (%p1363) target = $region92
      $region91: #{tpu_custom_call.1} parent=5 // pred_region
        %s1366 = ssub.s32 %s25, 2
        // Predicated region
        $region93: #{tpu_custom_call.1} parent=91 // pred_check
          %p1367 = pneg %p253
        $region94: #{tpu_custom_call.1} parent=91 // pred_check_branch
          %1369 = sbr.rel (%p1367) target = $region96
        $region95: #{tpu_custom_call.1} parent=91 // pred_region
          %s1370 = sand.u32 %s238, 1
          %s1371 = scalar_lea.sflag [#allocation7], %s1370
          %s1372 = sand.u32 %s238, 1
          %s1373 = smul.addr %s1372, 8
          %s1374 = scalar_lea.vmem [#allocation17], %s1373
          %1375 = dma.done %s1371, 128
        $region96: #{tpu_custom_call.1} parent=91 // pred_fallthru
          _
      $region92: #{tpu_custom_call.1} parent=5 // pred_fallthru
        _
    $region6: #{tpu_custom_call.1} parent=1 // loop_footer
      %s29 = sadd.s32 1, %s25
    $region7: #{tpu_custom_call.1} parent=1 // loop_footer_branch
      %24 = sbr.rel target = $region3
    $region8: #{tpu_custom_call.1} parent=1 // loop_exit
      _
    %1376 = vsyncpa [#allocation6], 1
    %s1377 = scalar_lea.sflag [#allocation6], 1
    %1378 = vsyncpa %s1377, 1
    %1379 = vsyncpa [#allocation9], 1
    %s1380 = scalar_lea.sflag [#allocation9], 1
    %1381 = vsyncpa %s1380, 1
    %1382 = vsyncpa [#allocation12], 1
    %1383 = vsyncpa [#allocation15], 1
    %1384 = vsyncpa [#allocation7], 1
    %s1385 = scalar_lea.sflag [#allocation7], 1
    %1386 = vsyncpa %s1385, 1

</llo_original>
